<compile_context>
chip_gen: v7x
topology: tpu7x:2x2x1
jax: 0.10.0
libtpu: 0.0.40
codegen_flags: <defaults>
</compile_context>

<pallas_src>
import math
import functools

import jax
import jax.numpy as jnp
from jax.experimental import pallas as pl
from jax.experimental.pallas import tpu as pltpu


def _layernorm(x, w, b, eps=1e-5):
    mu = jnp.mean(x, axis=-1, keepdims=True)
    xc = x - mu
    var = jnp.mean(xc * xc, axis=-1, keepdims=True)
    return xc * jax.lax.rsqrt(var + eps) * w + b


def head_layer_kernel(x_ref, pos_ref, src_ref,
                      cn_w_ref, cn_b_ref,
                      wq_ref, bq_ref, wk_ref, bk_ref, wv_ref, bv_ref,
                      wo_ref, ob_ref,
                      fn_w_ref, fn_b_ref,
                      w1_ref, b1_ref, w2_ref, b2_ref,
                      o_ref, *, n_head):
    bb, Lq, D = x_ref.shape
    Ls = src_ref.shape[1]
    hd = D // n_head
    mxu_dtype = wq_ref.dtype            # weights stored bf16 at rest (f32 if disabled)

    # Fold the batch block into the row dim for every dense (non-attention) matmul.
    x = x_ref[...].reshape(bb * Lq, D)                      # f32
    pos = pos_ref[...].reshape(bb * Lq, D)                  # f32
    src = src_ref[...].reshape(bb * Ls, D)                  # f32

    # ----- cross_norm + positional encoding on the query side (f32 VPU/EUP math) -----
    ln1 = _layernorm(x, cn_w_ref[...], cn_b_ref[...])
    q_in = (ln1 + pos).astype(mxu_dtype)
    src_m = src.astype(mxu_dtype)

    # ----- QKV projections: bf16 operands, f32 accumulate (scale folded into Wq/bq) ----
    q = jnp.dot(q_in, wq_ref[...], preferred_element_type=jnp.float32) + bq_ref[...]
    k = jnp.dot(src_m, wk_ref[...], preferred_element_type=jnp.float32) + bk_ref[...]
    v = jnp.dot(src_m, wv_ref[...], preferred_element_type=jnp.float32) + bv_ref[...]

    q3 = q.reshape(bb, Lq, D).astype(mxu_dtype)
    k3 = k.reshape(bb, Ls, D).astype(mxu_dtype)
    v3 = v.reshape(bb, Ls, D).astype(mxu_dtype)

    # ----- multi-head attention -----
    # Heads are statically unrolled (n_head small). Score/PV einsums are batched over
    # the batch dim (single-batch-dim dot_general — the proven Mosaic lowering path).
    # Per-head outputs are concatenated into one (bb*Lq, D) slab so the output
    # projection is a single K=D MXU matmul instead of n_head K=hd matmuls + n_head
    # accumulator passes. For production hd >= 128 the static lane slices below are
    # lane-aligned and essentially free.
    # TODO(synk): a single head-axis relayout (pltpu.einshape 'b q (h d) -> (b h) q d')
    # would also remove the per-head lane slices; kept the unrolled form for lowering
    # robustness at small hd.
    oh_heads = []
    for h in range(n_head):
        sl = slice(h * hd, (h + 1) * hd)
        s = jnp.einsum('bqd,bkd->bqk', q3[:, :, sl], k3[:, :, sl],
                       preferred_element_type=jnp.float32)
        s = s - jnp.max(s, axis=-1, keepdims=True)
        p = jnp.exp(s)
        p = p * pl.reciprocal(jnp.sum(p, axis=-1, keepdims=True), approx=True)
        oh = jnp.einsum('bqk,bkd->bqd', p.astype(mxu_dtype), v3[:, :, sl],
                        preferred_element_type=jnp.float32)
        oh_heads.append(oh)
    oh_full = jnp.concatenate(oh_heads, axis=-1).reshape(bb * Lq, D)
    attn = jnp.dot(oh_full.astype(mxu_dtype), wo_ref[...],
                   preferred_element_type=jnp.float32) + ob_ref[...]

    # ----- residual 1 (dropout = identity), f32 -----
    x1 = x + attn

    # ----- ff_norm + PositionwiseFeedForward (Linear -> ReLU -> Linear) -----
    # TODO(synk): if bb*Lq*dim_ff*4 grows large (huge batch blocks), tile this over
    # row chunks with lax.fori_loop; the wrapper's bb target (~512 rows) keeps the h1
    # intermediate bounded so it is not needed here.
    ln2 = _layernorm(x1, fn_w_ref[...], fn_b_ref[...])
    h1 = jnp.dot(ln2.astype(mxu_dtype), w1_ref[...],
                 preferred_element_type=jnp.float32) + b1_ref[...]
    h1 = jnp.maximum(h1, 0.0)
    ff = jnp.dot(h1.astype(mxu_dtype), w2_ref[...],
                 preferred_element_type=jnp.float32) + b2_ref[...]

    # ----- residual 2 -----
    # For D < 128 the output lane width is sub-128 (masked partial stores); production
    # D >= 128 is lane-dense.
    o_ref[...] = (x1 + ff).reshape(bb, Lq, D).astype(o_ref.dtype)


def _pick_batch_block(B, Lq, target_rows=512):
    """Largest divisor of B with bb*Lq <= target_rows, keeping >= 2 grid steps when
    B >= 2 (pipelining + v7x megacore). Prefers bb*Lq a multiple of 128 when possible."""
    max_bb = max(1, target_rows // max(Lq, 1))
    if B >= 2:
        max_bb = min(max_bb, B // 2)
    max_bb = max(1, max_bb)
    divisors = [d for d in range(1, max_bb + 1) if B % d == 0]
    aligned = [d for d in divisors if (d * Lq) % 128 == 0]
    return (aligned or divisors)[-1]


def _vmem_limit_bytes():
    """Scoped VMEM limit derived from the chip generation (v5e/v6e: 128 MiB physical,
    v7x: 64 MiB), leaving headroom for the compiler."""
    cap = 64 * 1024 * 1024
    try:
        info = pltpu.get_tpu_info()
        cap = getattr(info, "vmem_capacity_bytes", cap) or cap
    except Exception:
        pass
    return int(min(cap * 3 // 4, 100 * 1024 * 1024))


def head_layer_forward(params, x, pos, src, *, n_head, batch_block=None,
                       mxu_dtype=jnp.bfloat16,
                       reference_point=None, source_shape=None,
                       level_start=None, source_mask=None, mask=None):
    # Unused args kept for interface parity; the PyTorch module never passes masks to
    # its cross_attn call, so ignoring them is exact.
    B, Lq, D = x.shape
    Ls = src.shape[1]
    dim_ff = params['ff1_w'].shape[0]
    assert D % n_head == 0
    hd = D // n_head
    scale = 1.0 / math.sqrt(hd)

    bb = _pick_batch_block(B, Lq) if batch_block is None else min(batch_block, B)
    assert B % bb == 0, "batch_block must divide the batch size"
    grid = (B // bb,)

    # One-time wrapper-side weight prep: pre-transpose so every in-kernel matmul is a
    # plain x @ w, fold the attention scale into the Q projection, and store matmul
    # weights in bf16 (MXU operand dtype). Biases and LN params stay f32.
    in_w, in_b = params['in_w'], params['in_b']
    wq_t = (in_w[0:D, :].T * scale).astype(mxu_dtype)
    wk_t = in_w[D:2 * D, :].T.astype(mxu_dtype)
    wv_t = in_w[2 * D:3 * D, :].T.astype(mxu_dtype)
    bq = in_b[:, 0:D] * scale
    bk = in_b[:, D:2 * D]
    bv = in_b[:, 2 * D:3 * D]
    wo_t = params['ow'].T.astype(mxu_dtype)
    w1_t = params['ff1_w'].T.astype(mxu_dtype)
    w2_t = params['ff2_w'].T.astype(mxu_dtype)

    kernel = functools.partial(head_layer_kernel, n_head=n_head)

    def build_call(weight_mode):
        def rep(shape):          # weights / biases: same block every grid step
            kw = {} if weight_mode is None else dict(pipeline_mode=weight_mode)
            return pl.BlockSpec(shape, lambda b, _n=len(shape): (0,) * _n, **kw)

        def seq(L):              # activations: one batch block per grid step
            return pl.BlockSpec((bb, L, D), lambda b: (b, 0, 0))

        return pl.pallas_call(
            kernel,
            out_shape=jax.ShapeDtypeStruct((B, Lq, D), x.dtype),
            grid=grid,
            in_specs=[
                seq(Lq), seq(Lq), seq(Ls),
                rep((1, D)), rep((1, D)),                 # cross_norm w, b
                rep((D, D)), rep((1, D)),                 # Wq^T (scaled, bf16), bq (scaled)
                rep((D, D)), rep((1, D)),                 # Wk^T, bk
                rep((D, D)), rep((1, D)),                 # Wv^T, bv
                rep((D, D)), rep((1, D)),                 # Wo^T, bo
                rep((1, D)), rep((1, D)),                 # ff_norm w, b
                rep((D, dim_ff)), rep((1, dim_ff)),       # ff linear1 W^T, b
                rep((dim_ff, D)), rep((1, D)),            # ff linear2 W^T, b
            ],
            out_specs=pl.BlockSpec((bb, Lq, D), lambda b: (b, 0, 0)),
            compiler_params=pltpu.CompilerParams(
                dimension_semantics=("parallel",),
                vmem_limit_bytes=_vmem_limit_bytes()),
        )

    args = (x, pos, src,
            params['cn_w'], params['cn_b'],
            wq_t, bq, wk_t, bk, wv_t, bv,
            wo_t, params['ob'],
            params['fn_w'], params['fn_b'],
            w1_t, params['ff1_b'],
            w2_t, params['ff2_b'])

    try:
        # Constant-index weight blocks are fetched once -> single-buffer them.
        return build_call(pl.Buffered(1))(*args)
    except Exception:
        # pipeline_mode not supported on this jax version's pallas_call pipelining
        # path -> fall back to default double buffering (correctness unchanged).
        return build_call(None)(*args)


def head_layer_ref(params, x, pos, src, n_head):
    """Pure-JAX f32 reference mirroring the PyTorch HeadLayer (inference mode)."""
    D = x.shape[-1]
    hd = D // n_head
    B, Lq, _ = x.shape
    Ls = src.shape[1]

    ln1 = _layernorm(x, params['cn_w'][0], params['cn_b'][0])
    q_in = ln1 + pos
    q = q_in @ params['in_w'][0:D].T + params['in_b'][0, 0:D]
    k = src @ params['in_w'][D:2 * D].T + params['in_b'][0, D:2 * D]
    v = src @ params['in_w'][2 * D:].T + params['in_b'][0, 2 * D:]

    qh = q.reshape(B, Lq, n_head, hd).transpose(0, 2, 1, 3)
    kh = k.reshape(B, Ls, n_head, hd).transpose(0, 2, 1, 3)
    vh = v.reshape(B, Ls, n_head, hd).transpose(0, 2, 1, 3)
    s = jnp.einsum('bhqd,bhkd->bhqk', qh, kh) / math.sqrt(hd)
    p = jax.nn.softmax(s, axis=-1)
    a = jnp.einsum('bhqk,bhkd->bhqd', p, vh).transpose(0, 2, 1, 3).reshape(B, Lq, D)
    a = a @ params['ow'].T + params['ob'][0]

    x1 = x + a
    ln2 = _layernorm(x1, params['fn_w'][0], params['fn_b'][0])
    h1 = jax.nn.relu(ln2 @ params['ff1_w'].T + params['ff1_b'][0])
    ff = h1 @ params['ff2_w'].T + params['ff2_b'][0]
    return x1 + ff


if __name__ == "__main__":
    B, Lq, Ls = 2, 8, 16
    D, dim_ff, n_head = 32, 64, 4

    key = jax.random.PRNGKey(0)
    ks = jax.random.split(key, 8)
    std = 0.02
    params = dict(
        cn_w=jnp.ones((1, D), jnp.float32),
        cn_b=jnp.zeros((1, D), jnp.float32),
        in_w=std * jax.random.normal(ks[0], (3 * D, D), jnp.float32),
        in_b=jnp.zeros((1, 3 * D), jnp.float32),
        ow=std * jax.random.normal(ks[1], (D, D), jnp.float32),
        ob=jnp.zeros((1, D), jnp.float32),
        fn_w=jnp.ones((1, D), jnp.float32),
        fn_b=jnp.zeros((1, D), jnp.float32),
        ff1_w=std * jax.random.normal(ks[2], (dim_ff, D), jnp.float32),
        ff1_b=jnp.zeros((1, dim_ff), jnp.float32),
        ff2_w=std * jax.random.normal(ks[3], (D, dim_ff), jnp.float32),
        ff2_b=jnp.zeros((1, D), jnp.float32),
    )

    x = jax.random.normal(ks[4], (B, Lq, D), jnp.float32)
    pos = jax.random.normal(ks[5], (B, Lq, D), jnp.float32)
    src = jax.random.normal(ks[6], (B, Ls, D), jnp.float32)

    out = head_layer_forward(params, x, pos, src, n_head=n_head)
    out = jax.block_until_ready(out)

    ref = head_layer_ref(params, x, pos, src, n_head)
    assert out.shape == (B, Lq, D)
    # Tolerance covers bf16 MXU operands (f32 accumulate) and the EUP approximate
    # reciprocal in the softmax denominator; measured error is ~1e-3 at these scales.
    assert jnp.allclose(out, ref, atol=1e-2, rtol=1e-2), float(jnp.max(jnp.abs(out - ref)))

    print("KERNEL_OK")
</pallas_src>

<mosaic_0001>
module attributes {stable_mosaic.version = 11 : i64} {
  func.func @head_layer_kernel(%arg0: i32, %arg1: memref<1x8x32xf32, #tpu.memory_space<vmem>>, %arg2: memref<1x8x32xf32, #tpu.memory_space<vmem>>, %arg3: memref<1x16x32xf32, #tpu.memory_space<vmem>>, %arg4: memref<1x32xf32, #tpu.memory_space<vmem>>, %arg5: memref<1x32xf32, #tpu.memory_space<vmem>>, %arg6: memref<32x32xbf16, #tpu.memory_space<vmem>>, %arg7: memref<1x32xf32, #tpu.memory_space<vmem>>, %arg8: memref<32x32xbf16, #tpu.memory_space<vmem>>, %arg9: memref<1x32xf32, #tpu.memory_space<vmem>>, %arg10: memref<32x32xbf16, #tpu.memory_space<vmem>>, %arg11: memref<1x32xf32, #tpu.memory_space<vmem>>, %arg12: memref<32x32xbf16, #tpu.memory_space<vmem>>, %arg13: memref<1x32xf32, #tpu.memory_space<vmem>>, %arg14: memref<1x32xf32, #tpu.memory_space<vmem>>, %arg15: memref<1x32xf32, #tpu.memory_space<vmem>>, %arg16: memref<32x64xbf16, #tpu.memory_space<vmem>>, %arg17: memref<1x64xf32, #tpu.memory_space<vmem>>, %arg18: memref<64x32xbf16, #tpu.memory_space<vmem>>, %arg19: memref<1x32xf32, #tpu.memory_space<vmem>>, %arg20: memref<1x8x32xf32, #tpu.memory_space<vmem>>) attributes {dimension_semantics = [#tpu.dimension_semantics<parallel>], iteration_bounds = array<i64: 2>, scalar_prefetch = 0 : i64, scratch_operands = 0 : i64, tpu.core_type = #tpu.core_type<tc>, window_params = [{transform_indices = @transform_0, window_bounds = array<i64: 1, 8, 32>}, {transform_indices = @transform_1, window_bounds = array<i64: 1, 8, 32>}, {transform_indices = @transform_2, window_bounds = array<i64: 1, 16, 32>}, {pipeline_mode = #tpu.pipeline_mode<synchronous>, transform_indices = @transform_3, window_bounds = array<i64: 1, 32>}, {pipeline_mode = #tpu.pipeline_mode<synchronous>, transform_indices = @transform_4, window_bounds = array<i64: 1, 32>}, {pipeline_mode = #tpu.pipeline_mode<synchronous>, transform_indices = @transform_5, window_bounds = array<i64: 32, 32>}, {pipeline_mode = #tpu.pipeline_mode<synchronous>, transform_indices = @transform_6, window_bounds = array<i64: 1, 32>}, {pipeline_mode = #tpu.pipeline_mode<synchronous>, transform_indices = @transform_7, window_bounds = array<i64: 32, 32>}, {pipeline_mode = #tpu.pipeline_mode<synchronous>, transform_indices = @transform_8, window_bounds = array<i64: 1, 32>}, {pipeline_mode = #tpu.pipeline_mode<synchronous>, transform_indices = @transform_9, window_bounds = array<i64: 32, 32>}, {pipeline_mode = #tpu.pipeline_mode<synchronous>, transform_indices = @transform_10, window_bounds = array<i64: 1, 32>}, {pipeline_mode = #tpu.pipeline_mode<synchronous>, transform_indices = @transform_11, window_bounds = array<i64: 32, 32>}, {pipeline_mode = #tpu.pipeline_mode<synchronous>, transform_indices = @transform_12, window_bounds = array<i64: 1, 32>}, {pipeline_mode = #tpu.pipeline_mode<synchronous>, transform_indices = @transform_13, window_bounds = array<i64: 1, 32>}, {pipeline_mode = #tpu.pipeline_mode<synchronous>, transform_indices = @transform_14, window_bounds = array<i64: 1, 32>}, {pipeline_mode = #tpu.pipeline_mode<synchronous>, transform_indices = @transform_15, window_bounds = array<i64: 32, 64>}, {pipeline_mode = #tpu.pipeline_mode<synchronous>, transform_indices = @transform_16, window_bounds = array<i64: 1, 64>}, {pipeline_mode = #tpu.pipeline_mode<synchronous>, transform_indices = @transform_17, window_bounds = array<i64: 64, 32>}, {pipeline_mode = #tpu.pipeline_mode<synchronous>, transform_indices = @transform_18, window_bounds = array<i64: 1, 32>}, {transform_indices = @transform_19, window_bounds = array<i64: 1, 8, 32>}]} {
    %c0 = arith.constant 0 : index
    %c0_0 = arith.constant 0 : index
    %c0_1 = arith.constant 0 : index
    %0 = vector.load %arg1[%c0, %c0_0, %c0_1] : memref<1x8x32xf32, #tpu.memory_space<vmem>>, vector<1x8x32xf32>
    %1 = vector.shape_cast %0 : vector<1x8x32xf32> to vector<8x32xf32>
    %c0_2 = arith.constant 0 : index
    %c0_3 = arith.constant 0 : index
    %c0_4 = arith.constant 0 : index
    %2 = vector.load %arg2[%c0_2, %c0_3, %c0_4] : memref<1x8x32xf32, #tpu.memory_space<vmem>>, vector<1x8x32xf32>
    %3 = vector.shape_cast %2 : vector<1x8x32xf32> to vector<8x32xf32>
    %c0_5 = arith.constant 0 : index
    %c0_6 = arith.constant 0 : index
    %c0_7 = arith.constant 0 : index
    %4 = vector.load %arg3[%c0_5, %c0_6, %c0_7] : memref<1x16x32xf32, #tpu.memory_space<vmem>>, vector<1x16x32xf32>
    %5 = vector.shape_cast %4 : vector<1x16x32xf32> to vector<16x32xf32>
    %c0_8 = arith.constant 0 : index
    %c0_9 = arith.constant 0 : index
    %6 = vector.load %arg4[%c0_8, %c0_9] : memref<1x32xf32, #tpu.memory_space<vmem>>, vector<1x32xf32>
    %c0_10 = arith.constant 0 : index
    %c0_11 = arith.constant 0 : index
    %7 = vector.load %arg5[%c0_10, %c0_11] : memref<1x32xf32, #tpu.memory_space<vmem>>, vector<1x32xf32>
    %cst = arith.constant dense<0.000000e+00> : vector<8xf32>
    %8 = vector.multi_reduction <add>, %1, %cst [1] : vector<8x32xf32> to vector<8xf32>
    %9 = vector.shape_cast %8 : vector<8xf32> to vector<8x1xf32>
    %cst_12 = arith.constant 3.200000e+01 : f32
    %10 = vector.broadcast %cst_12 : f32 to vector<8x1xf32>
    %11 = arith.divf %9, %10 : vector<8x1xf32>
    %12 = vector.broadcast %11 : vector<8x1xf32> to vector<8x32xf32>
    %13 = arith.subf %1, %12 : vector<8x32xf32>
    %14 = arith.mulf %13, %13 : vector<8x32xf32>
    %cst_13 = arith.constant dense<0.000000e+00> : vector<8xf32>
    %15 = vector.multi_reduction <add>, %14, %cst_13 [1] : vector<8x32xf32> to vector<8xf32>
    %16 = vector.shape_cast %15 : vector<8xf32> to vector<8x1xf32>
    %cst_14 = arith.constant 3.200000e+01 : f32
    %17 = vector.broadcast %cst_14 : f32 to vector<8x1xf32>
    %18 = arith.divf %16, %17 : vector<8x1xf32>
    %cst_15 = arith.constant 9.99999974E-6 : f32
    %19 = vector.broadcast %cst_15 : f32 to vector<8x1xf32>
    %20 = arith.addf %18, %19 : vector<8x1xf32>
    %21 = math.rsqrt %20 : vector<8x1xf32>
    %22 = vector.broadcast %21 : vector<8x1xf32> to vector<8x32xf32>
    %23 = arith.mulf %13, %22 : vector<8x32xf32>
    %24 = vector.broadcast %6 : vector<1x32xf32> to vector<8x32xf32>
    %25 = arith.mulf %23, %24 : vector<8x32xf32>
    %26 = vector.broadcast %7 : vector<1x32xf32> to vector<8x32xf32>
    %27 = arith.addf %25, %26 : vector<8x32xf32>
    %28 = arith.addf %27, %3 : vector<8x32xf32>
    %29 = arith.truncf %28 : vector<8x32xf32> to vector<8x32xbf16>
    %30 = arith.truncf %5 : vector<16x32xf32> to vector<16x32xbf16>
    %c0_16 = arith.constant 0 : index
    %c0_17 = arith.constant 0 : index
    %31 = vector.load %arg6[%c0_16, %c0_17] : memref<32x32xbf16, #tpu.memory_space<vmem>>, vector<32x32xbf16>
    %cst_18 = arith.constant dense<0.000000e+00> : vector<8x32xf32>
    %32 = tpu.matmul %29, %31, %cst_18 {dimension_numbers = #tpu.dot_dimension_numbers<[1], [0], [0], [1], [0, 0, 1, 1], [], []>} : vector<8x32xbf16>, vector<32x32xbf16>, vector<8x32xf32> -> vector<8x32xf32>
    %c0_19 = arith.constant 0 : index
    %c0_20 = arith.constant 0 : index
    %33 = vector.load %arg7[%c0_19, %c0_20] : memref<1x32xf32, #tpu.memory_space<vmem>>, vector<1x32xf32>
    %34 = vector.broadcast %33 : vector<1x32xf32> to vector<8x32xf32>
    %35 = arith.addf %32, %34 : vector<8x32xf32>
    %c0_21 = arith.constant 0 : index
    %c0_22 = arith.constant 0 : index
    %36 = vector.load %arg8[%c0_21, %c0_22] : memref<32x32xbf16, #tpu.memory_space<vmem>>, vector<32x32xbf16>
    %cst_23 = arith.constant dense<0.000000e+00> : vector<16x32xf32>
    %37 = tpu.matmul %30, %36, %cst_23 {dimension_numbers = #tpu.dot_dimension_numbers<[1], [0], [0], [1], [0, 0, 1, 1], [], []>} : vector<16x32xbf16>, vector<32x32xbf16>, vector<16x32xf32> -> vector<16x32xf32>
    %c0_24 = arith.constant 0 : index
    %c0_25 = arith.constant 0 : index
    %38 = vector.load %arg9[%c0_24, %c0_25] : memref<1x32xf32, #tpu.memory_space<vmem>>, vector<1x32xf32>
    %39 = vector.broadcast %38 : vector<1x32xf32> to vector<16x32xf32>
    %40 = arith.addf %37, %39 : vector<16x32xf32>
    %c0_26 = arith.constant 0 : index
    %c0_27 = arith.constant 0 : index
    %41 = vector.load %arg10[%c0_26, %c0_27] : memref<32x32xbf16, #tpu.memory_space<vmem>>, vector<32x32xbf16>
    %cst_28 = arith.constant dense<0.000000e+00> : vector<16x32xf32>
    %42 = tpu.matmul %30, %41, %cst_28 {dimension_numbers = #tpu.dot_dimension_numbers<[1], [0], [0], [1], [0, 0, 1, 1], [], []>} : vector<16x32xbf16>, vector<32x32xbf16>, vector<16x32xf32> -> vector<16x32xf32>
    %c0_29 = arith.constant 0 : index
    %c0_30 = arith.constant 0 : index
    %43 = vector.load %arg11[%c0_29, %c0_30] : memref<1x32xf32, #tpu.memory_space<vmem>>, vector<1x32xf32>
    %44 = vector.broadcast %43 : vector<1x32xf32> to vector<16x32xf32>
    %45 = arith.addf %42, %44 : vector<16x32xf32>
    %46 = vector.shape_cast %35 : vector<8x32xf32> to vector<1x8x32xf32>
    %47 = arith.truncf %46 : vector<1x8x32xf32> to vector<1x8x32xbf16>
    %48 = vector.shape_cast %40 : vector<16x32xf32> to vector<1x16x32xf32>
    %49 = arith.truncf %48 : vector<1x16x32xf32> to vector<1x16x32xbf16>
    %50 = vector.shape_cast %45 : vector<16x32xf32> to vector<1x16x32xf32>
    %51 = arith.truncf %50 : vector<1x16x32xf32> to vector<1x16x32xbf16>
    %52 = vector.extract_strided_slice %47 {offsets = [0, 0, 0], sizes = [1, 8, 8], strides = [1, 1, 1]} : vector<1x8x32xbf16> to vector<1x8x8xbf16>
    %53 = vector.extract_strided_slice %49 {offsets = [0, 0, 0], sizes = [1, 16, 8], strides = [1, 1, 1]} : vector<1x16x32xbf16> to vector<1x16x8xbf16>
    "tpu.trace_start"() <{level = 10 : i32, message = "bqd,bkd->bqk"}> : () -> ()
    %cst_31 = arith.constant dense<0.000000e+00> : vector<1x8x16xf32>
    %54 = tpu.matmul %52, %53, %cst_31 {dimension_numbers = #tpu.dot_dimension_numbers<[2], [2], [1], [1], [0, 0, 0, 1, 1, 1], [0], [0]>} : vector<1x8x8xbf16>, vector<1x16x8xbf16>, vector<1x8x16xf32> -> vector<1x8x16xf32>
    "tpu.trace_stop"() : () -> ()
    %cst_32 = arith.constant dense<0xFF800000> : vector<1x8xf32>
    %55 = vector.multi_reduction <maximumf>, %54, %cst_32 [2] : vector<1x8x16xf32> to vector<1x8xf32>
    %56 = vector.shape_cast %55 : vector<1x8xf32> to vector<1x8x1xf32>
    %57 = vector.broadcast %56 : vector<1x8x1xf32> to vector<1x8x16xf32>
    %58 = arith.subf %54, %57 : vector<1x8x16xf32>
    %59 = math.exp %58 : vector<1x8x16xf32>
    %cst_33 = arith.constant dense<0.000000e+00> : vector<1x8xf32>
    %60 = vector.multi_reduction <add>, %59, %cst_33 [2] : vector<1x8x16xf32> to vector<1x8xf32>
    %61 = vector.shape_cast %60 : vector<1x8xf32> to vector<1x8x1xf32>
    %62 = tpu.reciprocal %61 {approx = true} : vector<1x8x1xf32> -> vector<1x8x1xf32>
    %63 = vector.broadcast %62 : vector<1x8x1xf32> to vector<1x8x16xf32>
    %64 = arith.mulf %59, %63 : vector<1x8x16xf32>
    %65 = arith.truncf %64 : vector<1x8x16xf32> to vector<1x8x16xbf16>
    %66 = vector.extract_strided_slice %51 {offsets = [0, 0, 0], sizes = [1, 16, 8], strides = [1, 1, 1]} : vector<1x16x32xbf16> to vector<1x16x8xbf16>
    "tpu.trace_start"() <{level = 10 : i32, message = "bqk,bkd->bqd"}> : () -> ()
    %cst_34 = arith.constant dense<0.000000e+00> : vector<1x8x8xf32>
    %67 = tpu.matmul %65, %66, %cst_34 {dimension_numbers = #tpu.dot_dimension_numbers<[2], [1], [1], [2], [0, 0, 0, 1, 1, 2], [0], [0]>} : vector<1x8x16xbf16>, vector<1x16x8xbf16>, vector<1x8x8xf32> -> vector<1x8x8xf32>
    "tpu.trace_stop"() : () -> ()
    %68 = vector.extract_strided_slice %47 {offsets = [0, 0, 8], sizes = [1, 8, 8], strides = [1, 1, 1]} : vector<1x8x32xbf16> to vector<1x8x8xbf16>
    %69 = vector.extract_strided_slice %49 {offsets = [0, 0, 8], sizes = [1, 16, 8], strides = [1, 1, 1]} : vector<1x16x32xbf16> to vector<1x16x8xbf16>
    "tpu.trace_start"() <{level = 10 : i32, message = "bqd,bkd->bqk"}> : () -> ()
    %cst_35 = arith.constant dense<0.000000e+00> : vector<1x8x16xf32>
    %70 = tpu.matmul %68, %69, %cst_35 {dimension_numbers = #tpu.dot_dimension_numbers<[2], [2], [1], [1], [0, 0, 0, 1, 1, 1], [0], [0]>} : vector<1x8x8xbf16>, vector<1x16x8xbf16>, vector<1x8x16xf32> -> vector<1x8x16xf32>
    "tpu.trace_stop"() : () -> ()
    %cst_36 = arith.constant dense<0xFF800000> : vector<1x8xf32>
    %71 = vector.multi_reduction <maximumf>, %70, %cst_36 [2] : vector<1x8x16xf32> to vector<1x8xf32>
    %72 = vector.shape_cast %71 : vector<1x8xf32> to vector<1x8x1xf32>
    %73 = vector.broadcast %72 : vector<1x8x1xf32> to vector<1x8x16xf32>
    %74 = arith.subf %70, %73 : vector<1x8x16xf32>
    %75 = math.exp %74 : vector<1x8x16xf32>
    %cst_37 = arith.constant dense<0.000000e+00> : vector<1x8xf32>
    %76 = vector.multi_reduction <add>, %75, %cst_37 [2] : vector<1x8x16xf32> to vector<1x8xf32>
    %77 = vector.shape_cast %76 : vector<1x8xf32> to vector<1x8x1xf32>
    %78 = tpu.reciprocal %77 {approx = true} : vector<1x8x1xf32> -> vector<1x8x1xf32>
    %79 = vector.broadcast %78 : vector<1x8x1xf32> to vector<1x8x16xf32>
    %80 = arith.mulf %75, %79 : vector<1x8x16xf32>
    %81 = arith.truncf %80 : vector<1x8x16xf32> to vector<1x8x16xbf16>
    %82 = vector.extract_strided_slice %51 {offsets = [0, 0, 8], sizes = [1, 16, 8], strides = [1, 1, 1]} : vector<1x16x32xbf16> to vector<1x16x8xbf16>
    "tpu.trace_start"() <{level = 10 : i32, message = "bqk,bkd->bqd"}> : () -> ()
    %cst_38 = arith.constant dense<0.000000e+00> : vector<1x8x8xf32>
    %83 = tpu.matmul %81, %82, %cst_38 {dimension_numbers = #tpu.dot_dimension_numbers<[2], [1], [1], [2], [0, 0, 0, 1, 1, 2], [0], [0]>} : vector<1x8x16xbf16>, vector<1x16x8xbf16>, vector<1x8x8xf32> -> vector<1x8x8xf32>
    "tpu.trace_stop"() : () -> ()
    %84 = vector.extract_strided_slice %47 {offsets = [0, 0, 16], sizes = [1, 8, 8], strides = [1, 1, 1]} : vector<1x8x32xbf16> to vector<1x8x8xbf16>
    %85 = vector.extract_strided_slice %49 {offsets = [0, 0, 16], sizes = [1, 16, 8], strides = [1, 1, 1]} : vector<1x16x32xbf16> to vector<1x16x8xbf16>
    "tpu.trace_start"() <{level = 10 : i32, message = "bqd,bkd->bqk"}> : () -> ()
    %cst_39 = arith.constant dense<0.000000e+00> : vector<1x8x16xf32>
    %86 = tpu.matmul %84, %85, %cst_39 {dimension_numbers = #tpu.dot_dimension_numbers<[2], [2], [1], [1], [0, 0, 0, 1, 1, 1], [0], [0]>} : vector<1x8x8xbf16>, vector<1x16x8xbf16>, vector<1x8x16xf32> -> vector<1x8x16xf32>
    "tpu.trace_stop"() : () -> ()
    %cst_40 = arith.constant dense<0xFF800000> : vector<1x8xf32>
    %87 = vector.multi_reduction <maximumf>, %86, %cst_40 [2] : vector<1x8x16xf32> to vector<1x8xf32>
    %88 = vector.shape_cast %87 : vector<1x8xf32> to vector<1x8x1xf32>
    %89 = vector.broadcast %88 : vector<1x8x1xf32> to vector<1x8x16xf32>
    %90 = arith.subf %86, %89 : vector<1x8x16xf32>
    %91 = math.exp %90 : vector<1x8x16xf32>
    %cst_41 = arith.constant dense<0.000000e+00> : vector<1x8xf32>
    %92 = vector.multi_reduction <add>, %91, %cst_41 [2] : vector<1x8x16xf32> to vector<1x8xf32>
    %93 = vector.shape_cast %92 : vector<1x8xf32> to vector<1x8x1xf32>
    %94 = tpu.reciprocal %93 {approx = true} : vector<1x8x1xf32> -> vector<1x8x1xf32>
    %95 = vector.broadcast %94 : vector<1x8x1xf32> to vector<1x8x16xf32>
    %96 = arith.mulf %91, %95 : vector<1x8x16xf32>
    %97 = arith.truncf %96 : vector<1x8x16xf32> to vector<1x8x16xbf16>
    %98 = vector.extract_strided_slice %51 {offsets = [0, 0, 16], sizes = [1, 16, 8], strides = [1, 1, 1]} : vector<1x16x32xbf16> to vector<1x16x8xbf16>
    "tpu.trace_start"() <{level = 10 : i32, message = "bqk,bkd->bqd"}> : () -> ()
    %cst_42 = arith.constant dense<0.000000e+00> : vector<1x8x8xf32>
    %99 = tpu.matmul %97, %98, %cst_42 {dimension_numbers = #tpu.dot_dimension_numbers<[2], [1], [1], [2], [0, 0, 0, 1, 1, 2], [0], [0]>} : vector<1x8x16xbf16>, vector<1x16x8xbf16>, vector<1x8x8xf32> -> vector<1x8x8xf32>
    "tpu.trace_stop"() : () -> ()
    %100 = vector.extract_strided_slice %47 {offsets = [0, 0, 24], sizes = [1, 8, 8], strides = [1, 1, 1]} : vector<1x8x32xbf16> to vector<1x8x8xbf16>
    %101 = vector.extract_strided_slice %49 {offsets = [0, 0, 24], sizes = [1, 16, 8], strides = [1, 1, 1]} : vector<1x16x32xbf16> to vector<1x16x8xbf16>
    "tpu.trace_start"() <{level = 10 : i32, message = "bqd,bkd->bqk"}> : () -> ()
    %cst_43 = arith.constant dense<0.000000e+00> : vector<1x8x16xf32>
    %102 = tpu.matmul %100, %101, %cst_43 {dimension_numbers = #tpu.dot_dimension_numbers<[2], [2], [1], [1], [0, 0, 0, 1, 1, 1], [0], [0]>} : vector<1x8x8xbf16>, vector<1x16x8xbf16>, vector<1x8x16xf32> -> vector<1x8x16xf32>
    "tpu.trace_stop"() : () -> ()
    %cst_44 = arith.constant dense<0xFF800000> : vector<1x8xf32>
    %103 = vector.multi_reduction <maximumf>, %102, %cst_44 [2] : vector<1x8x16xf32> to vector<1x8xf32>
    %104 = vector.shape_cast %103 : vector<1x8xf32> to vector<1x8x1xf32>
    %105 = vector.broadcast %104 : vector<1x8x1xf32> to vector<1x8x16xf32>
    %106 = arith.subf %102, %105 : vector<1x8x16xf32>
    %107 = math.exp %106 : vector<1x8x16xf32>
    %cst_45 = arith.constant dense<0.000000e+00> : vector<1x8xf32>
    %108 = vector.multi_reduction <add>, %107, %cst_45 [2] : vector<1x8x16xf32> to vector<1x8xf32>
    %109 = vector.shape_cast %108 : vector<1x8xf32> to vector<1x8x1xf32>
    %110 = tpu.reciprocal %109 {approx = true} : vector<1x8x1xf32> -> vector<1x8x1xf32>
    %111 = vector.broadcast %110 : vector<1x8x1xf32> to vector<1x8x16xf32>
    %112 = arith.mulf %107, %111 : vector<1x8x16xf32>
    %113 = arith.truncf %112 : vector<1x8x16xf32> to vector<1x8x16xbf16>
    %114 = vector.extract_strided_slice %51 {offsets = [0, 0, 24], sizes = [1, 16, 8], strides = [1, 1, 1]} : vector<1x16x32xbf16> to vector<1x16x8xbf16>
    "tpu.trace_start"() <{level = 10 : i32, message = "bqk,bkd->bqd"}> : () -> ()
    %cst_46 = arith.constant dense<0.000000e+00> : vector<1x8x8xf32>
    %115 = tpu.matmul %113, %114, %cst_46 {dimension_numbers = #tpu.dot_dimension_numbers<[2], [1], [1], [2], [0, 0, 0, 1, 1, 2], [0], [0]>} : vector<1x8x16xbf16>, vector<1x16x8xbf16>, vector<1x8x8xf32> -> vector<1x8x8xf32>
    "tpu.trace_stop"() : () -> ()
    %116 = tpu.concatenate %67, %83, %99, %115 in 2 : vector<1x8x8xf32>, vector<1x8x8xf32>, vector<1x8x8xf32>, vector<1x8x8xf32> -> vector<1x8x32xf32>
    %117 = vector.shape_cast %116 : vector<1x8x32xf32> to vector<8x32xf32>
    %118 = arith.truncf %117 : vector<8x32xf32> to vector<8x32xbf16>
    %c0_47 = arith.constant 0 : index
    %c0_48 = arith.constant 0 : index
    %119 = vector.load %arg12[%c0_47, %c0_48] : memref<32x32xbf16, #tpu.memory_space<vmem>>, vector<32x32xbf16>
    %cst_49 = arith.constant dense<0.000000e+00> : vector<8x32xf32>
    %120 = tpu.matmul %118, %119, %cst_49 {dimension_numbers = #tpu.dot_dimension_numbers<[1], [0], [0], [1], [0, 0, 1, 1], [], []>} : vector<8x32xbf16>, vector<32x32xbf16>, vector<8x32xf32> -> vector<8x32xf32>
    %c0_50 = arith.constant 0 : index
    %c0_51 = arith.constant 0 : index
    %121 = vector.load %arg13[%c0_50, %c0_51] : memref<1x32xf32, #tpu.memory_space<vmem>>, vector<1x32xf32>
    %122 = vector.broadcast %121 : vector<1x32xf32> to vector<8x32xf32>
    %123 = arith.addf %120, %122 : vector<8x32xf32>
    %124 = arith.addf %1, %123 : vector<8x32xf32>
    %c0_52 = arith.constant 0 : index
    %c0_53 = arith.constant 0 : index
    %125 = vector.load %arg14[%c0_52, %c0_53] : memref<1x32xf32, #tpu.memory_space<vmem>>, vector<1x32xf32>
    %c0_54 = arith.constant 0 : index
    %c0_55 = arith.constant 0 : index
    %126 = vector.load %arg15[%c0_54, %c0_55] : memref<1x32xf32, #tpu.memory_space<vmem>>, vector<1x32xf32>
    %cst_56 = arith.constant dense<0.000000e+00> : vector<8xf32>
    %127 = vector.multi_reduction <add>, %124, %cst_56 [1] : vector<8x32xf32> to vector<8xf32>
    %128 = vector.shape_cast %127 : vector<8xf32> to vector<8x1xf32>
    %cst_57 = arith.constant 3.200000e+01 : f32
    %129 = vector.broadcast %cst_57 : f32 to vector<8x1xf32>
    %130 = arith.divf %128, %129 : vector<8x1xf32>
    %131 = vector.broadcast %130 : vector<8x1xf32> to vector<8x32xf32>
    %132 = arith.subf %124, %131 : vector<8x32xf32>
    %133 = arith.mulf %132, %132 : vector<8x32xf32>
    %cst_58 = arith.constant dense<0.000000e+00> : vector<8xf32>
    %134 = vector.multi_reduction <add>, %133, %cst_58 [1] : vector<8x32xf32> to vector<8xf32>
    %135 = vector.shape_cast %134 : vector<8xf32> to vector<8x1xf32>
    %cst_59 = arith.constant 3.200000e+01 : f32
    %136 = vector.broadcast %cst_59 : f32 to vector<8x1xf32>
    %137 = arith.divf %135, %136 : vector<8x1xf32>
    %cst_60 = arith.constant 9.99999974E-6 : f32
    %138 = vector.broadcast %cst_60 : f32 to vector<8x1xf32>
    %139 = arith.addf %137, %138 : vector<8x1xf32>
    %140 = math.rsqrt %139 : vector<8x1xf32>
    %141 = vector.broadcast %140 : vector<8x1xf32> to vector<8x32xf32>
    %142 = arith.mulf %132, %141 : vector<8x32xf32>
    %143 = vector.broadcast %125 : vector<1x32xf32> to vector<8x32xf32>
    %144 = arith.mulf %142, %143 : vector<8x32xf32>
    %145 = vector.broadcast %126 : vector<1x32xf32> to vector<8x32xf32>
    %146 = arith.addf %144, %145 : vector<8x32xf32>
    %147 = arith.truncf %146 : vector<8x32xf32> to vector<8x32xbf16>
    %c0_61 = arith.constant 0 : index
    %c0_62 = arith.constant 0 : index
    %148 = vector.load %arg16[%c0_61, %c0_62] : memref<32x64xbf16, #tpu.memory_space<vmem>>, vector<32x64xbf16>
    %cst_63 = arith.constant dense<0.000000e+00> : vector<8x64xf32>
    %149 = tpu.matmul %147, %148, %cst_63 {dimension_numbers = #tpu.dot_dimension_numbers<[1], [0], [0], [1], [0, 0, 1, 1], [], []>} : vector<8x32xbf16>, vector<32x64xbf16>, vector<8x64xf32> -> vector<8x64xf32>
    %c0_64 = arith.constant 0 : index
    %c0_65 = arith.constant 0 : index
    %150 = vector.load %arg17[%c0_64, %c0_65] : memref<1x64xf32, #tpu.memory_space<vmem>>, vector<1x64xf32>
    %151 = vector.broadcast %150 : vector<1x64xf32> to vector<8x64xf32>
    %152 = arith.addf %149, %151 : vector<8x64xf32>
    %cst_66 = arith.constant 0.000000e+00 : f32
    %153 = vector.broadcast %cst_66 : f32 to vector<8x64xf32>
    %154 = arith.maximumf %152, %153 : vector<8x64xf32>
    %155 = arith.truncf %154 : vector<8x64xf32> to vector<8x64xbf16>
    %c0_67 = arith.constant 0 : index
    %c0_68 = arith.constant 0 : index
    %156 = vector.load %arg18[%c0_67, %c0_68] : memref<64x32xbf16, #tpu.memory_space<vmem>>, vector<64x32xbf16>
    %cst_69 = arith.constant dense<0.000000e+00> : vector<8x32xf32>
    %157 = tpu.matmul %155, %156, %cst_69 {dimension_numbers = #tpu.dot_dimension_numbers<[1], [0], [0], [1], [0, 0, 1, 1], [], []>} : vector<8x64xbf16>, vector<64x32xbf16>, vector<8x32xf32> -> vector<8x32xf32>
    %c0_70 = arith.constant 0 : index
    %c0_71 = arith.constant 0 : index
    %158 = vector.load %arg19[%c0_70, %c0_71] : memref<1x32xf32, #tpu.memory_space<vmem>>, vector<1x32xf32>
    %159 = vector.broadcast %158 : vector<1x32xf32> to vector<8x32xf32>
    %160 = arith.addf %157, %159 : vector<8x32xf32>
    %161 = arith.addf %124, %160 : vector<8x32xf32>
    %162 = vector.shape_cast %161 : vector<8x32xf32> to vector<1x8x32xf32>
    %c0_72 = arith.constant 0 : index
    %c0_73 = arith.constant 0 : index
    %c0_74 = arith.constant 0 : index
    %163 = vector.load %arg20[%c0_72, %c0_73, %c0_74] : memref<1x8x32xf32, #tpu.memory_space<vmem>>, vector<1x8x32xf32>
    tpu.vector_store %arg20[%c0_72, %c0_73, %c0_74], %162 {strides = array<i32>} : memref<1x8x32xf32, #tpu.memory_space<vmem>>, vector<1x8x32xf32>,
    return
  }
  func.func @transform_0(%arg0: i32) -> (i32, i32, i32) {
    %c0_i32 = arith.constant 0 : i32
    %c0_i32_0 = arith.constant 0 : i32
    %c0_i32_1 = arith.constant 0 : i32
    return %arg0, %c0_i32, %c0_i32_0 : i32, i32, i32
  }
  func.func @transform_1(%arg0: i32) -> (i32, i32, i32) {
    %c0_i32 = arith.constant 0 : i32
    %c0_i32_0 = arith.constant 0 : i32
    %c0_i32_1 = arith.constant 0 : i32
    return %arg0, %c0_i32, %c0_i32_0 : i32, i32, i32
  }
  func.func @transform_2(%arg0: i32) -> (i32, i32, i32) {
    %c0_i32 = arith.constant 0 : i32
    %c0_i32_0 = arith.constant 0 : i32
    %c0_i32_1 = arith.constant 0 : i32
    return %arg0, %c0_i32, %c0_i32_0 : i32, i32, i32
  }
  func.func @transform_3(%arg0: i32) -> (i32, i32) {
    %c0_i32 = arith.constant 0 : i32
    %c0_i32_0 = arith.constant 0 : i32
    %c0_i32_1 = arith.constant 0 : i32
    return %c0_i32, %c0_i32_0 : i32, i32
  }
  func.func @transform_4(%arg0: i32) -> (i32, i32) {
    %c0_i32 = arith.constant 0 : i32
    %c0_i32_0 = arith.constant 0 : i32
    %c0_i32_1 = arith.constant 0 : i32
    return %c0_i32, %c0_i32_0 : i32, i32
  }
  func.func @transform_5(%arg0: i32) -> (i32, i32) {
    %c0_i32 = arith.constant 0 : i32
    %c0_i32_0 = arith.constant 0 : i32
    %c0_i32_1 = arith.constant 0 : i32
    return %c0_i32, %c0_i32_0 : i32, i32
  }
  func.func @transform_6(%arg0: i32) -> (i32, i32) {
    %c0_i32 = arith.constant 0 : i32
    %c0_i32_0 = arith.constant 0 : i32
    %c0_i32_1 = arith.constant 0 : i32
    return %c0_i32, %c0_i32_0 : i32, i32
  }
  func.func @transform_7(%arg0: i32) -> (i32, i32) {
    %c0_i32 = arith.constant 0 : i32
    %c0_i32_0 = arith.constant 0 : i32
    %c0_i32_1 = arith.constant 0 : i32
    return %c0_i32, %c0_i32_0 : i32, i32
  }
  func.func @transform_8(%arg0: i32) -> (i32, i32) {
    %c0_i32 = arith.constant 0 : i32
    %c0_i32_0 = arith.constant 0 : i32
    %c0_i32_1 = arith.constant 0 : i32
    return %c0_i32, %c0_i32_0 : i32, i32
  }
  func.func @transform_9(%arg0: i32) -> (i32, i32) {
    %c0_i32 = arith.constant 0 : i32
    %c0_i32_0 = arith.constant 0 : i32
    %c0_i32_1 = arith.constant 0 : i32
    return %c0_i32, %c0_i32_0 : i32, i32
  }
  func.func @transform_10(%arg0: i32) -> (i32, i32) {
    %c0_i32 = arith.constant 0 : i32
    %c0_i32_0 = arith.constant 0 : i32
    %c0_i32_1 = arith.constant 0 : i32
    return %c0_i32, %c0_i32_0 : i32, i32
  }
  func.func @transform_11(%arg0: i32) -> (i32, i32) {
    %c0_i32 = arith.constant 0 : i32
    %c0_i32_0 = arith.constant 0 : i32
    %c0_i32_1 = arith.constant 0 : i32
    return %c0_i32, %c0_i32_0 : i32, i32
  }
  func.func @transform_12(%arg0: i32) -> (i32, i32) {
    %c0_i32 = arith.constant 0 : i32
    %c0_i32_0 = arith.constant 0 : i32
    %c0_i32_1 = arith.constant 0 : i32
    return %c0_i32, %c0_i32_0 : i32, i32
  }
  func.func @transform_13(%arg0: i32) -> (i32, i32) {
    %c0_i32 = arith.constant 0 : i32
    %c0_i32_0 = arith.constant 0 : i32
    %c0_i32_1 = arith.constant 0 : i32
    return %c0_i32, %c0_i32_0 : i32, i32
  }
  func.func @transform_14(%arg0: i32) -> (i32, i32) {
    %c0_i32 = arith.constant 0 : i32
    %c0_i32_0 = arith.constant 0 : i32
    %c0_i32_1 = arith.constant 0 : i32
    return %c0_i32, %c0_i32_0 : i32, i32
  }
  func.func @transform_15(%arg0: i32) -> (i32, i32) {
    %c0_i32 = arith.constant 0 : i32
    %c0_i32_0 = arith.constant 0 : i32
    %c0_i32_1 = arith.constant 0 : i32
    return %c0_i32, %c0_i32_0 : i32, i32
  }
  func.func @transform_16(%arg0: i32) -> (i32, i32) {
    %c0_i32 = arith.constant 0 : i32
    %c0_i32_0 = arith.constant 0 : i32
    %c0_i32_1 = arith.constant 0 : i32
    return %c0_i32, %c0_i32_0 : i32, i32
  }
  func.func @transform_17(%arg0: i32) -> (i32, i32) {
    %c0_i32 = arith.constant 0 : i32
    %c0_i32_0 = arith.constant 0 : i32
    %c0_i32_1 = arith.constant 0 : i32
    return %c0_i32, %c0_i32_0 : i32, i32
  }
  func.func @transform_18(%arg0: i32) -> (i32, i32) {
    %c0_i32 = arith.constant 0 : i32
    %c0_i32_0 = arith.constant 0 : i32
    %c0_i32_1 = arith.constant 0 : i32
    return %c0_i32, %c0_i32_0 : i32, i32
  }
  func.func @transform_19(%arg0: i32) -> (i32, i32, i32) {
    %c0_i32 = arith.constant 0 : i32
    %c0_i32_0 = arith.constant 0 : i32
    %c0_i32_1 = arith.constant 0 : i32
    return %arg0, %c0_i32, %c0_i32_0 : i32, i32, i32
  }
}

module attributes {stable_mosaic.version = 11 : i64} {
  func.func @head_layer_kernel(%arg0: i32, %arg1: memref<1x8x32xf32, #tpu.memory_space<vmem>>, %arg2: memref<1x8x32xf32, #tpu.memory_space<vmem>>, %arg3: memref<1x16x32xf32, #tpu.memory_space<vmem>>, %arg4: memref<1x32xf32, #tpu.memory_space<vmem>>, %arg5: memref<1x32xf32, #tpu.memory_space<vmem>>, %arg6: memref<32x32xbf16, #tpu.memory_space<vmem>>, %arg7: memref<1x32xf32, #tpu.memory_space<vmem>>, %arg8: memref<32x32xbf16, #tpu.memory_space<vmem>>, %arg9: memref<1x32xf32, #tpu.memory_space<vmem>>, %arg10: memref<32x32xbf16, #tpu.memory_space<vmem>>, %arg11: memref<1x32xf32, #tpu.memory_space<vmem>>, %arg12: memref<32x32xbf16, #tpu.memory_space<vmem>>, %arg13: memref<1x32xf32, #tpu.memory_space<vmem>>, %arg14: memref<1x32xf32, #tpu.memory_space<vmem>>, %arg15: memref<1x32xf32, #tpu.memory_space<vmem>>, %arg16: memref<32x64xbf16, #tpu.memory_space<vmem>>, %arg17: memref<1x64xf32, #tpu.memory_space<vmem>>, %arg18: memref<64x32xbf16, #tpu.memory_space<vmem>>, %arg19: memref<1x32xf32, #tpu.memory_space<vmem>>, %arg20: memref<1x8x32xf32, #tpu.memory_space<vmem>>) attributes {dimension_semantics = [#tpu.dimension_semantics<parallel>], iteration_bounds = array<i64: 2>, scalar_prefetch = 0 : i64, scratch_operands = 0 : i64, tpu.core_type = #tpu.core_type<tc>, window_params = [{transform_indices = @transform_0, window_bounds = array<i64: 1, 8, 32>}, {transform_indices = @transform_1, window_bounds = array<i64: 1, 8, 32>}, {transform_indices = @transform_2, window_bounds = array<i64: 1, 16, 32>}, {pipeline_mode = #tpu.pipeline_mode<synchronous>, transform_indices = @transform_3, window_bounds = array<i64: 1, 32>}, {pipeline_mode = #tpu.pipeline_mode<synchronous>, transform_indices = @transform_4, window_bounds = array<i64: 1, 32>}, {pipeline_mode = #tpu.pipeline_mode<synchronous>, transform_indices = @transform_5, window_bounds = array<i64: 32, 32>}, {pipeline_mode = #tpu.pipeline_mode<synchronous>, transform_indices = @transform_6, window_bounds = array<i64: 1, 32>}, {pipeline_mode = #tpu.pipeline_mode<synchronous>, transform_indices = @transform_7, window_bounds = array<i64: 32, 32>}, {pipeline_mode = #tpu.pipeline_mode<synchronous>, transform_indices = @transform_8, window_bounds = array<i64: 1, 32>}, {pipeline_mode = #tpu.pipeline_mode<synchronous>, transform_indices = @transform_9, window_bounds = array<i64: 32, 32>}, {pipeline_mode = #tpu.pipeline_mode<synchronous>, transform_indices = @transform_10, window_bounds = array<i64: 1, 32>}, {pipeline_mode = #tpu.pipeline_mode<synchronous>, transform_indices = @transform_11, window_bounds = array<i64: 32, 32>}, {pipeline_mode = #tpu.pipeline_mode<synchronous>, transform_indices = @transform_12, window_bounds = array<i64: 1, 32>}, {pipeline_mode = #tpu.pipeline_mode<synchronous>, transform_indices = @transform_13, window_bounds = array<i64: 1, 32>}, {pipeline_mode = #tpu.pipeline_mode<synchronous>, transform_indices = @transform_14, window_bounds = array<i64: 1, 32>}, {pipeline_mode = #tpu.pipeline_mode<synchronous>, transform_indices = @transform_15, window_bounds = array<i64: 32, 64>}, {pipeline_mode = #tpu.pipeline_mode<synchronous>, transform_indices = @transform_16, window_bounds = array<i64: 1, 64>}, {pipeline_mode = #tpu.pipeline_mode<synchronous>, transform_indices = @transform_17, window_bounds = array<i64: 64, 32>}, {pipeline_mode = #tpu.pipeline_mode<synchronous>, transform_indices = @transform_18, window_bounds = array<i64: 1, 32>}, {transform_indices = @transform_19, window_bounds = array<i64: 1, 8, 32>}]} {
    %c0 = arith.constant 0 : index
    %c0_0 = arith.constant 0 : index
    %c0_1 = arith.constant 0 : index
    %0 = vector.load %arg1[%c0, %c0_0, %c0_1] : memref<1x8x32xf32, #tpu.memory_space<vmem>>, vector<1x8x32xf32>
    %1 = vector.shape_cast %0 : vector<1x8x32xf32> to vector<8x32xf32>
    %c0_2 = arith.constant 0 : index
    %c0_3 = arith.constant 0 : index
    %c0_4 = arith.constant 0 : index
    %2 = vector.load %arg2[%c0_2, %c0_3, %c0_4] : memref<1x8x32xf32, #tpu.memory_space<vmem>>, vector<1x8x32xf32>
    %3 = vector.shape_cast %2 : vector<1x8x32xf32> to vector<8x32xf32>
    %c0_5 = arith.constant 0 : index
    %c0_6 = arith.constant 0 : index
    %c0_7 = arith.constant 0 : index
    %4 = vector.load %arg3[%c0_5, %c0_6, %c0_7] : memref<1x16x32xf32, #tpu.memory_space<vmem>>, vector<1x16x32xf32>
    %5 = vector.shape_cast %4 : vector<1x16x32xf32> to vector<16x32xf32>
    %c0_8 = arith.constant 0 : index
    %c0_9 = arith.constant 0 : index
    %6 = vector.load %arg4[%c0_8, %c0_9] : memref<1x32xf32, #tpu.memory_space<vmem>>, vector<1x32xf32>
    %c0_10 = arith.constant 0 : index
    %c0_11 = arith.constant 0 : index
    %7 = vector.load %arg5[%c0_10, %c0_11] : memref<1x32xf32, #tpu.memory_space<vmem>>, vector<1x32xf32>
    %cst = arith.constant dense<0.000000e+00> : vector<8xf32>
    %8 = vector.multi_reduction <add>, %1, %cst [1] : vector<8x32xf32> to vector<8xf32>
    %9 = vector.shape_cast %8 : vector<8xf32> to vector<8x1xf32>
    %cst_12 = arith.constant 3.200000e+01 : f32
    %10 = vector.broadcast %cst_12 : f32 to vector<8x1xf32>
    %11 = arith.divf %9, %10 : vector<8x1xf32>
    %12 = vector.broadcast %11 : vector<8x1xf32> to vector<8x32xf32>
    %13 = arith.subf %1, %12 : vector<8x32xf32>
    %14 = arith.mulf %13, %13 : vector<8x32xf32>
    %cst_13 = arith.constant dense<0.000000e+00> : vector<8xf32>
    %15 = vector.multi_reduction <add>, %14, %cst_13 [1] : vector<8x32xf32> to vector<8xf32>
    %16 = vector.shape_cast %15 : vector<8xf32> to vector<8x1xf32>
    %cst_14 = arith.constant 3.200000e+01 : f32
    %17 = vector.broadcast %cst_14 : f32 to vector<8x1xf32>
    %18 = arith.divf %16, %17 : vector<8x1xf32>
    %cst_15 = arith.constant 9.99999974E-6 : f32
    %19 = vector.broadcast %cst_15 : f32 to vector<8x1xf32>
    %20 = arith.addf %18, %19 : vector<8x1xf32>
    %21 = math.rsqrt %20 : vector<8x1xf32>
    %22 = vector.broadcast %21 : vector<8x1xf32> to vector<8x32xf32>
    %23 = arith.mulf %13, %22 : vector<8x32xf32>
    %24 = vector.broadcast %6 : vector<1x32xf32> to vector<8x32xf32>
    %25 = arith.mulf %23, %24 : vector<8x32xf32>
    %26 = vector.broadcast %7 : vector<1x32xf32> to vector<8x32xf32>
    %27 = arith.addf %25, %26 : vector<8x32xf32>
    %28 = arith.addf %27, %3 : vector<8x32xf32>
    %29 = arith.truncf %28 : vector<8x32xf32> to vector<8x32xbf16>
    %30 = arith.truncf %5 : vector<16x32xf32> to vector<16x32xbf16>
    %c0_16 = arith.constant 0 : index
    %c0_17 = arith.constant 0 : index
    %31 = vector.load %arg6[%c0_16, %c0_17] : memref<32x32xbf16, #tpu.memory_space<vmem>>, vector<32x32xbf16>
    %cst_18 = arith.constant dense<0.000000e+00> : vector<8x32xf32>
    %32 = tpu.matmul %29, %31, %cst_18 {dimension_numbers = #tpu.dot_dimension_numbers<[1], [0], [0], [1], [0, 0, 1, 1], [], []>} : vector<8x32xbf16>, vector<32x32xbf16>, vector<8x32xf32> -> vector<8x32xf32>
    %c0_19 = arith.constant 0 : index
    %c0_20 = arith.constant 0 : index
    %33 = vector.load %arg7[%c0_19, %c0_20] : memref<1x32xf32, #tpu.memory_space<vmem>>, vector<1x32xf32>
    %34 = vector.broadcast %33 : vector<1x32xf32> to vector<8x32xf32>
    %35 = arith.addf %32, %34 : vector<8x32xf32>
    %c0_21 = arith.constant 0 : index
    %c0_22 = arith.constant 0 : index
    %36 = vector.load %arg8[%c0_21, %c0_22] : memref<32x32xbf16, #tpu.memory_space<vmem>>, vector<32x32xbf16>
    %cst_23 = arith.constant dense<0.000000e+00> : vector<16x32xf32>
    %37 = tpu.matmul %30, %36, %cst_23 {dimension_numbers = #tpu.dot_dimension_numbers<[1], [0], [0], [1], [0, 0, 1, 1], [], []>} : vector<16x32xbf16>, vector<32x32xbf16>, vector<16x32xf32> -> vector<16x32xf32>
    %c0_24 = arith.constant 0 : index
    %c0_25 = arith.constant 0 : index
    %38 = vector.load %arg9[%c0_24, %c0_25] : memref<1x32xf32, #tpu.memory_space<vmem>>, vector<1x32xf32>
    %39 = vector.broadcast %38 : vector<1x32xf32> to vector<16x32xf32>
    %40 = arith.addf %37, %39 : vector<16x32xf32>
    %c0_26 = arith.constant 0 : index
    %c0_27 = arith.constant 0 : index
    %41 = vector.load %arg10[%c0_26, %c0_27] : memref<32x32xbf16, #tpu.memory_space<vmem>>, vector<32x32xbf16>
    %cst_28 = arith.constant dense<0.000000e+00> : vector<16x32xf32>
    %42 = tpu.matmul %30, %41, %cst_28 {dimension_numbers = #tpu.dot_dimension_numbers<[1], [0], [0], [1], [0, 0, 1, 1], [], []>} : vector<16x32xbf16>, vector<32x32xbf16>, vector<16x32xf32> -> vector<16x32xf32>
    %c0_29 = arith.constant 0 : index
    %c0_30 = arith.constant 0 : index
    %43 = vector.load %arg11[%c0_29, %c0_30] : memref<1x32xf32, #tpu.memory_space<vmem>>, vector<1x32xf32>
    %44 = vector.broadcast %43 : vector<1x32xf32> to vector<16x32xf32>
    %45 = arith.addf %42, %44 : vector<16x32xf32>
    %46 = vector.shape_cast %35 : vector<8x32xf32> to vector<1x8x32xf32>
    %47 = arith.truncf %46 : vector<1x8x32xf32> to vector<1x8x32xbf16>
    %48 = vector.shape_cast %40 : vector<16x32xf32> to vector<1x16x32xf32>
    %49 = arith.truncf %48 : vector<1x16x32xf32> to vector<1x16x32xbf16>
    %50 = vector.shape_cast %45 : vector<16x32xf32> to vector<1x16x32xf32>
    %51 = arith.truncf %50 : vector<1x16x32xf32> to vector<1x16x32xbf16>
    %52 = vector.extract_strided_slice %47 {offsets = [0, 0, 0], sizes = [1, 8, 8], strides = [1, 1, 1]} : vector<1x8x32xbf16> to vector<1x8x8xbf16>
    %53 = vector.extract_strided_slice %49 {offsets = [0, 0, 0], sizes = [1, 16, 8], strides = [1, 1, 1]} : vector<1x16x32xbf16> to vector<1x16x8xbf16>
    "tpu.trace_start"() <{level = 10 : i32, message = "bqd,bkd->bqk"}> : () -> ()
    %cst_31 = arith.constant dense<0.000000e+00> : vector<1x8x16xf32>
    %54 = tpu.matmul %52, %53, %cst_31 {dimension_numbers = #tpu.dot_dimension_numbers<[2], [2], [1], [1], [0, 0, 0, 1, 1, 1], [0], [0]>} : vector<1x8x8xbf16>, vector<1x16x8xbf16>, vector<1x8x16xf32> -> vector<1x8x16xf32>
    "tpu.trace_stop"() : () -> ()
    %cst_32 = arith.constant dense<0xFF800000> : vector<1x8xf32>
    %55 = vector.multi_reduction <maximumf>, %54, %cst_32 [2] : vector<1x8x16xf32> to vector<1x8xf32>
    %56 = vector.shape_cast %55 : vector<1x8xf32> to vector<1x8x1xf32>
    %57 = vector.broadcast %56 : vector<1x8x1xf32> to vector<1x8x16xf32>
    %58 = arith.subf %54, %57 : vector<1x8x16xf32>
    %59 = math.exp %58 : vector<1x8x16xf32>
    %cst_33 = arith.constant dense<0.000000e+00> : vector<1x8xf32>
    %60 = vector.multi_reduction <add>, %59, %cst_33 [2] : vector<1x8x16xf32> to vector<1x8xf32>
    %61 = vector.shape_cast %60 : vector<1x8xf32> to vector<1x8x1xf32>
    %62 = tpu.reciprocal %61 {approx = true} : vector<1x8x1xf32> -> vector<1x8x1xf32>
    %63 = vector.broadcast %62 : vector<1x8x1xf32> to vector<1x8x16xf32>
    %64 = arith.mulf %59, %63 : vector<1x8x16xf32>
    %65 = arith.truncf %64 : vector<1x8x16xf32> to vector<1x8x16xbf16>
    %66 = vector.extract_strided_slice %51 {offsets = [0, 0, 0], sizes = [1, 16, 8], strides = [1, 1, 1]} : vector<1x16x32xbf16> to vector<1x16x8xbf16>
    "tpu.trace_start"() <{level = 10 : i32, message = "bqk,bkd->bqd"}> : () -> ()
    %cst_34 = arith.constant dense<0.000000e+00> : vector<1x8x8xf32>
    %67 = tpu.matmul %65, %66, %cst_34 {dimension_numbers = #tpu.dot_dimension_numbers<[2], [1], [1], [2], [0, 0, 0, 1, 1, 2], [0], [0]>} : vector<1x8x16xbf16>, vector<1x16x8xbf16>, vector<1x8x8xf32> -> vector<1x8x8xf32>
    "tpu.trace_stop"() : () -> ()
    %68 = vector.extract_strided_slice %47 {offsets = [0, 0, 8], sizes = [1, 8, 8], strides = [1, 1, 1]} : vector<1x8x32xbf16> to vector<1x8x8xbf16>
    %69 = vector.extract_strided_slice %49 {offsets = [0, 0, 8], sizes = [1, 16, 8], strides = [1, 1, 1]} : vector<1x16x32xbf16> to vector<1x16x8xbf16>
    "tpu.trace_start"() <{level = 10 : i32, message = "bqd,bkd->bqk"}> : () -> ()
    %cst_35 = arith.constant dense<0.000000e+00> : vector<1x8x16xf32>
    %70 = tpu.matmul %68, %69, %cst_35 {dimension_numbers = #tpu.dot_dimension_numbers<[2], [2], [1], [1], [0, 0, 0, 1, 1, 1], [0], [0]>} : vector<1x8x8xbf16>, vector<1x16x8xbf16>, vector<1x8x16xf32> -> vector<1x8x16xf32>
    "tpu.trace_stop"() : () -> ()
    %cst_36 = arith.constant dense<0xFF800000> : vector<1x8xf32>
    %71 = vector.multi_reduction <maximumf>, %70, %cst_36 [2] : vector<1x8x16xf32> to vector<1x8xf32>
    %72 = vector.shape_cast %71 : vector<1x8xf32> to vector<1x8x1xf32>
    %73 = vector.broadcast %72 : vector<1x8x1xf32> to vector<1x8x16xf32>
    %74 = arith.subf %70, %73 : vector<1x8x16xf32>
    %75 = math.exp %74 : vector<1x8x16xf32>
    %cst_37 = arith.constant dense<0.000000e+00> : vector<1x8xf32>
    %76 = vector.multi_reduction <add>, %75, %cst_37 [2] : vector<1x8x16xf32> to vector<1x8xf32>
    %77 = vector.shape_cast %76 : vector<1x8xf32> to vector<1x8x1xf32>
    %78 = tpu.reciprocal %77 {approx = true} : vector<1x8x1xf32> -> vector<1x8x1xf32>
    %79 = vector.broadcast %78 : vector<1x8x1xf32> to vector<1x8x16xf32>
    %80 = arith.mulf %75, %79 : vector<1x8x16xf32>
    %81 = arith.truncf %80 : vector<1x8x16xf32> to vector<1x8x16xbf16>
    %82 = vector.extract_strided_slice %51 {offsets = [0, 0, 8], sizes = [1, 16, 8], strides = [1, 1, 1]} : vector<1x16x32xbf16> to vector<1x16x8xbf16>
    "tpu.trace_start"() <{level = 10 : i32, message = "bqk,bkd->bqd"}> : () -> ()
    %cst_38 = arith.constant dense<0.000000e+00> : vector<1x8x8xf32>
    %83 = tpu.matmul %81, %82, %cst_38 {dimension_numbers = #tpu.dot_dimension_numbers<[2], [1], [1], [2], [0, 0, 0, 1, 1, 2], [0], [0]>} : vector<1x8x16xbf16>, vector<1x16x8xbf16>, vector<1x8x8xf32> -> vector<1x8x8xf32>
    "tpu.trace_stop"() : () -> ()
    %84 = vector.extract_strided_slice %47 {offsets = [0, 0, 16], sizes = [1, 8, 8], strides = [1, 1, 1]} : vector<1x8x32xbf16> to vector<1x8x8xbf16>
    %85 = vector.extract_strided_slice %49 {offsets = [0, 0, 16], sizes = [1, 16, 8], strides = [1, 1, 1]} : vector<1x16x32xbf16> to vector<1x16x8xbf16>
    "tpu.trace_start"() <{level = 10 : i32, message = "bqd,bkd->bqk"}> : () -> ()
    %cst_39 = arith.constant dense<0.000000e+00> : vector<1x8x16xf32>
    %86 = tpu.matmul %84, %85, %cst_39 {dimension_numbers = #tpu.dot_dimension_numbers<[2], [2], [1], [1], [0, 0, 0, 1, 1, 1], [0], [0]>} : vector<1x8x8xbf16>, vector<1x16x8xbf16>, vector<1x8x16xf32> -> vector<1x8x16xf32>
    "tpu.trace_stop"() : () -> ()
    %cst_40 = arith.constant dense<0xFF800000> : vector<1x8xf32>
    %87 = vector.multi_reduction <maximumf>, %86, %cst_40 [2] : vector<1x8x16xf32> to vector<1x8xf32>
    %88 = vector.shape_cast %87 : vector<1x8xf32> to vector<1x8x1xf32>
    %89 = vector.broadcast %88 : vector<1x8x1xf32> to vector<1x8x16xf32>
    %90 = arith.subf %86, %89 : vector<1x8x16xf32>
    %91 = math.exp %90 : vector<1x8x16xf32>
    %cst_41 = arith.constant dense<0.000000e+00> : vector<1x8xf32>
    %92 = vector.multi_reduction <add>, %91, %cst_41 [2] : vector<1x8x16xf32> to vector<1x8xf32>
    %93 = vector.shape_cast %92 : vector<1x8xf32> to vector<1x8x1xf32>
    %94 = tpu.reciprocal %93 {approx = true} : vector<1x8x1xf32> -> vector<1x8x1xf32>
    %95 = vector.broadcast %94 : vector<1x8x1xf32> to vector<1x8x16xf32>
    %96 = arith.mulf %91, %95 : vector<1x8x16xf32>
    %97 = arith.truncf %96 : vector<1x8x16xf32> to vector<1x8x16xbf16>
    %98 = vector.extract_strided_slice %51 {offsets = [0, 0, 16], sizes = [1, 16, 8], strides = [1, 1, 1]} : vector<1x16x32xbf16> to vector<1x16x8xbf16>
    "tpu.trace_start"() <{level = 10 : i32, message = "bqk,bkd->bqd"}> : () -> ()
    %cst_42 = arith.constant dense<0.000000e+00> : vector<1x8x8xf32>
    %99 = tpu.matmul %97, %98, %cst_42 {dimension_numbers = #tpu.dot_dimension_numbers<[2], [1], [1], [2], [0, 0, 0, 1, 1, 2], [0], [0]>} : vector<1x8x16xbf16>, vector<1x16x8xbf16>, vector<1x8x8xf32> -> vector<1x8x8xf32>
    "tpu.trace_stop"() : () -> ()
    %100 = vector.extract_strided_slice %47 {offsets = [0, 0, 24], sizes = [1, 8, 8], strides = [1, 1, 1]} : vector<1x8x32xbf16> to vector<1x8x8xbf16>
    %101 = vector.extract_strided_slice %49 {offsets = [0, 0, 24], sizes = [1, 16, 8], strides = [1, 1, 1]} : vector<1x16x32xbf16> to vector<1x16x8xbf16>
    "tpu.trace_start"() <{level = 10 : i32, message = "bqd,bkd->bqk"}> : () -> ()
    %cst_43 = arith.constant dense<0.000000e+00> : vector<1x8x16xf32>
    %102 = tpu.matmul %100, %101, %cst_43 {dimension_numbers = #tpu.dot_dimension_numbers<[2], [2], [1], [1], [0, 0, 0, 1, 1, 1], [0], [0]>} : vector<1x8x8xbf16>, vector<1x16x8xbf16>, vector<1x8x16xf32> -> vector<1x8x16xf32>
    "tpu.trace_stop"() : () -> ()
    %cst_44 = arith.constant dense<0xFF800000> : vector<1x8xf32>
    %103 = vector.multi_reduction <maximumf>, %102, %cst_44 [2] : vector<1x8x16xf32> to vector<1x8xf32>
    %104 = vector.shape_cast %103 : vector<1x8xf32> to vector<1x8x1xf32>
    %105 = vector.broadcast %104 : vector<1x8x1xf32> to vector<1x8x16xf32>
    %106 = arith.subf %102, %105 : vector<1x8x16xf32>
    %107 = math.exp %106 : vector<1x8x16xf32>
    %cst_45 = arith.constant dense<0.000000e+00> : vector<1x8xf32>
    %108 = vector.multi_reduction <add>, %107, %cst_45 [2] : vector<1x8x16xf32> to vector<1x8xf32>
    %109 = vector.shape_cast %108 : vector<1x8xf32> to vector<1x8x1xf32>
    %110 = tpu.reciprocal %109 {approx = true} : vector<1x8x1xf32> -> vector<1x8x1xf32>
    %111 = vector.broadcast %110 : vector<1x8x1xf32> to vector<1x8x16xf32>
    %112 = arith.mulf %107, %111 : vector<1x8x16xf32>
    %113 = arith.truncf %112 : vector<1x8x16xf32> to vector<1x8x16xbf16>
    %114 = vector.extract_strided_slice %51 {offsets = [0, 0, 24], sizes = [1, 16, 8], strides = [1, 1, 1]} : vector<1x16x32xbf16> to vector<1x16x8xbf16>
    "tpu.trace_start"() <{level = 10 : i32, message = "bqk,bkd->bqd"}> : () -> ()
    %cst_46 = arith.constant dense<0.000000e+00> : vector<1x8x8xf32>
    %115 = tpu.matmul %113, %114, %cst_46 {dimension_numbers = #tpu.dot_dimension_numbers<[2], [1], [1], [2], [0, 0, 0, 1, 1, 2], [0], [0]>} : vector<1x8x16xbf16>, vector<1x16x8xbf16>, vector<1x8x8xf32> -> vector<1x8x8xf32>
    "tpu.trace_stop"() : () -> ()
    %116 = tpu.concatenate %67, %83, %99, %115 in 2 : vector<1x8x8xf32>, vector<1x8x8xf32>, vector<1x8x8xf32>, vector<1x8x8xf32> -> vector<1x8x32xf32>
    %117 = vector.shape_cast %116 : vector<1x8x32xf32> to vector<8x32xf32>
    %118 = arith.truncf %117 : vector<8x32xf32> to vector<8x32xbf16>
    %c0_47 = arith.constant 0 : index
    %c0_48 = arith.constant 0 : index
    %119 = vector.load %arg12[%c0_47, %c0_48] : memref<32x32xbf16, #tpu.memory_space<vmem>>, vector<32x32xbf16>
    %cst_49 = arith.constant dense<0.000000e+00> : vector<8x32xf32>
    %120 = tpu.matmul %118, %119, %cst_49 {dimension_numbers = #tpu.dot_dimension_numbers<[1], [0], [0], [1], [0, 0, 1, 1], [], []>} : vector<8x32xbf16>, vector<32x32xbf16>, vector<8x32xf32> -> vector<8x32xf32>
    %c0_50 = arith.constant 0 : index
    %c0_51 = arith.constant 0 : index
    %121 = vector.load %arg13[%c0_50, %c0_51] : memref<1x32xf32, #tpu.memory_space<vmem>>, vector<1x32xf32>
    %122 = vector.broadcast %121 : vector<1x32xf32> to vector<8x32xf32>
    %123 = arith.addf %120, %122 : vector<8x32xf32>
    %124 = arith.addf %1, %123 : vector<8x32xf32>
    %c0_52 = arith.constant 0 : index
    %c0_53 = arith.constant 0 : index
    %125 = vector.load %arg14[%c0_52, %c0_53] : memref<1x32xf32, #tpu.memory_space<vmem>>, vector<1x32xf32>
    %c0_54 = arith.constant 0 : index
    %c0_55 = arith.constant 0 : index
    %126 = vector.load %arg15[%c0_54, %c0_55] : memref<1x32xf32, #tpu.memory_space<vmem>>, vector<1x32xf32>
    %cst_56 = arith.constant dense<0.000000e+00> : vector<8xf32>
    %127 = vector.multi_reduction <add>, %124, %cst_56 [1] : vector<8x32xf32> to vector<8xf32>
    %128 = vector.shape_cast %127 : vector<8xf32> to vector<8x1xf32>
    %cst_57 = arith.constant 3.200000e+01 : f32
    %129 = vector.broadcast %cst_57 : f32 to vector<8x1xf32>
    %130 = arith.divf %128, %129 : vector<8x1xf32>
    %131 = vector.broadcast %130 : vector<8x1xf32> to vector<8x32xf32>
    %132 = arith.subf %124, %131 : vector<8x32xf32>
    %133 = arith.mulf %132, %132 : vector<8x32xf32>
    %cst_58 = arith.constant dense<0.000000e+00> : vector<8xf32>
    %134 = vector.multi_reduction <add>, %133, %cst_58 [1] : vector<8x32xf32> to vector<8xf32>
    %135 = vector.shape_cast %134 : vector<8xf32> to vector<8x1xf32>
    %cst_59 = arith.constant 3.200000e+01 : f32
    %136 = vector.broadcast %cst_59 : f32 to vector<8x1xf32>
    %137 = arith.divf %135, %136 : vector<8x1xf32>
    %cst_60 = arith.constant 9.99999974E-6 : f32
    %138 = vector.broadcast %cst_60 : f32 to vector<8x1xf32>
    %139 = arith.addf %137, %138 : vector<8x1xf32>
    %140 = math.rsqrt %139 : vector<8x1xf32>
    %141 = vector.broadcast %140 : vector<8x1xf32> to vector<8x32xf32>
    %142 = arith.mulf %132, %141 : vector<8x32xf32>
    %143 = vector.broadcast %125 : vector<1x32xf32> to vector<8x32xf32>
    %144 = arith.mulf %142, %143 : vector<8x32xf32>
    %145 = vector.broadcast %126 : vector<1x32xf32> to vector<8x32xf32>
    %146 = arith.addf %144, %145 : vector<8x32xf32>
    %147 = arith.truncf %146 : vector<8x32xf32> to vector<8x32xbf16>
    %c0_61 = arith.constant 0 : index
    %c0_62 = arith.constant 0 : index
    %148 = vector.load %arg16[%c0_61, %c0_62] : memref<32x64xbf16, #tpu.memory_space<vmem>>, vector<32x64xbf16>
    %cst_63 = arith.constant dense<0.000000e+00> : vector<8x64xf32>
    %149 = tpu.matmul %147, %148, %cst_63 {dimension_numbers = #tpu.dot_dimension_numbers<[1], [0], [0], [1], [0, 0, 1, 1], [], []>} : vector<8x32xbf16>, vector<32x64xbf16>, vector<8x64xf32> -> vector<8x64xf32>
    %c0_64 = arith.constant 0 : index
    %c0_65 = arith.constant 0 : index
    %150 = vector.load %arg17[%c0_64, %c0_65] : memref<1x64xf32, #tpu.memory_space<vmem>>, vector<1x64xf32>
    %151 = vector.broadcast %150 : vector<1x64xf32> to vector<8x64xf32>
    %152 = arith.addf %149, %151 : vector<8x64xf32>
    %cst_66 = arith.constant 0.000000e+00 : f32
    %153 = vector.broadcast %cst_66 : f32 to vector<8x64xf32>
    %154 = arith.maximumf %152, %153 : vector<8x64xf32>
    %155 = arith.truncf %154 : vector<8x64xf32> to vector<8x64xbf16>
    %c0_67 = arith.constant 0 : index
    %c0_68 = arith.constant 0 : index
    %156 = vector.load %arg18[%c0_67, %c0_68] : memref<64x32xbf16, #tpu.memory_space<vmem>>, vector<64x32xbf16>
    %cst_69 = arith.constant dense<0.000000e+00> : vector<8x32xf32>
    %157 = tpu.matmul %155, %156, %cst_69 {dimension_numbers = #tpu.dot_dimension_numbers<[1], [0], [0], [1], [0, 0, 1, 1], [], []>} : vector<8x64xbf16>, vector<64x32xbf16>, vector<8x32xf32> -> vector<8x32xf32>
    %c0_70 = arith.constant 0 : index
    %c0_71 = arith.constant 0 : index
    %158 = vector.load %arg19[%c0_70, %c0_71] : memref<1x32xf32, #tpu.memory_space<vmem>>, vector<1x32xf32>
    %159 = vector.broadcast %158 : vector<1x32xf32> to vector<8x32xf32>
    %160 = arith.addf %157, %159 : vector<8x32xf32>
    %161 = arith.addf %124, %160 : vector<8x32xf32>
    %162 = vector.shape_cast %161 : vector<8x32xf32> to vector<1x8x32xf32>
    %c0_72 = arith.constant 0 : index
    %c0_73 = arith.constant 0 : index
    %c0_74 = arith.constant 0 : index
    %163 = vector.load %arg20[%c0_72, %c0_73, %c0_74] : memref<1x8x32xf32, #tpu.memory_space<vmem>>, vector<1x8x32xf32>
    tpu.vector_store %arg20[%c0_72, %c0_73, %c0_74], %162 {strides = array<i32>} : memref<1x8x32xf32, #tpu.memory_space<vmem>>, vector<1x8x32xf32>,
    return
  }
  func.func @transform_0(%arg0: i32) -> (i32, i32, i32) {
    %c0_i32 = arith.constant 0 : i32
    %c0_i32_0 = arith.constant 0 : i32
    %c0_i32_1 = arith.constant 0 : i32
    return %arg0, %c0_i32, %c0_i32_0 : i32, i32, i32
  }
  func.func @transform_1(%arg0: i32) -> (i32, i32, i32) {
    %c0_i32 = arith.constant 0 : i32
    %c0_i32_0 = arith.constant 0 : i32
    %c0_i32_1 = arith.constant 0 : i32
    return %arg0, %c0_i32, %c0_i32_0 : i32, i32, i32
  }
  func.func @transform_2(%arg0: i32) -> (i32, i32, i32) {
    %c0_i32 = arith.constant 0 : i32
    %c0_i32_0 = arith.constant 0 : i32
    %c0_i32_1 = arith.constant 0 : i32
    return %arg0, %c0_i32, %c0_i32_0 : i32, i32, i32
  }
  func.func @transform_3(%arg0: i32) -> (i32, i32) {
    %c0_i32 = arith.constant 0 : i32
    %c0_i32_0 = arith.constant 0 : i32
    %c0_i32_1 = arith.constant 0 : i32
    return %c0_i32, %c0_i32_0 : i32, i32
  }
  func.func @transform_4(%arg0: i32) -> (i32, i32) {
    %c0_i32 = arith.constant 0 : i32
    %c0_i32_0 = arith.constant 0 : i32
    %c0_i32_1 = arith.constant 0 : i32
    return %c0_i32, %c0_i32_0 : i32, i32
  }
  func.func @transform_5(%arg0: i32) -> (i32, i32) {
    %c0_i32 = arith.constant 0 : i32
    %c0_i32_0 = arith.constant 0 : i32
    %c0_i32_1 = arith.constant 0 : i32
    return %c0_i32, %c0_i32_0 : i32, i32
  }
  func.func @transform_6(%arg0: i32) -> (i32, i32) {
    %c0_i32 = arith.constant 0 : i32
    %c0_i32_0 = arith.constant 0 : i32
    %c0_i32_1 = arith.constant 0 : i32
    return %c0_i32, %c0_i32_0 : i32, i32
  }
  func.func @transform_7(%arg0: i32) -> (i32, i32) {
    %c0_i32 = arith.constant 0 : i32
    %c0_i32_0 = arith.constant 0 : i32
    %c0_i32_1 = arith.constant 0 : i32
    return %c0_i32, %c0_i32_0 : i32, i32
  }
  func.func @transform_8(%arg0: i32) -> (i32, i32) {
    %c0_i32 = arith.constant 0 : i32
    %c0_i32_0 = arith.constant 0 : i32
    %c0_i32_1 = arith.constant 0 : i32
    return %c0_i32, %c0_i32_0 : i32, i32
  }
  func.func @transform_9(%arg0: i32) -> (i32, i32) {
    %c0_i32 = arith.constant 0 : i32
    %c0_i32_0 = arith.constant 0 : i32
    %c0_i32_1 = arith.constant 0 : i32
    return %c0_i32, %c0_i32_0 : i32, i32
  }
  func.func @transform_10(%arg0: i32) -> (i32, i32) {
    %c0_i32 = arith.constant 0 : i32
    %c0_i32_0 = arith.constant 0 : i32
    %c0_i32_1 = arith.constant 0 : i32
    return %c0_i32, %c0_i32_0 : i32, i32
  }
  func.func @transform_11(%arg0: i32) -> (i32, i32) {
    %c0_i32 = arith.constant 0 : i32
    %c0_i32_0 = arith.constant 0 : i32
    %c0_i32_1 = arith.constant 0 : i32
    return %c0_i32, %c0_i32_0 : i32, i32
  }
  func.func @transform_12(%arg0: i32) -> (i32, i32) {
    %c0_i32 = arith.constant 0 : i32
    %c0_i32_0 = arith.constant 0 : i32
    %c0_i32_1 = arith.constant 0 : i32
    return %c0_i32, %c0_i32_0 : i32, i32
  }
  func.func @transform_13(%arg0: i32) -> (i32, i32) {
    %c0_i32 = arith.constant 0 : i32
    %c0_i32_0 = arith.constant 0 : i32
    %c0_i32_1 = arith.constant 0 : i32
    return %c0_i32, %c0_i32_0 : i32, i32
  }
  func.func @transform_14(%arg0: i32) -> (i32, i32) {
    %c0_i32 = arith.constant 0 : i32
    %c0_i32_0 = arith.constant 0 : i32
    %c0_i32_1 = arith.constant 0 : i32
    return %c0_i32, %c0_i32_0 : i32, i32
  }
  func.func @transform_15(%arg0: i32) -> (i32, i32) {
    %c0_i32 = arith.constant 0 : i32
    %c0_i32_0 = arith.constant 0 : i32
    %c0_i32_1 = arith.constant 0 : i32
    return %c0_i32, %c0_i32_0 : i32, i32
  }
  func.func @transform_16(%arg0: i32) -> (i32, i32) {
    %c0_i32 = arith.constant 0 : i32
    %c0_i32_0 = arith.constant 0 : i32
    %c0_i32_1 = arith.constant 0 : i32
    return %c0_i32, %c0_i32_0 : i32, i32
  }
  func.func @transform_17(%arg0: i32) -> (i32, i32) {
    %c0_i32 = arith.constant 0 : i32
    %c0_i32_0 = arith.constant 0 : i32
    %c0_i32_1 = arith.constant 0 : i32
    return %c0_i32, %c0_i32_0 : i32, i32
  }
  func.func @transform_18(%arg0: i32) -> (i32, i32) {
    %c0_i32 = arith.constant 0 : i32
    %c0_i32_0 = arith.constant 0 : i32
    %c0_i32_1 = arith.constant 0 : i32
    return %c0_i32, %c0_i32_0 : i32, i32
  }
  func.func @transform_19(%arg0: i32) -> (i32, i32, i32) {
    %c0_i32 = arith.constant 0 : i32
    %c0_i32_0 = arith.constant 0 : i32
    %c0_i32_1 = arith.constant 0 : i32
    return %arg0, %c0_i32, %c0_i32_0 : i32, i32, i32
  }
}

</mosaic_0001>

<llo_original>
// kernel: tpu_custom_call.1
$region0: #{tpu_custom_call.1}
  #allocation0 [shape = 'u32[]', space=smem, size = 0x4, offset = 0x4, fixed_abs, tag = 'smem constant byte address 0x4 - core index']
  #allocation1 [shape = 'u32[144,128]{1,0:T(1,128)}', space=vmem, size = 0x12000, scoped, tag = 'internal scratch']
  %s0 = inlined_call_operand.vmem [shape: f32[2,8,32], index: 0, kind: input, shape index: {}]
  %s1 = inlined_call_operand.hbm [shape: f32[2,8,32], index: 1, kind: input, shape index: {}]
  %s2 = inlined_call_operand.vmem [shape: f32[2,16,32], index: 2, kind: input, shape index: {}]
  %s3 = inlined_call_operand.vmem [shape: f32[1,32], index: 3, kind: input, shape index: {}]
  %s4 = inlined_call_operand.hbm [shape: f32[1,32], index: 4, kind: input, shape index: {}]
  %s5 = inlined_call_operand.hbm [shape: bf16[32,32], index: 5, kind: input, shape index: {}]
  %s6 = inlined_call_operand.hbm [shape: f32[1,32], index: 6, kind: input, shape index: {}]
  %s7 = inlined_call_operand.hbm [shape: bf16[32,32], index: 7, kind: input, shape index: {}]
  %s8 = inlined_call_operand.hbm [shape: f32[1,32], index: 8, kind: input, shape index: {}]
  %s9 = inlined_call_operand.vmem [shape: bf16[32,32], index: 9, kind: input, shape index: {}]
  %s10 = inlined_call_operand.hbm [shape: f32[1,32], index: 10, kind: input, shape index: {}]
  %s11 = inlined_call_operand.hbm [shape: bf16[32,32], index: 11, kind: input, shape index: {}]
  %s12 = inlined_call_operand.hbm [shape: f32[1,32], index: 12, kind: input, shape index: {}]
  %s13 = inlined_call_operand.hbm [shape: f32[1,32], index: 13, kind: input, shape index: {}]
  %s14 = inlined_call_operand.vmem [shape: f32[1,32], index: 14, kind: input, shape index: {}]
  %s15 = inlined_call_operand.vmem [shape: bf16[32,64], index: 15, kind: input, shape index: {}]
  %s16 = inlined_call_operand.vmem [shape: f32[1,64], index: 16, kind: input, shape index: {}]
  %s17 = inlined_call_operand.vmem [shape: bf16[64,32], index: 17, kind: input, shape index: {}]
  %s18 = inlined_call_operand.vmem [shape: f32[1,32], index: 18, kind: input, shape index: {}]
  %s19 = inlined_call_operand.hbm [shape: f32[2,8,32], index: 19, kind: output, shape index: {}]
  %s20 = sld [smem:[#allocation0]]
  $region149: #{tpu_custom_call.1} parent=0
    _
  %s22 = ssub.s32 1, %s20
  %s23 = scalar_select 0, %s22, %s20
  $region1: #{tpu_custom_call.1} parent=0
    #allocation2 [shape = 'u8[8192]{0}', space=vmem, size = 0x2000, scoped, tag = 'input window, operand 1']
    #allocation3 [shape = 's32[2]{0}', space=sflag, size = 0x8, scoped, tag = 'scoped memory for tpu_custom_call.1']
    #allocation4 [shape = 's32[2]{0}', space=sflag, size = 0x8, scoped, tag = 'scoped memory for tpu_custom_call.1']
    #allocation5 [shape = 'u8[512]{0}', space=vmem, size = 0x400, scoped, tag = 'input window, operand 4, single buffered']
    #allocation6 [shape = 's32[1]{0}', space=sflag, size = 0x4, scoped, tag = 'scoped memory for tpu_custom_call.1']
    #allocation7 [shape = 'u8[8192]{0}', space=vmem, size = 0x2000, scoped, tag = 'input window, operand 5, single buffered']
    #allocation8 [shape = 'u8[512]{0}', space=vmem, size = 0x400, scoped, tag = 'input window, operand 6, single buffered']
    #allocation9 [shape = 's32[1]{0}', space=sflag, size = 0x4, scoped, tag = 'scoped memory for tpu_custom_call.1']
    #allocation10 [shape = 'u8[8192]{0}', space=vmem, size = 0x2000, scoped, tag = 'input window, operand 7, single buffered']
    #allocation11 [shape = 'u8[512]{0}', space=vmem, size = 0x400, scoped, tag = 'input window, operand 8, single buffered']
    #allocation12 [shape = 's32[1]{0}', space=sflag, size = 0x4, scoped, tag = 'scoped memory for tpu_custom_call.1']
    #allocation13 [shape = 'u8[512]{0}', space=vmem, size = 0x400, scoped, tag = 'input window, operand 10, single buffered']
    #allocation14 [shape = 'u8[8192]{0}', space=vmem, size = 0x2000, scoped, tag = 'input window, operand 11, single buffered']
    #allocation15 [shape = 's32[1]{0}', space=sflag, size = 0x4, scoped, tag = 'scoped memory for tpu_custom_call.1']
    #allocation16 [shape = 'u8[512]{0}', space=vmem, size = 0x400, scoped, tag = 'input window, operand 12, single buffered']
    #allocation17 [shape = 'u8[512]{0}', space=vmem, size = 0x400, scoped, tag = 'input window, operand 13, single buffered']
    #allocation18 [shape = 's32[1]{0}', space=sflag, size = 0x4, scoped, tag = 'scoped memory for tpu_custom_call.1']
    #allocation19 [shape = 'u8[8192]{0}', space=vmem, size = 0x2000, scoped, tag = 'output window, operand 0']
    %24 = vsyncpa [#allocation3], 0
    %s25 = scalar_lea.sflag [#allocation3], 1
    %26 = vsyncpa %s25, 0
    %27 = vsyncpa [#allocation6], 0
    %28 = vsyncpa [#allocation9], 0
    %29 = vsyncpa [#allocation12], 0
    %30 = vsyncpa [#allocation15], 0
    %31 = vsyncpa [#allocation18], 0
    %32 = vsyncpa [#allocation4], 0
    %s33 = scalar_lea.sflag [#allocation4], 1
    %34 = vsyncpa %s33, 0
    loop: start=0, step=1, limit=4
    $region2: #{tpu_custom_call.1} parent=1 // loop_pre_header
      _
    $region3: #{tpu_custom_call.1} parent=1 // loop_header
      %s36 = sphi 0, %s40
      %p37 = scmp.ge.s32.totalorder %s36, 4
      %s46 = sphi 0, %s48
      %s49 = sphi 0, %s46
      %s50 = sphi 0, %s49
      %s66 = sphi 0, %s50
      %s72 = sphi 0, %s74
      %s75 = sphi 0, %s72
      %s76 = sphi 0, %s75
      %s92 = sphi 0, %s76
      %s98 = sphi 0, %s100
      %s101 = sphi 0, %s98
      %s102 = sphi 0, %s101
      %s118 = sphi 0, %s102
      %s122 = sphi 0, %s122
      %s124 = sphi 0, %s122
      %s125 = sphi 0, %s124
      %s139 = sphi 0, %s125
      %s143 = sphi 0, %s143
      %s145 = sphi 0, %s143
      %s146 = sphi 0, %s145
      %s160 = sphi 0, %s146
      %s164 = sphi 0, %s164
      %s166 = sphi 0, %s164
      %s167 = sphi 0, %s166
      %s181 = sphi 0, %s167
      %s185 = sphi 0, %s185
      %s187 = sphi 0, %s185
      %s188 = sphi 0, %s187
      %s202 = sphi 0, %s188
      %s206 = sphi 0, %s206
      %s208 = sphi 0, %s206
      %s209 = sphi 0, %s208
      %s223 = sphi 0, %s209
      %s227 = sphi 0, %s227
      %s229 = sphi 0, %s227
      %s230 = sphi 0, %s229
      %s244 = sphi 0, %s230
      %s248 = sphi 0, %s248
      %s250 = sphi 0, %s248
      %s251 = sphi 0, %s250
      %s265 = sphi 0, %s251
      %s269 = sphi 0, %s269
      %s271 = sphi 0, %s269
      %s272 = sphi 0, %s271
      %s286 = sphi 0, %s272
      %s290 = sphi 0, %s290
      %s292 = sphi 0, %s290
      %s293 = sphi 0, %s292
      %s307 = sphi 0, %s293
      %s311 = sphi 0, %s311
      %s313 = sphi 0, %s311
      %s314 = sphi 0, %s313
      %s328 = sphi 0, %s314
      %s332 = sphi 0, %s332
      %s334 = sphi 0, %s332
      %s335 = sphi 0, %s334
      %s349 = sphi 0, %s335
      %s353 = sphi 0, %s353
      %s355 = sphi 0, %s353
      %s356 = sphi 0, %s355
      %s370 = sphi 0, %s356
      %s374 = sphi 0, %s374
      %s376 = sphi 0, %s374
      %s377 = sphi 0, %s376
      %s391 = sphi 0, %s377
      %s395 = sphi 0, %s395
      %s397 = sphi 0, %s395
      %s398 = sphi 0, %s397
      %s412 = sphi 0, %s398
      %s416 = sphi 0, %s416
      %s418 = sphi 0, %s416
      %s419 = sphi 0, %s418
      %s433 = sphi 0, %s419
      %s437 = sphi 0, %s437
      %s439 = sphi 0, %s437
      %s440 = sphi 0, %s439
      %s454 = sphi 0, %s440
      %s460 = sphi 0, %s462
      %s463 = sphi 0, %s460
      %s464 = sphi 0, %s463
      %s480 = sphi 0, %s464
    $region4: #{tpu_custom_call.1} parent=1 // loop_header_branch
      %39 = sbr.rel (%p37) target = $region8
    $region5: #{tpu_custom_call.1} parent=1 // loop_body
      %s41 = ssub.s32 %s36, 1
      %s42 = ssub.s32 %s36, 2
      %s43 = sadd.s32 %s36, 1
      %s44 = ssub.s32 %s36, %s43
      %p45 = scmp.eq.s32.totalorder %s44, 0
      %s47 = sadd.s32 %s46, 1
      %s48 = scalar_select %p45, %s46, %s47
      %p51 = pneg %p45
      %p52 = scmp.eq.s32.totalorder %s36, 1
      %p53 = por %p51, %p52
      %p54 = scmp.ne.s32.totalorder %s46, %s49
      %p55 = scmp.eq.s32.totalorder %s36, 0
      %p56 = por %p54, %p55
      %p57 = scmp.ne.s32.totalorder %s46, %s49
      %p58 = scmp.eq.s32.totalorder %s41, 1
      %p59 = por %p57, %p58
      %p60 = scmp.ne.s32.totalorder %s49, %s50
      %p61 = scmp.eq.s32.totalorder %s41, 0
      %p62 = por %p60, %p61
      %p63 = scmp.ne.s32.totalorder %s49, %s50
      %p64 = scmp.eq.s32.totalorder %s42, 1
      %p65 = por %p63, %p64
      %p67 = scmp.ne.s32.totalorder %s50, %s66
      %p68 = scmp.eq.s32.totalorder %s42, 0
      %p69 = por %p67, %p68
      %s70 = ssub.s32 %s36, %s43
      %p71 = scmp.eq.s32.totalorder %s70, 0
      %s73 = sadd.s32 %s72, 1
      %s74 = scalar_select %p71, %s72, %s73
      %p77 = pneg %p71
      %p78 = scmp.eq.s32.totalorder %s36, 1
      %p79 = por %p77, %p78
      %p80 = scmp.ne.s32.totalorder %s72, %s75
      %p81 = scmp.eq.s32.totalorder %s36, 0
      %p82 = por %p80, %p81
      %p83 = scmp.ne.s32.totalorder %s72, %s75
      %p84 = scmp.eq.s32.totalorder %s41, 1
      %p85 = por %p83, %p84
      %p86 = scmp.ne.s32.totalorder %s75, %s76
      %p87 = scmp.eq.s32.totalorder %s41, 0
      %p88 = por %p86, %p87
      %p89 = scmp.ne.s32.totalorder %s75, %s76
      %p90 = scmp.eq.s32.totalorder %s42, 1
      %p91 = por %p89, %p90
      %p93 = scmp.ne.s32.totalorder %s76, %s92
      %p94 = scmp.eq.s32.totalorder %s42, 0
      %p95 = por %p93, %p94
      %s96 = ssub.s32 %s36, %s43
      %p97 = scmp.eq.s32.totalorder %s96, 0
      %s99 = sadd.s32 %s98, 1
      %s100 = scalar_select %p97, %s98, %s99
      %p103 = pneg %p97
      %p104 = scmp.eq.s32.totalorder %s36, 1
      %p105 = por %p103, %p104
      %p106 = scmp.ne.s32.totalorder %s98, %s101
      %p107 = scmp.eq.s32.totalorder %s36, 0
      %p108 = por %p106, %p107
      %p109 = scmp.ne.s32.totalorder %s98, %s101
      %p110 = scmp.eq.s32.totalorder %s41, 1
      %p111 = por %p109, %p110
      %p112 = scmp.ne.s32.totalorder %s101, %s102
      %p113 = scmp.eq.s32.totalorder %s41, 0
      %p114 = por %p112, %p113
      %p115 = scmp.ne.s32.totalorder %s101, %s102
      %p116 = scmp.eq.s32.totalorder %s42, 1
      %p117 = por %p115, %p116
      %p119 = scmp.ne.s32.totalorder %s102, %s118
      %p120 = scmp.eq.s32.totalorder %s42, 0
      %p121 = por %p119, %p120
      %s123 = sadd.s32 %s122, 1
      %p126 = scmp.eq.s32.totalorder %s36, 1
      %p127 = scmp.ne.s32.totalorder %s122, %s124
      %p128 = scmp.eq.s32.totalorder %s36, 0
      %p129 = por %p127, %p128
      %p130 = scmp.ne.s32.totalorder %s122, %s124
      %p131 = scmp.eq.s32.totalorder %s41, 1
      %p132 = por %p130, %p131
      %p133 = scmp.ne.s32.totalorder %s124, %s125
      %p134 = scmp.eq.s32.totalorder %s41, 0
      %p135 = por %p133, %p134
      %p136 = scmp.ne.s32.totalorder %s124, %s125
      %p137 = scmp.eq.s32.totalorder %s42, 1
      %p138 = por %p136, %p137
      %p140 = scmp.ne.s32.totalorder %s125, %s139
      %p141 = scmp.eq.s32.totalorder %s42, 0
      %p142 = por %p140, %p141
      %s144 = sadd.s32 %s143, 1
      %p147 = scmp.eq.s32.totalorder %s36, 1
      %p148 = scmp.ne.s32.totalorder %s143, %s145
      %p149 = scmp.eq.s32.totalorder %s36, 0
      %p150 = por %p148, %p149
      %p151 = scmp.ne.s32.totalorder %s143, %s145
      %p152 = scmp.eq.s32.totalorder %s41, 1
      %p153 = por %p151, %p152
      %p154 = scmp.ne.s32.totalorder %s145, %s146
      %p155 = scmp.eq.s32.totalorder %s41, 0
      %p156 = por %p154, %p155
      %p157 = scmp.ne.s32.totalorder %s145, %s146
      %p158 = scmp.eq.s32.totalorder %s42, 1
      %p159 = por %p157, %p158
      %p161 = scmp.ne.s32.totalorder %s146, %s160
      %p162 = scmp.eq.s32.totalorder %s42, 0
      %p163 = por %p161, %p162
      %s165 = sadd.s32 %s164, 1
      %p168 = scmp.eq.s32.totalorder %s36, 1
      %p169 = scmp.ne.s32.totalorder %s164, %s166
      %p170 = scmp.eq.s32.totalorder %s36, 0
      %p171 = por %p169, %p170
      %p172 = scmp.ne.s32.totalorder %s164, %s166
      %p173 = scmp.eq.s32.totalorder %s41, 1
      %p174 = por %p172, %p173
      %p175 = scmp.ne.s32.totalorder %s166, %s167
      %p176 = scmp.eq.s32.totalorder %s41, 0
      %p177 = por %p175, %p176
      %p178 = scmp.ne.s32.totalorder %s166, %s167
      %p179 = scmp.eq.s32.totalorder %s42, 1
      %p180 = por %p178, %p179
      %p182 = scmp.ne.s32.totalorder %s167, %s181
      %p183 = scmp.eq.s32.totalorder %s42, 0
      %p184 = por %p182, %p183
      %s186 = sadd.s32 %s185, 1
      %p189 = scmp.eq.s32.totalorder %s36, 1
      %p190 = scmp.ne.s32.totalorder %s185, %s187
      %p191 = scmp.eq.s32.totalorder %s36, 0
      %p192 = por %p190, %p191
      %p193 = scmp.ne.s32.totalorder %s185, %s187
      %p194 = scmp.eq.s32.totalorder %s41, 1
      %p195 = por %p193, %p194
      %p196 = scmp.ne.s32.totalorder %s187, %s188
      %p197 = scmp.eq.s32.totalorder %s41, 0
      %p198 = por %p196, %p197
      %p199 = scmp.ne.s32.totalorder %s187, %s188
      %p200 = scmp.eq.s32.totalorder %s42, 1
      %p201 = por %p199, %p200
      %p203 = scmp.ne.s32.totalorder %s188, %s202
      %p204 = scmp.eq.s32.totalorder %s42, 0
      %p205 = por %p203, %p204
      %s207 = sadd.s32 %s206, 1
      %p210 = scmp.eq.s32.totalorder %s36, 1
      %p211 = scmp.ne.s32.totalorder %s206, %s208
      %p212 = scmp.eq.s32.totalorder %s36, 0
      %p213 = por %p211, %p212
      %p214 = scmp.ne.s32.totalorder %s206, %s208
      %p215 = scmp.eq.s32.totalorder %s41, 1
      %p216 = por %p214, %p215
      %p217 = scmp.ne.s32.totalorder %s208, %s209
      %p218 = scmp.eq.s32.totalorder %s41, 0
      %p219 = por %p217, %p218
      %p220 = scmp.ne.s32.totalorder %s208, %s209
      %p221 = scmp.eq.s32.totalorder %s42, 1
      %p222 = por %p220, %p221
      %p224 = scmp.ne.s32.totalorder %s209, %s223
      %p225 = scmp.eq.s32.totalorder %s42, 0
      %p226 = por %p224, %p225
      %s228 = sadd.s32 %s227, 1
      %p231 = scmp.eq.s32.totalorder %s36, 1
      %p232 = scmp.ne.s32.totalorder %s227, %s229
      %p233 = scmp.eq.s32.totalorder %s36, 0
      %p234 = por %p232, %p233
      %p235 = scmp.ne.s32.totalorder %s227, %s229
      %p236 = scmp.eq.s32.totalorder %s41, 1
      %p237 = por %p235, %p236
      %p238 = scmp.ne.s32.totalorder %s229, %s230
      %p239 = scmp.eq.s32.totalorder %s41, 0
      %p240 = por %p238, %p239
      %p241 = scmp.ne.s32.totalorder %s229, %s230
      %p242 = scmp.eq.s32.totalorder %s42, 1
      %p243 = por %p241, %p242
      %p245 = scmp.ne.s32.totalorder %s230, %s244
      %p246 = scmp.eq.s32.totalorder %s42, 0
      %p247 = por %p245, %p246
      %s249 = sadd.s32 %s248, 1
      %p252 = scmp.eq.s32.totalorder %s36, 1
      %p253 = scmp.ne.s32.totalorder %s248, %s250
      %p254 = scmp.eq.s32.totalorder %s36, 0
      %p255 = por %p253, %p254
      %p256 = scmp.ne.s32.totalorder %s248, %s250
      %p257 = scmp.eq.s32.totalorder %s41, 1
      %p258 = por %p256, %p257
      %p259 = scmp.ne.s32.totalorder %s250, %s251
      %p260 = scmp.eq.s32.totalorder %s41, 0
      %p261 = por %p259, %p260
      %p262 = scmp.ne.s32.totalorder %s250, %s251
      %p263 = scmp.eq.s32.totalorder %s42, 1
      %p264 = por %p262, %p263
      %p266 = scmp.ne.s32.totalorder %s251, %s265
      %p267 = scmp.eq.s32.totalorder %s42, 0
      %p268 = por %p266, %p267
      %s270 = sadd.s32 %s269, 1
      %p273 = scmp.eq.s32.totalorder %s36, 1
      %p274 = scmp.ne.s32.totalorder %s269, %s271
      %p275 = scmp.eq.s32.totalorder %s36, 0
      %p276 = por %p274, %p275
      %p277 = scmp.ne.s32.totalorder %s269, %s271
      %p278 = scmp.eq.s32.totalorder %s41, 1
      %p279 = por %p277, %p278
      %p280 = scmp.ne.s32.totalorder %s271, %s272
      %p281 = scmp.eq.s32.totalorder %s41, 0
      %p282 = por %p280, %p281
      %p283 = scmp.ne.s32.totalorder %s271, %s272
      %p284 = scmp.eq.s32.totalorder %s42, 1
      %p285 = por %p283, %p284
      %p287 = scmp.ne.s32.totalorder %s272, %s286
      %p288 = scmp.eq.s32.totalorder %s42, 0
      %p289 = por %p287, %p288
      %s291 = sadd.s32 %s290, 1
      %p294 = scmp.eq.s32.totalorder %s36, 1
      %p295 = scmp.ne.s32.totalorder %s290, %s292
      %p296 = scmp.eq.s32.totalorder %s36, 0
      %p297 = por %p295, %p296
      %p298 = scmp.ne.s32.totalorder %s290, %s292
      %p299 = scmp.eq.s32.totalorder %s41, 1
      %p300 = por %p298, %p299
      %p301 = scmp.ne.s32.totalorder %s292, %s293
      %p302 = scmp.eq.s32.totalorder %s41, 0
      %p303 = por %p301, %p302
      %p304 = scmp.ne.s32.totalorder %s292, %s293
      %p305 = scmp.eq.s32.totalorder %s42, 1
      %p306 = por %p304, %p305
      %p308 = scmp.ne.s32.totalorder %s293, %s307
      %p309 = scmp.eq.s32.totalorder %s42, 0
      %p310 = por %p308, %p309
      %s312 = sadd.s32 %s311, 1
      %p315 = scmp.eq.s32.totalorder %s36, 1
      %p316 = scmp.ne.s32.totalorder %s311, %s313
      %p317 = scmp.eq.s32.totalorder %s36, 0
      %p318 = por %p316, %p317
      %p319 = scmp.ne.s32.totalorder %s311, %s313
      %p320 = scmp.eq.s32.totalorder %s41, 1
      %p321 = por %p319, %p320
      %p322 = scmp.ne.s32.totalorder %s313, %s314
      %p323 = scmp.eq.s32.totalorder %s41, 0
      %p324 = por %p322, %p323
      %p325 = scmp.ne.s32.totalorder %s313, %s314
      %p326 = scmp.eq.s32.totalorder %s42, 1
      %p327 = por %p325, %p326
      %p329 = scmp.ne.s32.totalorder %s314, %s328
      %p330 = scmp.eq.s32.totalorder %s42, 0
      %p331 = por %p329, %p330
      %s333 = sadd.s32 %s332, 1
      %p336 = scmp.eq.s32.totalorder %s36, 1
      %p337 = scmp.ne.s32.totalorder %s332, %s334
      %p338 = scmp.eq.s32.totalorder %s36, 0
      %p339 = por %p337, %p338
      %p340 = scmp.ne.s32.totalorder %s332, %s334
      %p341 = scmp.eq.s32.totalorder %s41, 1
      %p342 = por %p340, %p341
      %p343 = scmp.ne.s32.totalorder %s334, %s335
      %p344 = scmp.eq.s32.totalorder %s41, 0
      %p345 = por %p343, %p344
      %p346 = scmp.ne.s32.totalorder %s334, %s335
      %p347 = scmp.eq.s32.totalorder %s42, 1
      %p348 = por %p346, %p347
      %p350 = scmp.ne.s32.totalorder %s335, %s349
      %p351 = scmp.eq.s32.totalorder %s42, 0
      %p352 = por %p350, %p351
      %s354 = sadd.s32 %s353, 1
      %p357 = scmp.eq.s32.totalorder %s36, 1
      %p358 = scmp.ne.s32.totalorder %s353, %s355
      %p359 = scmp.eq.s32.totalorder %s36, 0
      %p360 = por %p358, %p359
      %p361 = scmp.ne.s32.totalorder %s353, %s355
      %p362 = scmp.eq.s32.totalorder %s41, 1
      %p363 = por %p361, %p362
      %p364 = scmp.ne.s32.totalorder %s355, %s356
      %p365 = scmp.eq.s32.totalorder %s41, 0
      %p366 = por %p364, %p365
      %p367 = scmp.ne.s32.totalorder %s355, %s356
      %p368 = scmp.eq.s32.totalorder %s42, 1
      %p369 = por %p367, %p368
      %p371 = scmp.ne.s32.totalorder %s356, %s370
      %p372 = scmp.eq.s32.totalorder %s42, 0
      %p373 = por %p371, %p372
      %s375 = sadd.s32 %s374, 1
      %p378 = scmp.eq.s32.totalorder %s36, 1
      %p379 = scmp.ne.s32.totalorder %s374, %s376
      %p380 = scmp.eq.s32.totalorder %s36, 0
      %p381 = por %p379, %p380
      %p382 = scmp.ne.s32.totalorder %s374, %s376
      %p383 = scmp.eq.s32.totalorder %s41, 1
      %p384 = por %p382, %p383
      %p385 = scmp.ne.s32.totalorder %s376, %s377
      %p386 = scmp.eq.s32.totalorder %s41, 0
      %p387 = por %p385, %p386
      %p388 = scmp.ne.s32.totalorder %s376, %s377
      %p389 = scmp.eq.s32.totalorder %s42, 1
      %p390 = por %p388, %p389
      %p392 = scmp.ne.s32.totalorder %s377, %s391
      %p393 = scmp.eq.s32.totalorder %s42, 0
      %p394 = por %p392, %p393
      %s396 = sadd.s32 %s395, 1
      %p399 = scmp.eq.s32.totalorder %s36, 1
      %p400 = scmp.ne.s32.totalorder %s395, %s397
      %p401 = scmp.eq.s32.totalorder %s36, 0
      %p402 = por %p400, %p401
      %p403 = scmp.ne.s32.totalorder %s395, %s397
      %p404 = scmp.eq.s32.totalorder %s41, 1
      %p405 = por %p403, %p404
      %p406 = scmp.ne.s32.totalorder %s397, %s398
      %p407 = scmp.eq.s32.totalorder %s41, 0
      %p408 = por %p406, %p407
      %p409 = scmp.ne.s32.totalorder %s397, %s398
      %p410 = scmp.eq.s32.totalorder %s42, 1
      %p411 = por %p409, %p410
      %p413 = scmp.ne.s32.totalorder %s398, %s412
      %p414 = scmp.eq.s32.totalorder %s42, 0
      %p415 = por %p413, %p414
      %s417 = sadd.s32 %s416, 1
      %p420 = scmp.eq.s32.totalorder %s36, 1
      %p421 = scmp.ne.s32.totalorder %s416, %s418
      %p422 = scmp.eq.s32.totalorder %s36, 0
      %p423 = por %p421, %p422
      %p424 = scmp.ne.s32.totalorder %s416, %s418
      %p425 = scmp.eq.s32.totalorder %s41, 1
      %p426 = por %p424, %p425
      %p427 = scmp.ne.s32.totalorder %s418, %s419
      %p428 = scmp.eq.s32.totalorder %s41, 0
      %p429 = por %p427, %p428
      %p430 = scmp.ne.s32.totalorder %s418, %s419
      %p431 = scmp.eq.s32.totalorder %s42, 1
      %p432 = por %p430, %p431
      %p434 = scmp.ne.s32.totalorder %s419, %s433
      %p435 = scmp.eq.s32.totalorder %s42, 0
      %p436 = por %p434, %p435
      %s438 = sadd.s32 %s437, 1
      %p441 = scmp.eq.s32.totalorder %s36, 1
      %p442 = scmp.ne.s32.totalorder %s437, %s439
      %p443 = scmp.eq.s32.totalorder %s36, 0
      %p444 = por %p442, %p443
      %p445 = scmp.ne.s32.totalorder %s437, %s439
      %p446 = scmp.eq.s32.totalorder %s41, 1
      %p447 = por %p445, %p446
      %p448 = scmp.ne.s32.totalorder %s439, %s440
      %p449 = scmp.eq.s32.totalorder %s41, 0
      %p450 = por %p448, %p449
      %p451 = scmp.ne.s32.totalorder %s439, %s440
      %p452 = scmp.eq.s32.totalorder %s42, 1
      %p453 = por %p451, %p452
      %p455 = scmp.ne.s32.totalorder %s440, %s454
      %p456 = scmp.eq.s32.totalorder %s42, 0
      %p457 = por %p455, %p456
      %s458 = ssub.s32 %s36, %s43
      %p459 = scmp.eq.s32.totalorder %s458, 0
      %s461 = sadd.s32 %s460, 1
      %s462 = scalar_select %p459, %s460, %s461
      %p465 = pneg %p459
      %p466 = scmp.eq.s32.totalorder %s36, 1
      %p467 = por %p465, %p466
      %p468 = scmp.ne.s32.totalorder %s460, %s463
      %p469 = scmp.eq.s32.totalorder %s36, 0
      %p470 = por %p468, %p469
      %p471 = scmp.ne.s32.totalorder %s460, %s463
      %p472 = scmp.eq.s32.totalorder %s41, 1
      %p473 = por %p471, %p472
      %p474 = scmp.ne.s32.totalorder %s463, %s464
      %p475 = scmp.eq.s32.totalorder %s41, 0
      %p476 = por %p474, %p475
      %p477 = scmp.ne.s32.totalorder %s463, %s464
      %p478 = scmp.eq.s32.totalorder %s42, 1
      %p479 = por %p477, %p478
      %p481 = scmp.ne.s32.totalorder %s464, %s480
      %p482 = scmp.eq.s32.totalorder %s42, 0
      %p483 = por %p481, %p482
      %p484 = scmp.le.s32.totalorder 1, %s36
      %p485 = scmp.lt.s32.totalorder %s36, 3
      %p486 = pnand %p484, %p485
      %p487 = pneg %p486
      // Predicated region
      $region9: #{tpu_custom_call.1} parent=5 // pred_check
        _
      $region10: #{tpu_custom_call.1} parent=5 // pred_check_branch
        %489 = sbr.rel (%p486) target = $region12
      $region11: #{tpu_custom_call.1} parent=5 // pred_region
        %s490 = ssub.s32 %s36, 1
        // Predicated region
        $region13: #{tpu_custom_call.1} parent=11 // pred_check
          %p491 = pneg %p135
        $region14: #{tpu_custom_call.1} parent=11 // pred_check_branch
          %493 = sbr.rel (%p491) target = $region16
        $region15: #{tpu_custom_call.1} parent=11 // pred_region
          _
        $region16: #{tpu_custom_call.1} parent=11 // pred_fallthru
          _
        // Predicated region
        $region17: #{tpu_custom_call.1} parent=11 // pred_check
          %p494 = pneg %p156
        $region18: #{tpu_custom_call.1} parent=11 // pred_check_branch
          %496 = sbr.rel (%p494) target = $region20
        $region19: #{tpu_custom_call.1} parent=11 // pred_region
          %s498 = ssub.s32 16, 16
          %499 = vsyncadd [#allocation6], %s498
          %s501 = sshll.u32 [#allocation5], 4
          %s502 = int_to_ptr.vmem [resolvable:$true] %s501
          %504 = dma.hbm_to_vmem [thread:$0]  %s4, 16, %s502, [#allocation6]
        $region20: #{tpu_custom_call.1} parent=11 // pred_fallthru
          _
        // Predicated region
        $region21: #{tpu_custom_call.1} parent=11 // pred_check
          %p505 = pneg %p177
        $region22: #{tpu_custom_call.1} parent=11 // pred_check_branch
          %507 = sbr.rel (%p505) target = $region24
        $region23: #{tpu_custom_call.1} parent=11 // pred_region
          %s509 = ssub.s32 256, 256
          %510 = vsyncadd [#allocation6], %s509
          %s511 = sshll.u32 [#allocation7], 4
          %s512 = int_to_ptr.vmem [resolvable:$true] %s511
          %517 = dma.hbm_to_vmem [thread:$0]  %s5, 256, %s512, [#allocation6], 64, 64, 4
        $region24: #{tpu_custom_call.1} parent=11 // pred_fallthru
          _
        // Predicated region
        $region25: #{tpu_custom_call.1} parent=11 // pred_check
          %p518 = pneg %p198
        $region26: #{tpu_custom_call.1} parent=11 // pred_check_branch
          %520 = sbr.rel (%p518) target = $region28
        $region27: #{tpu_custom_call.1} parent=11 // pred_region
          %s522 = ssub.s32 16, 16
          %523 = vsyncadd [#allocation9], %s522
          %s525 = sshll.u32 [#allocation8], 4
          %s526 = int_to_ptr.vmem [resolvable:$true] %s525
          %528 = dma.hbm_to_vmem [thread:$0]  %s6, 16, %s526, [#allocation9]
        $region28: #{tpu_custom_call.1} parent=11 // pred_fallthru
          _
        // Predicated region
        $region29: #{tpu_custom_call.1} parent=11 // pred_check
          %p529 = pneg %p219
        $region30: #{tpu_custom_call.1} parent=11 // pred_check_branch
          %531 = sbr.rel (%p529) target = $region32
        $region31: #{tpu_custom_call.1} parent=11 // pred_region
          %s533 = ssub.s32 256, 256
          %534 = vsyncadd [#allocation9], %s533
          %s535 = sshll.u32 [#allocation10], 4
          %s536 = int_to_ptr.vmem [resolvable:$true] %s535
          %541 = dma.hbm_to_vmem [thread:$0]  %s7, 256, %s536, [#allocation9], 64, 64, 4
        $region32: #{tpu_custom_call.1} parent=11 // pred_fallthru
          _
        // Predicated region
        $region33: #{tpu_custom_call.1} parent=11 // pred_check
          %p542 = pneg %p240
        $region34: #{tpu_custom_call.1} parent=11 // pred_check_branch
          %544 = sbr.rel (%p542) target = $region36
        $region35: #{tpu_custom_call.1} parent=11 // pred_region
          %s546 = ssub.s32 16, 16
          %547 = vsyncadd [#allocation12], %s546
          %s549 = sshll.u32 [#allocation11], 4
          %s550 = int_to_ptr.vmem [resolvable:$true] %s549
          %552 = dma.hbm_to_vmem [thread:$0]  %s8, 16, %s550, [#allocation12]
        $region36: #{tpu_custom_call.1} parent=11 // pred_fallthru
          _
        // Predicated region
        $region37: #{tpu_custom_call.1} parent=11 // pred_check
          %p553 = pneg %p261
        $region38: #{tpu_custom_call.1} parent=11 // pred_check_branch
          %555 = sbr.rel (%p553) target = $region40
        $region39: #{tpu_custom_call.1} parent=11 // pred_region
          _
        $region40: #{tpu_custom_call.1} parent=11 // pred_fallthru
          _
        // Predicated region
        $region41: #{tpu_custom_call.1} parent=11 // pred_check
          %p556 = pneg %p282
        $region42: #{tpu_custom_call.1} parent=11 // pred_check_branch
          %558 = sbr.rel (%p556) target = $region44
        $region43: #{tpu_custom_call.1} parent=11 // pred_region
          %s560 = ssub.s32 16, 16
          %561 = vsyncadd [#allocation12], %s560
          %s563 = sshll.u32 [#allocation13], 4
          %s564 = int_to_ptr.vmem [resolvable:$true] %s563
          %566 = dma.hbm_to_vmem [thread:$0]  %s10, 16, %s564, [#allocation12]
        $region44: #{tpu_custom_call.1} parent=11 // pred_fallthru
          _
        // Predicated region
        $region45: #{tpu_custom_call.1} parent=11 // pred_check
          %p567 = pneg %p303
        $region46: #{tpu_custom_call.1} parent=11 // pred_check_branch
          %569 = sbr.rel (%p567) target = $region48
        $region47: #{tpu_custom_call.1} parent=11 // pred_region
          %s571 = ssub.s32 256, 256
          %572 = vsyncadd [#allocation15], %s571
          %s573 = sshll.u32 [#allocation14], 4
          %s574 = int_to_ptr.vmem [resolvable:$true] %s573
          %579 = dma.hbm_to_vmem [thread:$0]  %s11, 256, %s574, [#allocation15], 64, 64, 4
        $region48: #{tpu_custom_call.1} parent=11 // pred_fallthru
          _
        // Predicated region
        $region49: #{tpu_custom_call.1} parent=11 // pred_check
          %p580 = pneg %p324
        $region50: #{tpu_custom_call.1} parent=11 // pred_check_branch
          %582 = sbr.rel (%p580) target = $region52
        $region51: #{tpu_custom_call.1} parent=11 // pred_region
          %s584 = ssub.s32 16, 16
          %585 = vsyncadd [#allocation15], %s584
          %s587 = sshll.u32 [#allocation16], 4
          %s588 = int_to_ptr.vmem [resolvable:$true] %s587
          %590 = dma.hbm_to_vmem [thread:$0]  %s12, 16, %s588, [#allocation15]
        $region52: #{tpu_custom_call.1} parent=11 // pred_fallthru
          _
        // Predicated region
        $region53: #{tpu_custom_call.1} parent=11 // pred_check
          %p591 = pneg %p345
        $region54: #{tpu_custom_call.1} parent=11 // pred_check_branch
          %593 = sbr.rel (%p591) target = $region56
        $region55: #{tpu_custom_call.1} parent=11 // pred_region
          %s595 = ssub.s32 16, 16
          %596 = vsyncadd [#allocation18], %s595
          %s598 = sshll.u32 [#allocation17], 4
          %s599 = int_to_ptr.vmem [resolvable:$true] %s598
          %601 = dma.hbm_to_vmem [thread:$0]  %s13, 16, %s599, [#allocation18]
        $region56: #{tpu_custom_call.1} parent=11 // pred_fallthru
          _
        // Predicated region
        $region57: #{tpu_custom_call.1} parent=11 // pred_check
          %p602 = pneg %p366
        $region58: #{tpu_custom_call.1} parent=11 // pred_check_branch
          %604 = sbr.rel (%p602) target = $region60
        $region59: #{tpu_custom_call.1} parent=11 // pred_region
          _
        $region60: #{tpu_custom_call.1} parent=11 // pred_fallthru
          _
        // Predicated region
        $region61: #{tpu_custom_call.1} parent=11 // pred_check
          %p605 = pneg %p387
        $region62: #{tpu_custom_call.1} parent=11 // pred_check_branch
          %607 = sbr.rel (%p605) target = $region64
        $region63: #{tpu_custom_call.1} parent=11 // pred_region
          _
        $region64: #{tpu_custom_call.1} parent=11 // pred_fallthru
          _
        // Predicated region
        $region65: #{tpu_custom_call.1} parent=11 // pred_check
          %p608 = pneg %p408
        $region66: #{tpu_custom_call.1} parent=11 // pred_check_branch
          %610 = sbr.rel (%p608) target = $region68
        $region67: #{tpu_custom_call.1} parent=11 // pred_region
          _
        $region68: #{tpu_custom_call.1} parent=11 // pred_fallthru
          _
        // Predicated region
        $region69: #{tpu_custom_call.1} parent=11 // pred_check
          %p611 = pneg %p429
        $region70: #{tpu_custom_call.1} parent=11 // pred_check_branch
          %613 = sbr.rel (%p611) target = $region72
        $region71: #{tpu_custom_call.1} parent=11 // pred_region
          _
        $region72: #{tpu_custom_call.1} parent=11 // pred_fallthru
          _
        // Predicated region
        $region73: #{tpu_custom_call.1} parent=11 // pred_check
          %p614 = pneg %p450
        $region74: #{tpu_custom_call.1} parent=11 // pred_check_branch
          %616 = sbr.rel (%p614) target = $region76
        $region75: #{tpu_custom_call.1} parent=11 // pred_region
          _
        $region76: #{tpu_custom_call.1} parent=11 // pred_fallthru
          _
      $region12: #{tpu_custom_call.1} parent=5 // pred_fallthru
        _
      %p617 = scmp.lt.s32.totalorder %s36, 2
      // Predicated region
      $region77: #{tpu_custom_call.1} parent=5 // pred_check
        %p618 = pneg %p617
      $region78: #{tpu_custom_call.1} parent=5 // pred_check_branch
        %620 = sbr.rel (%p618) target = $region80
      $region79: #{tpu_custom_call.1} parent=5 // pred_region
        // Predicated region
        $region81: #{tpu_custom_call.1} parent=79 // pred_check
          %p621 = pneg %p56
        $region82: #{tpu_custom_call.1} parent=79 // pred_check_branch
          %623 = sbr.rel (%p621) target = $region84
        $region83: #{tpu_custom_call.1} parent=79 // pred_region
          %p624 = scmp.lt.s32.totalorder %s36, 1
          %s625 = scalar_select %p624, %s36, 1
          %s626 = smul.addr %s625, 8
          %s627 = scalar_lea.vmem %s0, %s626
        $region84: #{tpu_custom_call.1} parent=79 // pred_fallthru
          _
        // Predicated region
        $region85: #{tpu_custom_call.1} parent=79 // pred_check
          %p628 = pneg %p82
        $region86: #{tpu_custom_call.1} parent=79 // pred_check_branch
          %630 = sbr.rel (%p628) target = $region88
        $region87: #{tpu_custom_call.1} parent=79 // pred_region
          %s631 = sand.u32 %s72, 1
          %s632 = scalar_lea.sflag [#allocation3], %s631
          %s633 = sand.u32 %s72, 1
          %s634 = smul.addr %s633, 8
          %s635 = scalar_lea.vmem [#allocation2], %s634
          %s637 = ssub.s32 128, 128
          %638 = vsyncadd %s632, %s637
          %s639 = smul.addr %s36, 128
          %s640 = scalar_lea.hbm %s1, %s639
          %s642 = sshll.u32 %s635, 4
          %s643 = int_to_ptr.vmem [resolvable:$true] %s642
          %645 = dma.hbm_to_vmem [thread:$0]  %s640, 128, %s643, %s632
        $region88: #{tpu_custom_call.1} parent=79 // pred_fallthru
          _
        // Predicated region
        $region89: #{tpu_custom_call.1} parent=79 // pred_check
          %p646 = pneg %p108
        $region90: #{tpu_custom_call.1} parent=79 // pred_check_branch
          %648 = sbr.rel (%p646) target = $region92
        $region91: #{tpu_custom_call.1} parent=79 // pred_region
          %p649 = scmp.lt.s32.totalorder %s36, 1
          %s650 = scalar_select %p649, %s36, 1
          %s651 = smul.addr %s650, 2
          %s652 = smul.addr %s651, 8
          %s653 = scalar_lea.vmem %s2, %s652
        $region92: #{tpu_custom_call.1} parent=79 // pred_fallthru
          _
      $region80: #{tpu_custom_call.1} parent=5 // pred_fallthru
        _
      %p654 = scmp.le.s32.totalorder 1, %s36
      %p655 = scmp.lt.s32.totalorder %s36, 3
      %p656 = pnand %p654, %p655
      %p657 = pneg %p656
      // Predicated region
      $region93: #{tpu_custom_call.1} parent=5 // pred_check
        _
      $region94: #{tpu_custom_call.1} parent=5 // pred_check_branch
        %659 = sbr.rel (%p656) target = $region96
      $region95: #{tpu_custom_call.1} parent=5 // pred_region
        %s660 = ssub.s32 %s36, 1
        %s661 = sand.u32 %s75, 1
        %s662 = scalar_lea.sflag [#allocation3], %s661
        %s663 = sand.u32 %s75, 1
        %s664 = smul.addr %s663, 8
        %s665 = scalar_lea.vmem [#allocation2], %s664
        // Predicated region
        $region97: #{tpu_custom_call.1} parent=95 // pred_check
          %p666 = pneg %p88
        $region98: #{tpu_custom_call.1} parent=95 // pred_check_branch
          %668 = sbr.rel (%p666) target = $region100
        $region99: #{tpu_custom_call.1} parent=95 // pred_region
          %669 = dma.done %s662, 128
        $region100: #{tpu_custom_call.1} parent=95 // pred_fallthru
          _
        // Predicated region
        $region101: #{tpu_custom_call.1} parent=95 // pred_check
          %p670 = pneg %p156
        $region102: #{tpu_custom_call.1} parent=95 // pred_check_branch
          %672 = sbr.rel (%p670) target = $region104
        $region103: #{tpu_custom_call.1} parent=95 // pred_region
          %673 = dma.done [#allocation6], 16
        $region104: #{tpu_custom_call.1} parent=95 // pred_fallthru
          _
        // Predicated region
        $region105: #{tpu_custom_call.1} parent=95 // pred_check
          %p674 = pneg %p177
        $region106: #{tpu_custom_call.1} parent=95 // pred_check_branch
          %676 = sbr.rel (%p674) target = $region108
        $region107: #{tpu_custom_call.1} parent=95 // pred_region
          %677 = dma.done [#allocation6], 256
        $region108: #{tpu_custom_call.1} parent=95 // pred_fallthru
          _
        // Predicated region
        $region109: #{tpu_custom_call.1} parent=95 // pred_check
          %p678 = pneg %p198
        $region110: #{tpu_custom_call.1} parent=95 // pred_check_branch
          %680 = sbr.rel (%p678) target = $region112
        $region111: #{tpu_custom_call.1} parent=95 // pred_region
          %681 = dma.done [#allocation9], 16
        $region112: #{tpu_custom_call.1} parent=95 // pred_fallthru
          _
        // Predicated region
        $region113: #{tpu_custom_call.1} parent=95 // pred_check
          %p682 = pneg %p219
        $region114: #{tpu_custom_call.1} parent=95 // pred_check_branch
          %684 = sbr.rel (%p682) target = $region116
        $region115: #{tpu_custom_call.1} parent=95 // pred_region
          %685 = dma.done [#allocation9], 256
        $region116: #{tpu_custom_call.1} parent=95 // pred_fallthru
          _
        // Predicated region
        $region117: #{tpu_custom_call.1} parent=95 // pred_check
          %p686 = pneg %p240
        $region118: #{tpu_custom_call.1} parent=95 // pred_check_branch
          %688 = sbr.rel (%p686) target = $region120
        $region119: #{tpu_custom_call.1} parent=95 // pred_region
          %689 = dma.done [#allocation12], 16
        $region120: #{tpu_custom_call.1} parent=95 // pred_fallthru
          _
        // Predicated region
        $region121: #{tpu_custom_call.1} parent=95 // pred_check
          %p690 = pneg %p282
        $region122: #{tpu_custom_call.1} parent=95 // pred_check_branch
          %692 = sbr.rel (%p690) target = $region124
        $region123: #{tpu_custom_call.1} parent=95 // pred_region
          %693 = dma.done [#allocation12], 16
        $region124: #{tpu_custom_call.1} parent=95 // pred_fallthru
          _
        // Predicated region
        $region125: #{tpu_custom_call.1} parent=95 // pred_check
          %p694 = pneg %p303
        $region126: #{tpu_custom_call.1} parent=95 // pred_check_branch
          %696 = sbr.rel (%p694) target = $region128
        $region127: #{tpu_custom_call.1} parent=95 // pred_region
          %697 = dma.done [#allocation15], 256
        $region128: #{tpu_custom_call.1} parent=95 // pred_fallthru
          _
        // Predicated region
        $region129: #{tpu_custom_call.1} parent=95 // pred_check
          %p698 = pneg %p324
        $region130: #{tpu_custom_call.1} parent=95 // pred_check_branch
          %700 = sbr.rel (%p698) target = $region132
        $region131: #{tpu_custom_call.1} parent=95 // pred_region
          %701 = dma.done [#allocation15], 16
        $region132: #{tpu_custom_call.1} parent=95 // pred_fallthru
          _
        // Predicated region
        $region133: #{tpu_custom_call.1} parent=95 // pred_check
          %p702 = pneg %p345
        $region134: #{tpu_custom_call.1} parent=95 // pred_check_branch
          %704 = sbr.rel (%p702) target = $region136
        $region135: #{tpu_custom_call.1} parent=95 // pred_region
          %705 = dma.done [#allocation18], 16
        $region136: #{tpu_custom_call.1} parent=95 // pred_fallthru
          _
        %p706 = scmp.lt.s32.totalorder %s41, 1
        %s707 = scalar_select %p706, %s41, 1
        %s708 = smul.addr %s707, 8
        %s709 = scalar_lea.vmem %s0, %s708
        %p710 = pneg %p62
        %p711 = pneg %p59
        %s712 = sand.u32 %s75, 1
        %s713 = scalar_lea.sflag [#allocation3], %s712
        %s714 = sand.u32 %s75, 1
        %s715 = smul.addr %s714, 8
        %s716 = scalar_lea.vmem [#allocation2], %s715
        %p717 = pneg %p88
        %p718 = pneg %p85
        %p719 = scmp.lt.s32.totalorder %s41, 1
        %s720 = scalar_select %p719, %s41, 1
        %s721 = smul.addr %s720, 2
        %s722 = smul.addr %s721, 8
        %s723 = scalar_lea.vmem %s2, %s722
        %p724 = pneg %p114
        %p725 = pneg %p111
        %p726 = pneg %p135
        %p727 = pneg %p132
        %p728 = pneg %p156
        %p729 = pneg %p153
        %p730 = pneg %p177
        %p731 = pneg %p174
        %p732 = pneg %p198
        %p733 = pneg %p195
        %p734 = pneg %p219
        %p735 = pneg %p216
        %p736 = pneg %p240
        %p737 = pneg %p237
        %p738 = pneg %p261
        %p739 = pneg %p258
        %p740 = pneg %p282
        %p741 = pneg %p279
        %p742 = pneg %p303
        %p743 = pneg %p300
        %p744 = pneg %p324
        %p745 = pneg %p321
        %p746 = pneg %p345
        %p747 = pneg %p342
        %p748 = pneg %p366
        %p749 = pneg %p363
        %p750 = pneg %p387
        %p751 = pneg %p384
        %p752 = pneg %p408
        %p753 = pneg %p405
        %p754 = pneg %p429
        %p755 = pneg %p426
        %p756 = pneg %p450
        %p757 = pneg %p447
        %p758 = pneg %p476
        %p759 = pneg %p473
        %s760 = sand.u32 %s463, 1
        %s761 = scalar_lea.sflag [#allocation4], %s760
        %s762 = sand.u32 %s463, 1
        %s763 = smul.addr %s762, 8
        %s764 = scalar_lea.vmem [#allocation19], %s763
        %p765 = scmp.lt.s32.totalorder %s41, 1
        %s766 = scalar_select %p765, %s41, 1
        %s767 = smul.addr %s766, 8
        %s768 = scalar_lea.vmem %s0, %s767
        %p769 = scmp.lt.s32.totalorder %s41, 1
        %s770 = scalar_select %p769, %s41, 1
        %s771 = smul.addr %s770, 2
        %s772 = smul.addr %s771, 8
        %s773 = scalar_lea.vmem %s2, %s772
        %v775 = vld [vmem:[%s768] sm:$0xff]
        %v776 = vld [vmem:[%s665] sm:$0xff]
        %v777 = vld [vmem:[%s773] sm:$0xff]
        %v778 = vld [vmem:[%s773 + $0x8] sm:$0xff]
        %v779 = vld [vmem:[%s3] sm:$0x1]
        %v780 = vld [vmem:[#allocation5] sm:$0x1]
        %vm781 = vcmask 261120
        %v782 = vsel %vm781, %v775, 0.0
        %783 = vadd.xlane.f32.xlu0 %v782
        %v784 = vpop.xlane.xlu0 %783
        %v785 = vrcp.pop 32.0
        %v786 = vmul.f32 %v784, %v785
        %v787 = vsub.f32 %v775, %v786
        %v788 = vmul.f32 %v787, %v787
        %v789 = vsel %vm781, %v788, 0.0
        %790 = vadd.xlane.f32.xlu0 %v789
        %v791 = vpop.xlane.xlu0 %790
        %v792 = vmul.f32 %v791, %v785
        %v793 = vadd.f32 %v792, 1e-05
        %v794 = vrsqrt.pop %v793
        %v795 = vmul.f32 %v787, %v794
        %v797 = vlaneseq
        %v798 = vshrl.u32 %v797, 7
        %v799 = vsub.s32 0, %v798
        %v800 = vrot.slane %v779, %v799
        %v802 = vmul.f32 %v795, %v800
        %v804 = vlaneseq
        %v805 = vshrl.u32 %v804, 7
        %v806 = vsub.s32 0, %v805
        %v807 = vrot.slane %v780, %v806
        %v809 = vadd.f32 %v802, %v807
        %v810 = vadd.f32 %v809, %v776
        %v811 = vpack.c.bf16 %v810, %v810
        %v812 = vpack.c.bf16 %v778, %v777
        %v813 = vld [vmem:[#allocation7] sm:$0xf]
        %v814 = vld [vmem:[#allocation7 + $0x4] sm:$0xf]
        %v815 = vld [vmem:[#allocation7 + $0x8] sm:$0xf]
        %v816 = vld [vmem:[#allocation7 + $0xc] sm:$0xf]
        %v817 = vld [vmem:[#allocation8] sm:$0x1]
        %v819 = vlaneseq
        %v820 = vshrl.u32 %v819, 7
        %v821 = vsub.s32 0, %v820
        %v822 = vrot.slane %v817, %v821
        %v828 = vunpack.c.l.b16 %v813
        %v829 = vunpack.c.l.b16 %v814
        %v830 = vunpack.c.l.b16 %v815
        %v831 = vunpack.c.l.b16 %v816
        %v832 = vpack.c.b16 %v829, %v828
        %v833 = vpack.c.b16 %v831, %v830
        %v837 = vsel %vm781, %v811, 0
        %839 = vmatprep.subr.bf16.mxu0 0
        %840 = vmatpush1.bf16.msra.mxu0 %v832
        %841 = vmatprep.subr.bf16.mxu0 0
        %842 = vmatpush1.bf16.msra.mxu0 %v833
        %843 = vmatprep.subr.bf16.mxu0 0
        %844 = vmatpush1.bf16.msra.mxu0 0
        %845 = vmatprep.subr.bf16.mxu0 0
        %846 = vmatpush1.bf16.msra.mxu0 0
        %847 = vmatprep.subr.bf16.mxu0 0
        %848 = vmatpush1.bf16.msra.mxu0 0
        %849 = vmatprep.subr.bf16.mxu0 0
        %850 = vmatpush1.bf16.msra.mxu0 0
        %851 = vmatprep.subr.bf16.mxu0 0
        %852 = vmatpush1.bf16.msra.mxu0 0
        %853 = vmatprep.subr.bf16.mxu0 0
        %854 = vmatpush1.bf16.msra.mxu0 0
        %855 = vmatprep.subr.bf16.mxu0 0
        %856 = vmatpush1.bf16.msra.mxu0 0
        %857 = vmatprep.subr.bf16.mxu0 0
        %858 = vmatpush1.bf16.msra.mxu0 0
        %859 = vmatprep.subr.bf16.mxu0 0
        %860 = vmatpush1.bf16.msra.mxu0 0
        %861 = vmatprep.subr.bf16.mxu0 0
        %862 = vmatpush1.bf16.msra.mxu0 0
        %863 = vmatprep.subr.bf16.mxu0 0
        %864 = vmatpush1.bf16.msra.mxu0 0
        %865 = vmatprep.subr.bf16.mxu0 0
        %866 = vmatpush1.bf16.msra.mxu0 0
        %867 = vmatprep.subr.bf16.mxu0 0
        %868 = vmatpush1.bf16.msra.mxu0 0
        %869 = vmatprep.subr.bf16.mxu0 0
        %870 = vmatpush1.bf16.msra.mxu0 0
        %871 = vmatprep.mubr.bf16.mxu0 0
        %872 = vmatmul.mubr.bf16.gmra.mrb[0].mxu0 %v837
        %v873 = vpop.f32.mrb[0].mxu0
        %v874 = vadd.f32 %v822, %v873
        %v875 = vpop.f32.mrb[0].mxu0
        %v876 = vpop.f32.mrb[0].mxu0
        %v877 = vpop.f32.mrb[0].mxu0
        %878 = vdwg.mxu0
        %v879 = vld [vmem:[#allocation10] sm:$0xf]
        %v880 = vld [vmem:[#allocation10 + $0x4] sm:$0xf]
        %v881 = vld [vmem:[#allocation10 + $0x8] sm:$0xf]
        %v882 = vld [vmem:[#allocation10 + $0xc] sm:$0xf]
        %v883 = vld [vmem:[#allocation11] sm:$0x1]
        %v885 = vlaneseq
        %v886 = vshrl.u32 %v885, 7
        %v887 = vsub.s32 0, %v886
        %v888 = vrot.slane %v883, %v887
        %v894 = vunpack.c.l.b16 %v879
        %v895 = vunpack.c.l.b16 %v880
        %v896 = vunpack.c.l.b16 %v881
        %v897 = vunpack.c.l.b16 %v882
        %v898 = vpack.c.b16 %v895, %v894
        %v899 = vpack.c.b16 %v897, %v896
        %v903 = vsel %vm781, %v812, 0
        %905 = vmatprep.subr.bf16.mxu0 0
        %906 = vmatpush1.bf16.msra.mxu0 %v898
        %907 = vmatprep.subr.bf16.mxu0 0
        %908 = vmatpush1.bf16.msra.mxu0 %v899
        %909 = vmatprep.subr.bf16.mxu0 0
        %910 = vmatpush1.bf16.msra.mxu0 0
        %911 = vmatprep.subr.bf16.mxu0 0
        %912 = vmatpush1.bf16.msra.mxu0 0
        %913 = vmatprep.subr.bf16.mxu0 0
        %914 = vmatpush1.bf16.msra.mxu0 0
        %915 = vmatprep.subr.bf16.mxu0 0
        %916 = vmatpush1.bf16.msra.mxu0 0
        %917 = vmatprep.subr.bf16.mxu0 0
        %918 = vmatpush1.bf16.msra.mxu0 0
        %919 = vmatprep.subr.bf16.mxu0 0
        %920 = vmatpush1.bf16.msra.mxu0 0
        %921 = vmatprep.subr.bf16.mxu0 0
        %922 = vmatpush1.bf16.msra.mxu0 0
        %923 = vmatprep.subr.bf16.mxu0 0
        %924 = vmatpush1.bf16.msra.mxu0 0
        %925 = vmatprep.subr.bf16.mxu0 0
        %926 = vmatpush1.bf16.msra.mxu0 0
        %927 = vmatprep.subr.bf16.mxu0 0
        %928 = vmatpush1.bf16.msra.mxu0 0
        %929 = vmatprep.subr.bf16.mxu0 0
        %930 = vmatpush1.bf16.msra.mxu0 0
        %931 = vmatprep.subr.bf16.mxu0 0
        %932 = vmatpush1.bf16.msra.mxu0 0
        %933 = vmatprep.subr.bf16.mxu0 0
        %934 = vmatpush1.bf16.msra.mxu0 0
        %935 = vmatprep.subr.bf16.mxu0 0
        %936 = vmatpush1.bf16.msra.mxu0 0
        %937 = vmatprep.mubr.bf16.mxu0 0
        %938 = vmatmul.mubr.bf16.gmra.mrb[0].mxu0 %v903
        %v939 = vpop.f32.mrb[0].mxu0
        %v940 = vadd.f32 %v888, %v939
        %v941 = vpop.f32.mrb[0].mxu0
        %v942 = vpop.f32.mrb[0].mxu0
        %v943 = vadd.f32 %v888, %v942
        %v944 = vpop.f32.mrb[0].mxu0
        %945 = vdwg.mxu0
        %v946 = vld [vmem:[%s9] sm:$0xf]
        %v947 = vld [vmem:[%s9 + $0x4] sm:$0xf]
        %v948 = vld [vmem:[%s9 + $0x8] sm:$0xf]
        %v949 = vld [vmem:[%s9 + $0xc] sm:$0xf]
        %v950 = vld [vmem:[#allocation13] sm:$0x1]
        %v952 = vlaneseq
        %v953 = vshrl.u32 %v952, 7
        %v954 = vsub.s32 0, %v953
        %v955 = vrot.slane %v950, %v954
        %v961 = vunpack.c.l.b16 %v946
        %v962 = vunpack.c.l.b16 %v947
        %v963 = vunpack.c.l.b16 %v948
        %v964 = vunpack.c.l.b16 %v949
        %v965 = vpack.c.b16 %v962, %v961
        %v966 = vpack.c.b16 %v964, %v963
        %969 = vmatprep.subr.bf16.mxu0 0
        %970 = vmatpush1.bf16.msra.mxu0 %v965
        %971 = vmatprep.subr.bf16.mxu0 0
        %972 = vmatpush1.bf16.msra.mxu0 %v966
        %973 = vmatprep.subr.bf16.mxu0 0
        %974 = vmatpush1.bf16.msra.mxu0 0
        %975 = vmatprep.subr.bf16.mxu0 0
        %976 = vmatpush1.bf16.msra.mxu0 0
        %977 = vmatprep.subr.bf16.mxu0 0
        %978 = vmatpush1.bf16.msra.mxu0 0
        %979 = vmatprep.subr.bf16.mxu0 0
        %980 = vmatpush1.bf16.msra.mxu0 0
        %981 = vmatprep.subr.bf16.mxu0 0
        %982 = vmatpush1.bf16.msra.mxu0 0
        %983 = vmatprep.subr.bf16.mxu0 0
        %984 = vmatpush1.bf16.msra.mxu0 0
        %985 = vmatprep.subr.bf16.mxu0 0
        %986 = vmatpush1.bf16.msra.mxu0 0
        %987 = vmatprep.subr.bf16.mxu0 0
        %988 = vmatpush1.bf16.msra.mxu0 0
        %989 = vmatprep.subr.bf16.mxu0 0
        %990 = vmatpush1.bf16.msra.mxu0 0
        %991 = vmatprep.subr.bf16.mxu0 0
        %992 = vmatpush1.bf16.msra.mxu0 0
        %993 = vmatprep.subr.bf16.mxu0 0
        %994 = vmatpush1.bf16.msra.mxu0 0
        %995 = vmatprep.subr.bf16.mxu0 0
        %996 = vmatpush1.bf16.msra.mxu0 0
        %997 = vmatprep.subr.bf16.mxu0 0
        %998 = vmatpush1.bf16.msra.mxu0 0
        %999 = vmatprep.subr.bf16.mxu0 0
        %1000 = vmatpush1.bf16.msra.mxu0 0
        %1001 = vmatprep.mubr.bf16.mxu0 0
        %1002 = vmatmul.mubr.bf16.gmra.mrb[0].mxu0 %v903
        %v1003 = vpop.f32.mrb[0].mxu0
        %v1004 = vadd.f32 %v955, %v1003
        %v1005 = vpop.f32.mrb[0].mxu0
        %v1006 = vpop.f32.mrb[0].mxu0
        %v1007 = vadd.f32 %v955, %v1006
        %v1008 = vpop.f32.mrb[0].mxu0
        %1009 = vdwg.mxu0
        %v1010 = vpack.c.bf16 %v874, %v874
        %v1011 = vpack.c.bf16 %v943, %v940
        %v1012 = vpack.c.bf16 %v1007, %v1004
        %vm1013 = vcmask 64512
        %v1015 = vsel %vm1013, %v1010, 0
        %v1018 = vsel %vm1013, %v1011, 0
        %1020 = vmatprep.subr.bf16.mxu0 0
        %1021 = vmatpush1.bf16.xpose.msra.mxu0 %v1018
        %1022 = vmatprep.subr.bf16.mxu0 0
        %1023 = vmatpush1.bf16.xpose.msra.mxu0 0
        %1024 = vmatprep.subr.bf16.mxu0 0
        %1025 = vmatpush1.bf16.xpose.msra.mxu0 0
        %1026 = vmatprep.subr.bf16.mxu0 0
        %1027 = vmatpush1.bf16.xpose.msra.mxu0 0
        %1028 = vmatprep.subr.bf16.mxu0 0
        %1029 = vmatpush1.bf16.xpose.msra.mxu0 0
        %1030 = vmatprep.subr.bf16.mxu0 0
        %1031 = vmatpush1.bf16.xpose.msra.mxu0 0
        %1032 = vmatprep.subr.bf16.mxu0 0
        %1033 = vmatpush1.bf16.xpose.msra.mxu0 0
        %1034 = vmatprep.subr.bf16.mxu0 0
        %1035 = vmatpush1.bf16.xpose.msra.mxu0 0
        %1036 = vmatprep.subr.bf16.mxu0 0
        %1037 = vmatpush1.bf16.xpose.msra.mxu0 0
        %1038 = vmatprep.subr.bf16.mxu0 0
        %1039 = vmatpush1.bf16.xpose.msra.mxu0 0
        %1040 = vmatprep.subr.bf16.mxu0 0
        %1041 = vmatpush1.bf16.xpose.msra.mxu0 0
        %1042 = vmatprep.subr.bf16.mxu0 0
        %1043 = vmatpush1.bf16.xpose.msra.mxu0 0
        %1044 = vmatprep.subr.bf16.mxu0 0
        %1045 = vmatpush1.bf16.xpose.msra.mxu0 0
        %1046 = vmatprep.subr.bf16.mxu0 0
        %1047 = vmatpush1.bf16.xpose.msra.mxu0 0
        %1048 = vmatprep.subr.bf16.mxu0 0
        %1049 = vmatpush1.bf16.xpose.msra.mxu0 0
        %1050 = vmatprep.subr.bf16.mxu0 0
        %1051 = vmatpush1.bf16.xpose.msra.mxu0 0
        %1052 = vmatprep.mubr.bf16.mxu0 0
        %1053 = vmatmul.mubr.bf16.gmra.mrb[0].mxu0 %v1015
        %v1054 = vpop.f32.mrb[0].mxu0
        %v1055 = vadd.f32 0.0, %v1054
        %v1056 = vpop.f32.mrb[0].mxu0
        %v1057 = vpop.f32.mrb[0].mxu0
        %v1058 = vpop.f32.mrb[0].mxu0
        %1059 = vdwg.mxu0
        %vm1060 = vcmask 130048
        %v1061 = vsel %vm1060, %v1055, -inf
        %1062 = vmax.xlane.f32.xlu0 %v1061
        %v1063 = vpop.xlane.xlu0 %1062
        %v1064 = vsub.f32 %v1055, %v1063
        %v1065 = vmul.f32 %v1064, 1.442695
        %v1066 = vpow.pop %v1065
        %v1067 = vsel %vm1060, %v1066, 0.0
        %1068 = vadd.xlane.f32.xlu0 %v1067
        %v1069 = vpop.xlane.xlu0 %1068
        %v1070 = vrcp.pop %v1069
        %v1071 = vmul.f32 %v1066, %v1070
        %v1072 = vpack.c.bf16 %v1071, %v1071
        %v1074 = vsel %vm1060, %v1072, 0
        %1076 = vmatprep.subr.bf16.mxu0 0
        %1077 = vmatpush1.bf16.msra.mxu0 %v1012
        %1078 = vmatprep.subr.bf16.mxu0 0
        %1079 = vmatpush1.bf16.msra.mxu0 0
        %1080 = vmatprep.subr.bf16.mxu0 0
        %1081 = vmatpush1.bf16.msra.mxu0 0
        %1082 = vmatprep.subr.bf16.mxu0 0
        %1083 = vmatpush1.bf16.msra.mxu0 0
        %1084 = vmatprep.subr.bf16.mxu0 0
        %1085 = vmatpush1.bf16.msra.mxu0 0
        %1086 = vmatprep.subr.bf16.mxu0 0
        %1087 = vmatpush1.bf16.msra.mxu0 0
        %1088 = vmatprep.subr.bf16.mxu0 0
        %1089 = vmatpush1.bf16.msra.mxu0 0
        %1090 = vmatprep.subr.bf16.mxu0 0
        %1091 = vmatpush1.bf16.msra.mxu0 0
        %1092 = vmatprep.subr.bf16.mxu0 0
        %1093 = vmatpush1.bf16.msra.mxu0 0
        %1094 = vmatprep.subr.bf16.mxu0 0
        %1095 = vmatpush1.bf16.msra.mxu0 0
        %1096 = vmatprep.subr.bf16.mxu0 0
        %1097 = vmatpush1.bf16.msra.mxu0 0
        %1098 = vmatprep.subr.bf16.mxu0 0
        %1099 = vmatpush1.bf16.msra.mxu0 0
        %1100 = vmatprep.subr.bf16.mxu0 0
        %1101 = vmatpush1.bf16.msra.mxu0 0
        %1102 = vmatprep.subr.bf16.mxu0 0
        %1103 = vmatpush1.bf16.msra.mxu0 0
        %1104 = vmatprep.subr.bf16.mxu0 0
        %1105 = vmatpush1.bf16.msra.mxu0 0
        %1106 = vmatprep.subr.bf16.mxu0 0
        %1107 = vmatpush1.bf16.msra.mxu0 0
        %1108 = vmatprep.mubr.bf16.mxu0 0
        %1109 = vmatmul.mubr.bf16.gmra.mrb[0].mxu0 %v1074
        %v1110 = vpop.f32.mrb[0].mxu0
        %v1111 = vadd.f32 0.0, %v1110
        %v1112 = vpop.f32.mrb[0].mxu0
        %v1113 = vpop.f32.mrb[0].mxu0
        %v1114 = vpop.f32.mrb[0].mxu0
        %1115 = vdwg.mxu0
        %1117 = vrot.lane.b32.xlu0 %v1010, 120
        %v1118 = vpop.permute.xlu0 %1117
        %1120 = vrot.lane.b32.xlu0 %v1011, 120
        %v1121 = vpop.permute.xlu0 %1120
        %v1123 = vsel %vm1013, %v1118, 0
        %v1126 = vsel %vm1013, %v1121, 0
        %1128 = vmatprep.subr.bf16.mxu0 0
        %1129 = vmatpush1.bf16.xpose.msra.mxu0 %v1126
        %1130 = vmatprep.subr.bf16.mxu0 0
        %1131 = vmatpush1.bf16.xpose.msra.mxu0 0
        %1132 = vmatprep.subr.bf16.mxu0 0
        %1133 = vmatpush1.bf16.xpose.msra.mxu0 0
        %1134 = vmatprep.subr.bf16.mxu0 0
        %1135 = vmatpush1.bf16.xpose.msra.mxu0 0
        %1136 = vmatprep.subr.bf16.mxu0 0
        %1137 = vmatpush1.bf16.xpose.msra.mxu0 0
        %1138 = vmatprep.subr.bf16.mxu0 0
        %1139 = vmatpush1.bf16.xpose.msra.mxu0 0
        %1140 = vmatprep.subr.bf16.mxu0 0
        %1141 = vmatpush1.bf16.xpose.msra.mxu0 0
        %1142 = vmatprep.subr.bf16.mxu0 0
        %1143 = vmatpush1.bf16.xpose.msra.mxu0 0
        %1144 = vmatprep.subr.bf16.mxu0 0
        %1145 = vmatpush1.bf16.xpose.msra.mxu0 0
        %1146 = vmatprep.subr.bf16.mxu0 0
        %1147 = vmatpush1.bf16.xpose.msra.mxu0 0
        %1148 = vmatprep.subr.bf16.mxu0 0
        %1149 = vmatpush1.bf16.xpose.msra.mxu0 0
        %1150 = vmatprep.subr.bf16.mxu0 0
        %1151 = vmatpush1.bf16.xpose.msra.mxu0 0
        %1152 = vmatprep.subr.bf16.mxu0 0
        %1153 = vmatpush1.bf16.xpose.msra.mxu0 0
        %1154 = vmatprep.subr.bf16.mxu0 0
        %1155 = vmatpush1.bf16.xpose.msra.mxu0 0
        %1156 = vmatprep.subr.bf16.mxu0 0
        %1157 = vmatpush1.bf16.xpose.msra.mxu0 0
        %1158 = vmatprep.subr.bf16.mxu0 0
        %1159 = vmatpush1.bf16.xpose.msra.mxu0 0
        %1160 = vmatprep.mubr.bf16.mxu0 0
        %1161 = vmatmul.mubr.bf16.gmra.mrb[0].mxu0 %v1123
        %v1162 = vpop.f32.mrb[0].mxu0
        %v1163 = vadd.f32 0.0, %v1162
        %v1164 = vpop.f32.mrb[0].mxu0
        %v1165 = vpop.f32.mrb[0].mxu0
        %v1166 = vpop.f32.mrb[0].mxu0
        %1167 = vdwg.mxu0
        %v1168 = vsel %vm1060, %v1163, -inf
        %1169 = vmax.xlane.f32.xlu0 %v1168
        %v1170 = vpop.xlane.xlu0 %1169
        %v1171 = vsub.f32 %v1163, %v1170
        %v1172 = vmul.f32 %v1171, 1.442695
        %v1173 = vpow.pop %v1172
        %v1174 = vsel %vm1060, %v1173, 0.0
        %1175 = vadd.xlane.f32.xlu0 %v1174
        %v1176 = vpop.xlane.xlu0 %1175
        %v1177 = vrcp.pop %v1176
        %v1178 = vmul.f32 %v1173, %v1177
        %v1179 = vpack.c.bf16 %v1178, %v1178
        %1181 = vrot.lane.b32.xlu0 %v1012, 120
        %v1182 = vpop.permute.xlu0 %1181
        %v1185 = vsel %vm1060, %v1179, 0
        %1187 = vmatprep.subr.bf16.mxu0 0
        %1188 = vmatpush1.bf16.msra.mxu0 %v1182
        %1189 = vmatprep.subr.bf16.mxu0 0
        %1190 = vmatpush1.bf16.msra.mxu0 0
        %1191 = vmatprep.subr.bf16.mxu0 0
        %1192 = vmatpush1.bf16.msra.mxu0 0
        %1193 = vmatprep.subr.bf16.mxu0 0
        %1194 = vmatpush1.bf16.msra.mxu0 0
        %1195 = vmatprep.subr.bf16.mxu0 0
        %1196 = vmatpush1.bf16.msra.mxu0 0
        %1197 = vmatprep.subr.bf16.mxu0 0
        %1198 = vmatpush1.bf16.msra.mxu0 0
        %1199 = vmatprep.subr.bf16.mxu0 0
        %1200 = vmatpush1.bf16.msra.mxu0 0
        %1201 = vmatprep.subr.bf16.mxu0 0
        %1202 = vmatpush1.bf16.msra.mxu0 0
        %1203 = vmatprep.subr.bf16.mxu0 0
        %1204 = vmatpush1.bf16.msra.mxu0 0
        %1205 = vmatprep.subr.bf16.mxu0 0
        %1206 = vmatpush1.bf16.msra.mxu0 0
        %1207 = vmatprep.subr.bf16.mxu0 0
        %1208 = vmatpush1.bf16.msra.mxu0 0
        %1209 = vmatprep.subr.bf16.mxu0 0
        %1210 = vmatpush1.bf16.msra.mxu0 0
        %1211 = vmatprep.subr.bf16.mxu0 0
        %1212 = vmatpush1.bf16.msra.mxu0 0
        %1213 = vmatprep.subr.bf16.mxu0 0
        %1214 = vmatpush1.bf16.msra.mxu0 0
        %1215 = vmatprep.subr.bf16.mxu0 0
        %1216 = vmatpush1.bf16.msra.mxu0 0
        %1217 = vmatprep.subr.bf16.mxu0 0
        %1218 = vmatpush1.bf16.msra.mxu0 0
        %1219 = vmatprep.mubr.bf16.mxu0 0
        %1220 = vmatmul.mubr.bf16.gmra.mrb[0].mxu0 %v1185
        %v1221 = vpop.f32.mrb[0].mxu0
        %v1222 = vadd.f32 0.0, %v1221
        %v1223 = vpop.f32.mrb[0].mxu0
        %v1224 = vpop.f32.mrb[0].mxu0
        %v1225 = vpop.f32.mrb[0].mxu0
        %1226 = vdwg.mxu0
        %1227 = vrot.lane.b32.xlu0 %v1010, 112
        %v1228 = vpop.permute.xlu0 %1227
        %1229 = vrot.lane.b32.xlu0 %v1011, 112
        %v1230 = vpop.permute.xlu0 %1229
        %v1232 = vsel %vm1013, %v1228, 0
        %v1235 = vsel %vm1013, %v1230, 0
        %1237 = vmatprep.subr.bf16.mxu0 0
        %1238 = vmatpush1.bf16.xpose.msra.mxu0 %v1235
        %1239 = vmatprep.subr.bf16.mxu0 0
        %1240 = vmatpush1.bf16.xpose.msra.mxu0 0
        %1241 = vmatprep.subr.bf16.mxu0 0
        %1242 = vmatpush1.bf16.xpose.msra.mxu0 0
        %1243 = vmatprep.subr.bf16.mxu0 0
        %1244 = vmatpush1.bf16.xpose.msra.mxu0 0
        %1245 = vmatprep.subr.bf16.mxu0 0
        %1246 = vmatpush1.bf16.xpose.msra.mxu0 0
        %1247 = vmatprep.subr.bf16.mxu0 0
        %1248 = vmatpush1.bf16.xpose.msra.mxu0 0
        %1249 = vmatprep.subr.bf16.mxu0 0
        %1250 = vmatpush1.bf16.xpose.msra.mxu0 0
        %1251 = vmatprep.subr.bf16.mxu0 0
        %1252 = vmatpush1.bf16.xpose.msra.mxu0 0
        %1253 = vmatprep.subr.bf16.mxu0 0
        %1254 = vmatpush1.bf16.xpose.msra.mxu0 0
        %1255 = vmatprep.subr.bf16.mxu0 0
        %1256 = vmatpush1.bf16.xpose.msra.mxu0 0
        %1257 = vmatprep.subr.bf16.mxu0 0
        %1258 = vmatpush1.bf16.xpose.msra.mxu0 0
        %1259 = vmatprep.subr.bf16.mxu0 0
        %1260 = vmatpush1.bf16.xpose.msra.mxu0 0
        %1261 = vmatprep.subr.bf16.mxu0 0
        %1262 = vmatpush1.bf16.xpose.msra.mxu0 0
        %1263 = vmatprep.subr.bf16.mxu0 0
        %1264 = vmatpush1.bf16.xpose.msra.mxu0 0
        %1265 = vmatprep.subr.bf16.mxu0 0
        %1266 = vmatpush1.bf16.xpose.msra.mxu0 0
        %1267 = vmatprep.subr.bf16.mxu0 0
        %1268 = vmatpush1.bf16.xpose.msra.mxu0 0
        %1269 = vmatprep.mubr.bf16.mxu0 0
        %1270 = vmatmul.mubr.bf16.gmra.mrb[0].mxu0 %v1232
        %v1271 = vpop.f32.mrb[0].mxu0
        %v1272 = vadd.f32 0.0, %v1271
        %v1273 = vpop.f32.mrb[0].mxu0
        %v1274 = vpop.f32.mrb[0].mxu0
        %v1275 = vpop.f32.mrb[0].mxu0
        %1276 = vdwg.mxu0
        %v1277 = vsel %vm1060, %v1272, -inf
        %1278 = vmax.xlane.f32.xlu0 %v1277
        %v1279 = vpop.xlane.xlu0 %1278
        %v1280 = vsub.f32 %v1272, %v1279
        %v1281 = vmul.f32 %v1280, 1.442695
        %v1282 = vpow.pop %v1281
        %v1283 = vsel %vm1060, %v1282, 0.0
        %1284 = vadd.xlane.f32.xlu0 %v1283
        %v1285 = vpop.xlane.xlu0 %1284
        %v1286 = vrcp.pop %v1285
        %v1287 = vmul.f32 %v1282, %v1286
        %v1288 = vpack.c.bf16 %v1287, %v1287
        %1289 = vrot.lane.b32.xlu0 %v1012, 112
        %v1290 = vpop.permute.xlu0 %1289
        %v1293 = vsel %vm1060, %v1288, 0
        %1295 = vmatprep.subr.bf16.mxu0 0
        %1296 = vmatpush1.bf16.msra.mxu0 %v1290
        %1297 = vmatprep.subr.bf16.mxu0 0
        %1298 = vmatpush1.bf16.msra.mxu0 0
        %1299 = vmatprep.subr.bf16.mxu0 0
        %1300 = vmatpush1.bf16.msra.mxu0 0
        %1301 = vmatprep.subr.bf16.mxu0 0
        %1302 = vmatpush1.bf16.msra.mxu0 0
        %1303 = vmatprep.subr.bf16.mxu0 0
        %1304 = vmatpush1.bf16.msra.mxu0 0
        %1305 = vmatprep.subr.bf16.mxu0 0
        %1306 = vmatpush1.bf16.msra.mxu0 0
        %1307 = vmatprep.subr.bf16.mxu0 0
        %1308 = vmatpush1.bf16.msra.mxu0 0
        %1309 = vmatprep.subr.bf16.mxu0 0
        %1310 = vmatpush1.bf16.msra.mxu0 0
        %1311 = vmatprep.subr.bf16.mxu0 0
        %1312 = vmatpush1.bf16.msra.mxu0 0
        %1313 = vmatprep.subr.bf16.mxu0 0
        %1314 = vmatpush1.bf16.msra.mxu0 0
        %1315 = vmatprep.subr.bf16.mxu0 0
        %1316 = vmatpush1.bf16.msra.mxu0 0
        %1317 = vmatprep.subr.bf16.mxu0 0
        %1318 = vmatpush1.bf16.msra.mxu0 0
        %1319 = vmatprep.subr.bf16.mxu0 0
        %1320 = vmatpush1.bf16.msra.mxu0 0
        %1321 = vmatprep.subr.bf16.mxu0 0
        %1322 = vmatpush1.bf16.msra.mxu0 0
        %1323 = vmatprep.subr.bf16.mxu0 0
        %1324 = vmatpush1.bf16.msra.mxu0 0
        %1325 = vmatprep.subr.bf16.mxu0 0
        %1326 = vmatpush1.bf16.msra.mxu0 0
        %1327 = vmatprep.mubr.bf16.mxu0 0
        %1328 = vmatmul.mubr.bf16.gmra.mrb[0].mxu0 %v1293
        %v1329 = vpop.f32.mrb[0].mxu0
        %v1330 = vadd.f32 0.0, %v1329
        %v1331 = vpop.f32.mrb[0].mxu0
        %v1332 = vpop.f32.mrb[0].mxu0
        %v1333 = vpop.f32.mrb[0].mxu0
        %1334 = vdwg.mxu0
        %1335 = vrot.lane.b32.xlu0 %v1010, 104
        %v1336 = vpop.permute.xlu0 %1335
        %1337 = vrot.lane.b32.xlu0 %v1011, 104
        %v1338 = vpop.permute.xlu0 %1337
        %v1340 = vsel %vm1013, %v1336, 0
        %v1343 = vsel %vm1013, %v1338, 0
        %1345 = vmatprep.subr.bf16.mxu0 0
        %1346 = vmatpush1.bf16.xpose.msra.mxu0 %v1343
        %1347 = vmatprep.subr.bf16.mxu0 0
        %1348 = vmatpush1.bf16.xpose.msra.mxu0 0
        %1349 = vmatprep.subr.bf16.mxu0 0
        %1350 = vmatpush1.bf16.xpose.msra.mxu0 0
        %1351 = vmatprep.subr.bf16.mxu0 0
        %1352 = vmatpush1.bf16.xpose.msra.mxu0 0
        %1353 = vmatprep.subr.bf16.mxu0 0
        %1354 = vmatpush1.bf16.xpose.msra.mxu0 0
        %1355 = vmatprep.subr.bf16.mxu0 0
        %1356 = vmatpush1.bf16.xpose.msra.mxu0 0
        %1357 = vmatprep.subr.bf16.mxu0 0
        %1358 = vmatpush1.bf16.xpose.msra.mxu0 0
        %1359 = vmatprep.subr.bf16.mxu0 0
        %1360 = vmatpush1.bf16.xpose.msra.mxu0 0
        %1361 = vmatprep.subr.bf16.mxu0 0
        %1362 = vmatpush1.bf16.xpose.msra.mxu0 0
        %1363 = vmatprep.subr.bf16.mxu0 0
        %1364 = vmatpush1.bf16.xpose.msra.mxu0 0
        %1365 = vmatprep.subr.bf16.mxu0 0
        %1366 = vmatpush1.bf16.xpose.msra.mxu0 0
        %1367 = vmatprep.subr.bf16.mxu0 0
        %1368 = vmatpush1.bf16.xpose.msra.mxu0 0
        %1369 = vmatprep.subr.bf16.mxu0 0
        %1370 = vmatpush1.bf16.xpose.msra.mxu0 0
        %1371 = vmatprep.subr.bf16.mxu0 0
        %1372 = vmatpush1.bf16.xpose.msra.mxu0 0
        %1373 = vmatprep.subr.bf16.mxu0 0
        %1374 = vmatpush1.bf16.xpose.msra.mxu0 0
        %1375 = vmatprep.subr.bf16.mxu0 0
        %1376 = vmatpush1.bf16.xpose.msra.mxu0 0
        %1377 = vmatprep.mubr.bf16.mxu0 0
        %1378 = vmatmul.mubr.bf16.gmra.mrb[0].mxu0 %v1340
        %v1379 = vpop.f32.mrb[0].mxu0
        %v1380 = vadd.f32 0.0, %v1379
        %v1381 = vpop.f32.mrb[0].mxu0
        %v1382 = vpop.f32.mrb[0].mxu0
        %v1383 = vpop.f32.mrb[0].mxu0
        %1384 = vdwg.mxu0
        %v1385 = vsel %vm1060, %v1380, -inf
        %1386 = vmax.xlane.f32.xlu0 %v1385
        %v1387 = vpop.xlane.xlu0 %1386
        %v1388 = vsub.f32 %v1380, %v1387
        %v1389 = vmul.f32 %v1388, 1.442695
        %v1390 = vpow.pop %v1389
        %v1391 = vsel %vm1060, %v1390, 0.0
        %1392 = vadd.xlane.f32.xlu0 %v1391
        %v1393 = vpop.xlane.xlu0 %1392
        %v1394 = vrcp.pop %v1393
        %v1395 = vmul.f32 %v1390, %v1394
        %v1396 = vpack.c.bf16 %v1395, %v1395
        %1397 = vrot.lane.b32.xlu0 %v1012, 104
        %v1398 = vpop.permute.xlu0 %1397
        %v1401 = vsel %vm1060, %v1396, 0
        %1403 = vmatprep.subr.bf16.mxu0 0
        %1404 = vmatpush1.bf16.msra.mxu0 %v1398
        %1405 = vmatprep.subr.bf16.mxu0 0
        %1406 = vmatpush1.bf16.msra.mxu0 0
        %1407 = vmatprep.subr.bf16.mxu0 0
        %1408 = vmatpush1.bf16.msra.mxu0 0
        %1409 = vmatprep.subr.bf16.mxu0 0
        %1410 = vmatpush1.bf16.msra.mxu0 0
        %1411 = vmatprep.subr.bf16.mxu0 0
        %1412 = vmatpush1.bf16.msra.mxu0 0
        %1413 = vmatprep.subr.bf16.mxu0 0
        %1414 = vmatpush1.bf16.msra.mxu0 0
        %1415 = vmatprep.subr.bf16.mxu0 0
        %1416 = vmatpush1.bf16.msra.mxu0 0
        %1417 = vmatprep.subr.bf16.mxu0 0
        %1418 = vmatpush1.bf16.msra.mxu0 0
        %1419 = vmatprep.subr.bf16.mxu0 0
        %1420 = vmatpush1.bf16.msra.mxu0 0
        %1421 = vmatprep.subr.bf16.mxu0 0
        %1422 = vmatpush1.bf16.msra.mxu0 0
        %1423 = vmatprep.subr.bf16.mxu0 0
        %1424 = vmatpush1.bf16.msra.mxu0 0
        %1425 = vmatprep.subr.bf16.mxu0 0
        %1426 = vmatpush1.bf16.msra.mxu0 0
        %1427 = vmatprep.subr.bf16.mxu0 0
        %1428 = vmatpush1.bf16.msra.mxu0 0
        %1429 = vmatprep.subr.bf16.mxu0 0
        %1430 = vmatpush1.bf16.msra.mxu0 0
        %1431 = vmatprep.subr.bf16.mxu0 0
        %1432 = vmatpush1.bf16.msra.mxu0 0
        %1433 = vmatprep.subr.bf16.mxu0 0
        %1434 = vmatpush1.bf16.msra.mxu0 0
        %1435 = vmatprep.mubr.bf16.mxu0 0
        %1436 = vmatmul.mubr.bf16.gmra.mrb[0].mxu0 %v1401
        %v1437 = vpop.f32.mrb[0].mxu0
        %v1438 = vadd.f32 0.0, %v1437
        %v1439 = vpop.f32.mrb[0].mxu0
        %v1440 = vpop.f32.mrb[0].mxu0
        %v1441 = vpop.f32.mrb[0].mxu0
        %1442 = vdwg.mxu0
        %1444 = vrot.lane.b32.xlu0 %v1222, 8
        %v1445 = vpop.permute.xlu0 %1444
        %1448 = vrot.lane.b32.xlu0 %v1330, 16
        %v1449 = vpop.permute.xlu0 %1448
        %1452 = vrot.lane.b32.xlu0 %v1438, 24
        %v1453 = vpop.permute.xlu0 %1452
        %v1455 = vsel %vm1013, %v1111, %v1445
        %v1456 = vsel %vm1060, %v1455, %v1449
        %vm1457 = vcmask 195584
        %v1458 = vsel %vm1457, %v1456, %v1453
        %v1459 = vpack.c.bf16 %v1458, %v1458
        %v1460 = vld [vmem:[#allocation14] sm:$0xf]
        %v1461 = vld [vmem:[#allocation14 + $0x4] sm:$0xf]
        %v1462 = vld [vmem:[#allocation14 + $0x8] sm:$0xf]
        %v1463 = vld [vmem:[#allocation14 + $0xc] sm:$0xf]
        %v1464 = vld [vmem:[#allocation16] sm:$0x1]
        %v1466 = vlaneseq
        %v1467 = vshrl.u32 %v1466, 7
        %v1468 = vsub.s32 0, %v1467
        %v1469 = vrot.slane %v1464, %v1468
        %v1475 = vunpack.c.l.b16 %v1460
        %v1476 = vunpack.c.l.b16 %v1461
        %v1477 = vunpack.c.l.b16 %v1462
        %v1478 = vunpack.c.l.b16 %v1463
        %v1479 = vpack.c.b16 %v1476, %v1475
        %v1480 = vpack.c.b16 %v1478, %v1477
        %v1484 = vsel %vm781, %v1459, 0
        %1486 = vmatprep.subr.bf16.mxu0 0
        %1487 = vmatpush1.bf16.msra.mxu0 %v1479
        %1488 = vmatprep.subr.bf16.mxu0 0
        %1489 = vmatpush1.bf16.msra.mxu0 %v1480
        %1490 = vmatprep.subr.bf16.mxu0 0
        %1491 = vmatpush1.bf16.msra.mxu0 0
        %1492 = vmatprep.subr.bf16.mxu0 0
        %1493 = vmatpush1.bf16.msra.mxu0 0
        %1494 = vmatprep.subr.bf16.mxu0 0
        %1495 = vmatpush1.bf16.msra.mxu0 0
        %1496 = vmatprep.subr.bf16.mxu0 0
        %1497 = vmatpush1.bf16.msra.mxu0 0
        %1498 = vmatprep.subr.bf16.mxu0 0
        %1499 = vmatpush1.bf16.msra.mxu0 0
        %1500 = vmatprep.subr.bf16.mxu0 0
        %1501 = vmatpush1.bf16.msra.mxu0 0
        %1502 = vmatprep.subr.bf16.mxu0 0
        %1503 = vmatpush1.bf16.msra.mxu0 0
        %1504 = vmatprep.subr.bf16.mxu0 0
        %1505 = vmatpush1.bf16.msra.mxu0 0
        %1506 = vmatprep.subr.bf16.mxu0 0
        %1507 = vmatpush1.bf16.msra.mxu0 0
        %1508 = vmatprep.subr.bf16.mxu0 0
        %1509 = vmatpush1.bf16.msra.mxu0 0
        %1510 = vmatprep.subr.bf16.mxu0 0
        %1511 = vmatpush1.bf16.msra.mxu0 0
        %1512 = vmatprep.subr.bf16.mxu0 0
        %1513 = vmatpush1.bf16.msra.mxu0 0
        %1514 = vmatprep.subr.bf16.mxu0 0
        %1515 = vmatpush1.bf16.msra.mxu0 0
        %1516 = vmatprep.subr.bf16.mxu0 0
        %1517 = vmatpush1.bf16.msra.mxu0 0
        %1518 = vmatprep.mubr.bf16.mxu0 0
        %1519 = vmatmul.mubr.bf16.gmra.mrb[0].mxu0 %v1484
        %v1520 = vpop.f32.mrb[0].mxu0
        %v1521 = vadd.f32 %v1469, %v1520
        %v1522 = vpop.f32.mrb[0].mxu0
        %v1523 = vpop.f32.mrb[0].mxu0
        %v1524 = vpop.f32.mrb[0].mxu0
        %1525 = vdwg.mxu0
        %v1526 = vadd.f32 %v775, %v1521
        %v1527 = vld [vmem:[#allocation17] sm:$0x1]
        %v1528 = vld [vmem:[%s14] sm:$0x1]
        %v1529 = vsel %vm781, %v1526, 0.0
        %1530 = vadd.xlane.f32.xlu0 %v1529
        %v1531 = vpop.xlane.xlu0 %1530
        %v1532 = vmul.f32 %v1531, %v785
        %v1533 = vsub.f32 %v1526, %v1532
        %v1534 = vmul.f32 %v1533, %v1533
        %v1535 = vsel %vm781, %v1534, 0.0
        %1536 = vadd.xlane.f32.xlu0 %v1535
        %v1537 = vpop.xlane.xlu0 %1536
        %v1538 = vmul.f32 %v1537, %v785
        %v1539 = vadd.f32 %v1538, 1e-05
        %v1540 = vrsqrt.pop %v1539
        %v1541 = vmul.f32 %v1533, %v1540
        %v1543 = vlaneseq
        %v1544 = vshrl.u32 %v1543, 7
        %v1545 = vsub.s32 0, %v1544
        %v1546 = vrot.slane %v1527, %v1545
        %v1548 = vmul.f32 %v1541, %v1546
        %v1550 = vlaneseq
        %v1551 = vshrl.u32 %v1550, 7
        %v1552 = vsub.s32 0, %v1551
        %v1553 = vrot.slane %v1528, %v1552
        %v1555 = vadd.f32 %v1548, %v1553
        %v1556 = vpack.c.bf16 %v1555, %v1555
        %v1557 = vld [vmem:[%s15] sm:$0xf]
        %v1558 = vld [vmem:[%s15 + $0x4] sm:$0xf]
        %v1559 = vld [vmem:[%s15 + $0x8] sm:$0xf]
        %v1560 = vld [vmem:[%s15 + $0xc] sm:$0xf]
        %v1561 = vld [vmem:[%s16] sm:$0x1]
        %v1563 = vlaneseq
        %v1564 = vshrl.u32 %v1563, 7
        %v1565 = vsub.s32 0, %v1564
        %v1566 = vrot.slane %v1561, %v1565
        %v1572 = vunpack.c.l.b16 %v1557
        %v1573 = vunpack.c.l.b16 %v1558
        %v1574 = vunpack.c.l.b16 %v1559
        %v1575 = vunpack.c.l.b16 %v1560
        %v1576 = vpack.c.b16 %v1573, %v1572
        %v1577 = vpack.c.b16 %v1575, %v1574
        %v1581 = vsel %vm781, %v1556, 0
        %1583 = vmatprep.subr.bf16.mxu0 0
        %1584 = vmatpush1.bf16.msra.mxu0 %v1576
        %1585 = vmatprep.subr.bf16.mxu0 0
        %1586 = vmatpush1.bf16.msra.mxu0 %v1577
        %1587 = vmatprep.subr.bf16.mxu0 0
        %1588 = vmatpush1.bf16.msra.mxu0 0
        %1589 = vmatprep.subr.bf16.mxu0 0
        %1590 = vmatpush1.bf16.msra.mxu0 0
        %1591 = vmatprep.subr.bf16.mxu0 0
        %1592 = vmatpush1.bf16.msra.mxu0 0
        %1593 = vmatprep.subr.bf16.mxu0 0
        %1594 = vmatpush1.bf16.msra.mxu0 0
        %1595 = vmatprep.subr.bf16.mxu0 0
        %1596 = vmatpush1.bf16.msra.mxu0 0
        %1597 = vmatprep.subr.bf16.mxu0 0
        %1598 = vmatpush1.bf16.msra.mxu0 0
        %1599 = vmatprep.subr.bf16.mxu0 0
        %1600 = vmatpush1.bf16.msra.mxu0 0
        %1601 = vmatprep.subr.bf16.mxu0 0
        %1602 = vmatpush1.bf16.msra.mxu0 0
        %1603 = vmatprep.subr.bf16.mxu0 0
        %1604 = vmatpush1.bf16.msra.mxu0 0
        %1605 = vmatprep.subr.bf16.mxu0 0
        %1606 = vmatpush1.bf16.msra.mxu0 0
        %1607 = vmatprep.subr.bf16.mxu0 0
        %1608 = vmatpush1.bf16.msra.mxu0 0
        %1609 = vmatprep.subr.bf16.mxu0 0
        %1610 = vmatpush1.bf16.msra.mxu0 0
        %1611 = vmatprep.subr.bf16.mxu0 0
        %1612 = vmatpush1.bf16.msra.mxu0 0
        %1613 = vmatprep.subr.bf16.mxu0 0
        %1614 = vmatpush1.bf16.msra.mxu0 0
        %1615 = vmatprep.mubr.bf16.mxu0 0
        %1616 = vmatmul.mubr.bf16.gmra.mrb[0].mxu0 %v1581
        %v1617 = vpop.f32.mrb[0].mxu0
        %v1618 = vadd.f32 %v1566, %v1617
        %v1619 = vpop.f32.mrb[0].mxu0
        %v1620 = vpop.f32.mrb[0].mxu0
        %v1621 = vpop.f32.mrb[0].mxu0
        %1622 = vdwg.mxu0
        %v1623 = vmax.f32 %v1618, 0.0
        %v1624 = vpack.c.bf16 %v1623, %v1623
        %v1625 = vld [vmem:[%s17] sm:$0xf]
        %v1626 = vld [vmem:[%s17 + $0x4] sm:$0xf]
        %v1627 = vld [vmem:[%s17 + $0x8] sm:$0xf]
        %v1628 = vld [vmem:[%s17 + $0xc] sm:$0xf]
        %v1629 = vld [vmem:[%s17 + $0x10] sm:$0xf]
        %v1630 = vld [vmem:[%s17 + $0x14] sm:$0xf]
        %v1631 = vld [vmem:[%s17 + $0x18] sm:$0xf]
        %v1632 = vld [vmem:[%s17 + $0x1c] sm:$0xf]
        %v1633 = vld [vmem:[%s18] sm:$0x1]
        %v1635 = vlaneseq
        %v1636 = vshrl.u32 %v1635, 7
        %v1637 = vsub.s32 0, %v1636
        %v1638 = vrot.slane %v1633, %v1637
        %v1648 = vunpack.c.l.b16 %v1625
        %v1649 = vunpack.c.l.b16 %v1626
        %v1650 = vunpack.c.l.b16 %v1627
        %v1651 = vunpack.c.l.b16 %v1628
        %v1652 = vunpack.c.l.b16 %v1629
        %v1653 = vunpack.c.l.b16 %v1630
        %v1654 = vunpack.c.l.b16 %v1631
        %v1655 = vunpack.c.l.b16 %v1632
        %v1656 = vpack.c.b16 %v1649, %v1648
        %v1657 = vpack.c.b16 %v1651, %v1650
        %v1658 = vpack.c.b16 %v1653, %v1652
        %v1659 = vpack.c.b16 %v1655, %v1654
        %vm1664 = vcmask 523264
        %v1666 = vsel %vm1664, %v1624, 0
        %1668 = vmatprep.subr.bf16.mxu0 0
        %1669 = vmatpush1.bf16.msra.mxu0 %v1656
        %1670 = vmatprep.subr.bf16.mxu0 0
        %1671 = vmatpush1.bf16.msra.mxu0 %v1657
        %1672 = vmatprep.subr.bf16.mxu0 0
        %1673 = vmatpush1.bf16.msra.mxu0 %v1658
        %1674 = vmatprep.subr.bf16.mxu0 0
        %1675 = vmatpush1.bf16.msra.mxu0 %v1659
        %1676 = vmatprep.subr.bf16.mxu0 0
        %1677 = vmatpush1.bf16.msra.mxu0 0
        %1678 = vmatprep.subr.bf16.mxu0 0
        %1679 = vmatpush1.bf16.msra.mxu0 0
        %1680 = vmatprep.subr.bf16.mxu0 0
        %1681 = vmatpush1.bf16.msra.mxu0 0
        %1682 = vmatprep.subr.bf16.mxu0 0
        %1683 = vmatpush1.bf16.msra.mxu0 0
        %1684 = vmatprep.subr.bf16.mxu0 0
        %1685 = vmatpush1.bf16.msra.mxu0 0
        %1686 = vmatprep.subr.bf16.mxu0 0
        %1687 = vmatpush1.bf16.msra.mxu0 0
        %1688 = vmatprep.subr.bf16.mxu0 0
        %1689 = vmatpush1.bf16.msra.mxu0 0
        %1690 = vmatprep.subr.bf16.mxu0 0
        %1691 = vmatpush1.bf16.msra.mxu0 0
        %1692 = vmatprep.subr.bf16.mxu0 0
        %1693 = vmatpush1.bf16.msra.mxu0 0
        %1694 = vmatprep.subr.bf16.mxu0 0
        %1695 = vmatpush1.bf16.msra.mxu0 0
        %1696 = vmatprep.subr.bf16.mxu0 0
        %1697 = vmatpush1.bf16.msra.mxu0 0
        %1698 = vmatprep.subr.bf16.mxu0 0
        %1699 = vmatpush1.bf16.msra.mxu0 0
        %1700 = vmatprep.mubr.bf16.mxu0 0
        %1701 = vmatmul.mubr.bf16.gmra.mrb[0].mxu0 %v1666
        %v1702 = vpop.f32.mrb[0].mxu0
        %v1703 = vadd.f32 %v1638, %v1702
        %v1704 = vpop.f32.mrb[0].mxu0
        %v1705 = vpop.f32.mrb[0].mxu0
        %v1706 = vpop.f32.mrb[0].mxu0
        %1707 = vdwg.mxu0
        %v1708 = vadd.f32 %v1526, %v1703
        %1709 = vst.msk [vmem:[%s764] sm:$0xff] %vm781, %v1708
        %s1710 = sand.u32 %s463, 1
        %s1711 = scalar_lea.sflag [#allocation4], %s1710
        %s1712 = sand.u32 %s463, 1
        %s1713 = smul.addr %s1712, 8
        %s1714 = scalar_lea.vmem [#allocation19], %s1713
        // Predicated region
        $region137: #{tpu_custom_call.1} parent=95 // pred_check
          %p1715 = pneg %p473
        $region138: #{tpu_custom_call.1} parent=95 // pred_check_branch
          %1717 = sbr.rel (%p1715) target = $region140
        $region139: #{tpu_custom_call.1} parent=95 // pred_region
          %s1719 = ssub.s32 128, 128
          %1720 = vsyncadd %s1711, %s1719
          %s1721 = smul.addr %s41, 128
          %s1722 = scalar_lea.hbm %s19, %s1721
          %s1724 = sshll.u32 %s1714, 4
          %s1725 = int_to_ptr.vmem [resolvable:$true] %s1724
          %1727 = dma.vmem_to_hbm [thread:$0]  %s1725, 128, %s1722, %s1711
        $region140: #{tpu_custom_call.1} parent=95 // pred_fallthru
          _
      $region96: #{tpu_custom_call.1} parent=5 // pred_fallthru
        _
      %p1728 = scmp.le.s32.totalorder 2, %s36
      // Predicated region
      $region141: #{tpu_custom_call.1} parent=5 // pred_check
        %p1729 = pneg %p1728
      $region142: #{tpu_custom_call.1} parent=5 // pred_check_branch
        %1731 = sbr.rel (%p1729) target = $region144
      $region143: #{tpu_custom_call.1} parent=5 // pred_region
        %s1732 = ssub.s32 %s36, 2
        // Predicated region
        $region145: #{tpu_custom_call.1} parent=143 // pred_check
          %p1733 = pneg %p479
        $region146: #{tpu_custom_call.1} parent=143 // pred_check_branch
          %1735 = sbr.rel (%p1733) target = $region148
        $region147: #{tpu_custom_call.1} parent=143 // pred_region
          %s1736 = sand.u32 %s464, 1
          %s1737 = scalar_lea.sflag [#allocation4], %s1736
          %s1738 = sand.u32 %s464, 1
          %s1739 = smul.addr %s1738, 8
          %s1740 = scalar_lea.vmem [#allocation19], %s1739
          %1741 = dma.done %s1737, 128
        $region148: #{tpu_custom_call.1} parent=143 // pred_fallthru
          _
      $region144: #{tpu_custom_call.1} parent=5 // pred_fallthru
        _
    $region6: #{tpu_custom_call.1} parent=1 // loop_footer
      %s40 = sadd.s32 1, %s36
    $region7: #{tpu_custom_call.1} parent=1 // loop_footer_branch
      %35 = sbr.rel target = $region3
    $region8: #{tpu_custom_call.1} parent=1 // loop_exit
      _
    %1742 = vsyncpa [#allocation3], 1
    %s1743 = scalar_lea.sflag [#allocation3], 1
    %1744 = vsyncpa %s1743, 1
    %1745 = vsyncpa [#allocation6], 1
    %1746 = vsyncpa [#allocation9], 1
    %1747 = vsyncpa [#allocation12], 1
    %1748 = vsyncpa [#allocation15], 1
    %1749 = vsyncpa [#allocation18], 1
    %1750 = vsyncpa [#allocation4], 1
    %s1751 = scalar_lea.sflag [#allocation4], 1
    %1752 = vsyncpa %s1751, 1

// kernel: tpu_custom_call.1
$region0: #{tpu_custom_call.1}
  #allocation0 [shape = 'u32[]', space=smem, size = 0x4, offset = 0x4, fixed_abs, tag = 'smem constant byte address 0x4 - core index']
  #allocation1 [shape = 'u32[144,128]{1,0:T(1,128)}', space=vmem, size = 0x12000, scoped, tag = 'internal scratch']
  %s0 = inlined_call_operand.vmem [shape: f32[2,8,32], index: 0, kind: input, shape index: {}]
  %s1 = inlined_call_operand.hbm [shape: f32[2,8,32], index: 1, kind: input, shape index: {}]
  %s2 = inlined_call_operand.vmem [shape: f32[2,16,32], index: 2, kind: input, shape index: {}]
  %s3 = inlined_call_operand.vmem [shape: f32[1,32], index: 3, kind: input, shape index: {}]
  %s4 = inlined_call_operand.hbm [shape: f32[1,32], index: 4, kind: input, shape index: {}]
  %s5 = inlined_call_operand.hbm [shape: bf16[32,32], index: 5, kind: input, shape index: {}]
  %s6 = inlined_call_operand.hbm [shape: f32[1,32], index: 6, kind: input, shape index: {}]
  %s7 = inlined_call_operand.hbm [shape: bf16[32,32], index: 7, kind: input, shape index: {}]
  %s8 = inlined_call_operand.hbm [shape: f32[1,32], index: 8, kind: input, shape index: {}]
  %s9 = inlined_call_operand.vmem [shape: bf16[32,32], index: 9, kind: input, shape index: {}]
  %s10 = inlined_call_operand.hbm [shape: f32[1,32], index: 10, kind: input, shape index: {}]
  %s11 = inlined_call_operand.hbm [shape: bf16[32,32], index: 11, kind: input, shape index: {}]
  %s12 = inlined_call_operand.hbm [shape: f32[1,32], index: 12, kind: input, shape index: {}]
  %s13 = inlined_call_operand.hbm [shape: f32[1,32], index: 13, kind: input, shape index: {}]
  %s14 = inlined_call_operand.vmem [shape: f32[1,32], index: 14, kind: input, shape index: {}]
  %s15 = inlined_call_operand.vmem [shape: bf16[32,64], index: 15, kind: input, shape index: {}]
  %s16 = inlined_call_operand.vmem [shape: f32[1,64], index: 16, kind: input, shape index: {}]
  %s17 = inlined_call_operand.vmem [shape: bf16[64,32], index: 17, kind: input, shape index: {}]
  %s18 = inlined_call_operand.vmem [shape: f32[1,32], index: 18, kind: input, shape index: {}]
  %s19 = inlined_call_operand.hbm [shape: f32[2,8,32], index: 19, kind: output, shape index: {}]
  %s20 = sld [smem:[#allocation0]]
  $region149: #{tpu_custom_call.1} parent=0
    _
  %s22 = ssub.s32 1, %s20
  %s23 = scalar_select 0, %s22, %s20
  $region1: #{tpu_custom_call.1} parent=0
    #allocation2 [shape = 'u8[8192]{0}', space=vmem, size = 0x2000, scoped, tag = 'input window, operand 1']
    #allocation3 [shape = 's32[2]{0}', space=sflag, size = 0x8, scoped, tag = 'scoped memory for tpu_custom_call.1']
    #allocation4 [shape = 's32[2]{0}', space=sflag, size = 0x8, scoped, tag = 'scoped memory for tpu_custom_call.1']
    #allocation5 [shape = 'u8[512]{0}', space=vmem, size = 0x400, scoped, tag = 'input window, operand 4, single buffered']
    #allocation6 [shape = 's32[1]{0}', space=sflag, size = 0x4, scoped, tag = 'scoped memory for tpu_custom_call.1']
    #allocation7 [shape = 'u8[8192]{0}', space=vmem, size = 0x2000, scoped, tag = 'input window, operand 5, single buffered']
    #allocation8 [shape = 'u8[512]{0}', space=vmem, size = 0x400, scoped, tag = 'input window, operand 6, single buffered']
    #allocation9 [shape = 's32[1]{0}', space=sflag, size = 0x4, scoped, tag = 'scoped memory for tpu_custom_call.1']
    #allocation10 [shape = 'u8[8192]{0}', space=vmem, size = 0x2000, scoped, tag = 'input window, operand 7, single buffered']
    #allocation11 [shape = 'u8[512]{0}', space=vmem, size = 0x400, scoped, tag = 'input window, operand 8, single buffered']
    #allocation12 [shape = 's32[1]{0}', space=sflag, size = 0x4, scoped, tag = 'scoped memory for tpu_custom_call.1']
    #allocation13 [shape = 'u8[512]{0}', space=vmem, size = 0x400, scoped, tag = 'input window, operand 10, single buffered']
    #allocation14 [shape = 'u8[8192]{0}', space=vmem, size = 0x2000, scoped, tag = 'input window, operand 11, single buffered']
    #allocation15 [shape = 's32[1]{0}', space=sflag, size = 0x4, scoped, tag = 'scoped memory for tpu_custom_call.1']
    #allocation16 [shape = 'u8[512]{0}', space=vmem, size = 0x400, scoped, tag = 'input window, operand 12, single buffered']
    #allocation17 [shape = 'u8[512]{0}', space=vmem, size = 0x400, scoped, tag = 'input window, operand 13, single buffered']
    #allocation18 [shape = 's32[1]{0}', space=sflag, size = 0x4, scoped, tag = 'scoped memory for tpu_custom_call.1']
    #allocation19 [shape = 'u8[8192]{0}', space=vmem, size = 0x2000, scoped, tag = 'output window, operand 0']
    %24 = vsyncpa [#allocation3], 0
    %s25 = scalar_lea.sflag [#allocation3], 1
    %26 = vsyncpa %s25, 0
    %27 = vsyncpa [#allocation6], 0
    %28 = vsyncpa [#allocation9], 0
    %29 = vsyncpa [#allocation12], 0
    %30 = vsyncpa [#allocation15], 0
    %31 = vsyncpa [#allocation18], 0
    %32 = vsyncpa [#allocation4], 0
    %s33 = scalar_lea.sflag [#allocation4], 1
    %34 = vsyncpa %s33, 0
    loop: start=0, step=1, limit=4
    $region2: #{tpu_custom_call.1} parent=1 // loop_pre_header
      _
    $region3: #{tpu_custom_call.1} parent=1 // loop_header
      %s36 = sphi 0, %s40
      %p37 = scmp.ge.s32.totalorder %s36, 4
      %s46 = sphi 0, %s48
      %s49 = sphi 0, %s46
      %s50 = sphi 0, %s49
      %s66 = sphi 0, %s50
      %s72 = sphi 0, %s74
      %s75 = sphi 0, %s72
      %s76 = sphi 0, %s75
      %s92 = sphi 0, %s76
      %s98 = sphi 0, %s100
      %s101 = sphi 0, %s98
      %s102 = sphi 0, %s101
      %s118 = sphi 0, %s102
      %s122 = sphi 0, %s122
      %s124 = sphi 0, %s122
      %s125 = sphi 0, %s124
      %s139 = sphi 0, %s125
      %s143 = sphi 0, %s143
      %s145 = sphi 0, %s143
      %s146 = sphi 0, %s145
      %s160 = sphi 0, %s146
      %s164 = sphi 0, %s164
      %s166 = sphi 0, %s164
      %s167 = sphi 0, %s166
      %s181 = sphi 0, %s167
      %s185 = sphi 0, %s185
      %s187 = sphi 0, %s185
      %s188 = sphi 0, %s187
      %s202 = sphi 0, %s188
      %s206 = sphi 0, %s206
      %s208 = sphi 0, %s206
      %s209 = sphi 0, %s208
      %s223 = sphi 0, %s209
      %s227 = sphi 0, %s227
      %s229 = sphi 0, %s227
      %s230 = sphi 0, %s229
      %s244 = sphi 0, %s230
      %s248 = sphi 0, %s248
      %s250 = sphi 0, %s248
      %s251 = sphi 0, %s250
      %s265 = sphi 0, %s251
      %s269 = sphi 0, %s269
      %s271 = sphi 0, %s269
      %s272 = sphi 0, %s271
      %s286 = sphi 0, %s272
      %s290 = sphi 0, %s290
      %s292 = sphi 0, %s290
      %s293 = sphi 0, %s292
      %s307 = sphi 0, %s293
      %s311 = sphi 0, %s311
      %s313 = sphi 0, %s311
      %s314 = sphi 0, %s313
      %s328 = sphi 0, %s314
      %s332 = sphi 0, %s332
      %s334 = sphi 0, %s332
      %s335 = sphi 0, %s334
      %s349 = sphi 0, %s335
      %s353 = sphi 0, %s353
      %s355 = sphi 0, %s353
      %s356 = sphi 0, %s355
      %s370 = sphi 0, %s356
      %s374 = sphi 0, %s374
      %s376 = sphi 0, %s374
      %s377 = sphi 0, %s376
      %s391 = sphi 0, %s377
      %s395 = sphi 0, %s395
      %s397 = sphi 0, %s395
      %s398 = sphi 0, %s397
      %s412 = sphi 0, %s398
      %s416 = sphi 0, %s416
      %s418 = sphi 0, %s416
      %s419 = sphi 0, %s418
      %s433 = sphi 0, %s419
      %s437 = sphi 0, %s437
      %s439 = sphi 0, %s437
      %s440 = sphi 0, %s439
      %s454 = sphi 0, %s440
      %s460 = sphi 0, %s462
      %s463 = sphi 0, %s460
      %s464 = sphi 0, %s463
      %s480 = sphi 0, %s464
    $region4: #{tpu_custom_call.1} parent=1 // loop_header_branch
      %39 = sbr.rel (%p37) target = $region8
    $region5: #{tpu_custom_call.1} parent=1 // loop_body
      %s41 = ssub.s32 %s36, 1
      %s42 = ssub.s32 %s36, 2
      %s43 = sadd.s32 %s36, 1
      %s44 = ssub.s32 %s36, %s43
      %p45 = scmp.eq.s32.totalorder %s44, 0
      %s47 = sadd.s32 %s46, 1
      %s48 = scalar_select %p45, %s46, %s47
      %p51 = pneg %p45
      %p52 = scmp.eq.s32.totalorder %s36, 1
      %p53 = por %p51, %p52
      %p54 = scmp.ne.s32.totalorder %s46, %s49
      %p55 = scmp.eq.s32.totalorder %s36, 0
      %p56 = por %p54, %p55
      %p57 = scmp.ne.s32.totalorder %s46, %s49
      %p58 = scmp.eq.s32.totalorder %s41, 1
      %p59 = por %p57, %p58
      %p60 = scmp.ne.s32.totalorder %s49, %s50
      %p61 = scmp.eq.s32.totalorder %s41, 0
      %p62 = por %p60, %p61
      %p63 = scmp.ne.s32.totalorder %s49, %s50
      %p64 = scmp.eq.s32.totalorder %s42, 1
      %p65 = por %p63, %p64
      %p67 = scmp.ne.s32.totalorder %s50, %s66
      %p68 = scmp.eq.s32.totalorder %s42, 0
      %p69 = por %p67, %p68
      %s70 = ssub.s32 %s36, %s43
      %p71 = scmp.eq.s32.totalorder %s70, 0
      %s73 = sadd.s32 %s72, 1
      %s74 = scalar_select %p71, %s72, %s73
      %p77 = pneg %p71
      %p78 = scmp.eq.s32.totalorder %s36, 1
      %p79 = por %p77, %p78
      %p80 = scmp.ne.s32.totalorder %s72, %s75
      %p81 = scmp.eq.s32.totalorder %s36, 0
      %p82 = por %p80, %p81
      %p83 = scmp.ne.s32.totalorder %s72, %s75
      %p84 = scmp.eq.s32.totalorder %s41, 1
      %p85 = por %p83, %p84
      %p86 = scmp.ne.s32.totalorder %s75, %s76
      %p87 = scmp.eq.s32.totalorder %s41, 0
      %p88 = por %p86, %p87
      %p89 = scmp.ne.s32.totalorder %s75, %s76
      %p90 = scmp.eq.s32.totalorder %s42, 1
      %p91 = por %p89, %p90
      %p93 = scmp.ne.s32.totalorder %s76, %s92
      %p94 = scmp.eq.s32.totalorder %s42, 0
      %p95 = por %p93, %p94
      %s96 = ssub.s32 %s36, %s43
      %p97 = scmp.eq.s32.totalorder %s96, 0
      %s99 = sadd.s32 %s98, 1
      %s100 = scalar_select %p97, %s98, %s99
      %p103 = pneg %p97
      %p104 = scmp.eq.s32.totalorder %s36, 1
      %p105 = por %p103, %p104
      %p106 = scmp.ne.s32.totalorder %s98, %s101
      %p107 = scmp.eq.s32.totalorder %s36, 0
      %p108 = por %p106, %p107
      %p109 = scmp.ne.s32.totalorder %s98, %s101
      %p110 = scmp.eq.s32.totalorder %s41, 1
      %p111 = por %p109, %p110
      %p112 = scmp.ne.s32.totalorder %s101, %s102
      %p113 = scmp.eq.s32.totalorder %s41, 0
      %p114 = por %p112, %p113
      %p115 = scmp.ne.s32.totalorder %s101, %s102
      %p116 = scmp.eq.s32.totalorder %s42, 1
      %p117 = por %p115, %p116
      %p119 = scmp.ne.s32.totalorder %s102, %s118
      %p120 = scmp.eq.s32.totalorder %s42, 0
      %p121 = por %p119, %p120
      %s123 = sadd.s32 %s122, 1
      %p126 = scmp.eq.s32.totalorder %s36, 1
      %p127 = scmp.ne.s32.totalorder %s122, %s124
      %p128 = scmp.eq.s32.totalorder %s36, 0
      %p129 = por %p127, %p128
      %p130 = scmp.ne.s32.totalorder %s122, %s124
      %p131 = scmp.eq.s32.totalorder %s41, 1
      %p132 = por %p130, %p131
      %p133 = scmp.ne.s32.totalorder %s124, %s125
      %p134 = scmp.eq.s32.totalorder %s41, 0
      %p135 = por %p133, %p134
      %p136 = scmp.ne.s32.totalorder %s124, %s125
      %p137 = scmp.eq.s32.totalorder %s42, 1
      %p138 = por %p136, %p137
      %p140 = scmp.ne.s32.totalorder %s125, %s139
      %p141 = scmp.eq.s32.totalorder %s42, 0
      %p142 = por %p140, %p141
      %s144 = sadd.s32 %s143, 1
      %p147 = scmp.eq.s32.totalorder %s36, 1
      %p148 = scmp.ne.s32.totalorder %s143, %s145
      %p149 = scmp.eq.s32.totalorder %s36, 0
      %p150 = por %p148, %p149
      %p151 = scmp.ne.s32.totalorder %s143, %s145
      %p152 = scmp.eq.s32.totalorder %s41, 1
      %p153 = por %p151, %p152
      %p154 = scmp.ne.s32.totalorder %s145, %s146
      %p155 = scmp.eq.s32.totalorder %s41, 0
      %p156 = por %p154, %p155
      %p157 = scmp.ne.s32.totalorder %s145, %s146
      %p158 = scmp.eq.s32.totalorder %s42, 1
      %p159 = por %p157, %p158
      %p161 = scmp.ne.s32.totalorder %s146, %s160
      %p162 = scmp.eq.s32.totalorder %s42, 0
      %p163 = por %p161, %p162
      %s165 = sadd.s32 %s164, 1
      %p168 = scmp.eq.s32.totalorder %s36, 1
      %p169 = scmp.ne.s32.totalorder %s164, %s166
      %p170 = scmp.eq.s32.totalorder %s36, 0
      %p171 = por %p169, %p170
      %p172 = scmp.ne.s32.totalorder %s164, %s166
      %p173 = scmp.eq.s32.totalorder %s41, 1
      %p174 = por %p172, %p173
      %p175 = scmp.ne.s32.totalorder %s166, %s167
      %p176 = scmp.eq.s32.totalorder %s41, 0
      %p177 = por %p175, %p176
      %p178 = scmp.ne.s32.totalorder %s166, %s167
      %p179 = scmp.eq.s32.totalorder %s42, 1
      %p180 = por %p178, %p179
      %p182 = scmp.ne.s32.totalorder %s167, %s181
      %p183 = scmp.eq.s32.totalorder %s42, 0
      %p184 = por %p182, %p183
      %s186 = sadd.s32 %s185, 1
      %p189 = scmp.eq.s32.totalorder %s36, 1
      %p190 = scmp.ne.s32.totalorder %s185, %s187
      %p191 = scmp.eq.s32.totalorder %s36, 0
      %p192 = por %p190, %p191
      %p193 = scmp.ne.s32.totalorder %s185, %s187
      %p194 = scmp.eq.s32.totalorder %s41, 1
      %p195 = por %p193, %p194
      %p196 = scmp.ne.s32.totalorder %s187, %s188
      %p197 = scmp.eq.s32.totalorder %s41, 0
      %p198 = por %p196, %p197
      %p199 = scmp.ne.s32.totalorder %s187, %s188
      %p200 = scmp.eq.s32.totalorder %s42, 1
      %p201 = por %p199, %p200
      %p203 = scmp.ne.s32.totalorder %s188, %s202
      %p204 = scmp.eq.s32.totalorder %s42, 0
      %p205 = por %p203, %p204
      %s207 = sadd.s32 %s206, 1
      %p210 = scmp.eq.s32.totalorder %s36, 1
      %p211 = scmp.ne.s32.totalorder %s206, %s208
      %p212 = scmp.eq.s32.totalorder %s36, 0
      %p213 = por %p211, %p212
      %p214 = scmp.ne.s32.totalorder %s206, %s208
      %p215 = scmp.eq.s32.totalorder %s41, 1
      %p216 = por %p214, %p215
      %p217 = scmp.ne.s32.totalorder %s208, %s209
      %p218 = scmp.eq.s32.totalorder %s41, 0
      %p219 = por %p217, %p218
      %p220 = scmp.ne.s32.totalorder %s208, %s209
      %p221 = scmp.eq.s32.totalorder %s42, 1
      %p222 = por %p220, %p221
      %p224 = scmp.ne.s32.totalorder %s209, %s223
      %p225 = scmp.eq.s32.totalorder %s42, 0
      %p226 = por %p224, %p225
      %s228 = sadd.s32 %s227, 1
      %p231 = scmp.eq.s32.totalorder %s36, 1
      %p232 = scmp.ne.s32.totalorder %s227, %s229
      %p233 = scmp.eq.s32.totalorder %s36, 0
      %p234 = por %p232, %p233
      %p235 = scmp.ne.s32.totalorder %s227, %s229
      %p236 = scmp.eq.s32.totalorder %s41, 1
      %p237 = por %p235, %p236
      %p238 = scmp.ne.s32.totalorder %s229, %s230
      %p239 = scmp.eq.s32.totalorder %s41, 0
      %p240 = por %p238, %p239
      %p241 = scmp.ne.s32.totalorder %s229, %s230
      %p242 = scmp.eq.s32.totalorder %s42, 1
      %p243 = por %p241, %p242
      %p245 = scmp.ne.s32.totalorder %s230, %s244
      %p246 = scmp.eq.s32.totalorder %s42, 0
      %p247 = por %p245, %p246
      %s249 = sadd.s32 %s248, 1
      %p252 = scmp.eq.s32.totalorder %s36, 1
      %p253 = scmp.ne.s32.totalorder %s248, %s250
      %p254 = scmp.eq.s32.totalorder %s36, 0
      %p255 = por %p253, %p254
      %p256 = scmp.ne.s32.totalorder %s248, %s250
      %p257 = scmp.eq.s32.totalorder %s41, 1
      %p258 = por %p256, %p257
      %p259 = scmp.ne.s32.totalorder %s250, %s251
      %p260 = scmp.eq.s32.totalorder %s41, 0
      %p261 = por %p259, %p260
      %p262 = scmp.ne.s32.totalorder %s250, %s251
      %p263 = scmp.eq.s32.totalorder %s42, 1
      %p264 = por %p262, %p263
      %p266 = scmp.ne.s32.totalorder %s251, %s265
      %p267 = scmp.eq.s32.totalorder %s42, 0
      %p268 = por %p266, %p267
      %s270 = sadd.s32 %s269, 1
      %p273 = scmp.eq.s32.totalorder %s36, 1
      %p274 = scmp.ne.s32.totalorder %s269, %s271
      %p275 = scmp.eq.s32.totalorder %s36, 0
      %p276 = por %p274, %p275
      %p277 = scmp.ne.s32.totalorder %s269, %s271
      %p278 = scmp.eq.s32.totalorder %s41, 1
      %p279 = por %p277, %p278
      %p280 = scmp.ne.s32.totalorder %s271, %s272
      %p281 = scmp.eq.s32.totalorder %s41, 0
      %p282 = por %p280, %p281
      %p283 = scmp.ne.s32.totalorder %s271, %s272
      %p284 = scmp.eq.s32.totalorder %s42, 1
      %p285 = por %p283, %p284
      %p287 = scmp.ne.s32.totalorder %s272, %s286
      %p288 = scmp.eq.s32.totalorder %s42, 0
      %p289 = por %p287, %p288
      %s291 = sadd.s32 %s290, 1
      %p294 = scmp.eq.s32.totalorder %s36, 1
      %p295 = scmp.ne.s32.totalorder %s290, %s292
      %p296 = scmp.eq.s32.totalorder %s36, 0
      %p297 = por %p295, %p296
      %p298 = scmp.ne.s32.totalorder %s290, %s292
      %p299 = scmp.eq.s32.totalorder %s41, 1
      %p300 = por %p298, %p299
      %p301 = scmp.ne.s32.totalorder %s292, %s293
      %p302 = scmp.eq.s32.totalorder %s41, 0
      %p303 = por %p301, %p302
      %p304 = scmp.ne.s32.totalorder %s292, %s293
      %p305 = scmp.eq.s32.totalorder %s42, 1
      %p306 = por %p304, %p305
      %p308 = scmp.ne.s32.totalorder %s293, %s307
      %p309 = scmp.eq.s32.totalorder %s42, 0
      %p310 = por %p308, %p309
      %s312 = sadd.s32 %s311, 1
      %p315 = scmp.eq.s32.totalorder %s36, 1
      %p316 = scmp.ne.s32.totalorder %s311, %s313
      %p317 = scmp.eq.s32.totalorder %s36, 0
      %p318 = por %p316, %p317
      %p319 = scmp.ne.s32.totalorder %s311, %s313
      %p320 = scmp.eq.s32.totalorder %s41, 1
      %p321 = por %p319, %p320
      %p322 = scmp.ne.s32.totalorder %s313, %s314
      %p323 = scmp.eq.s32.totalorder %s41, 0
      %p324 = por %p322, %p323
      %p325 = scmp.ne.s32.totalorder %s313, %s314
      %p326 = scmp.eq.s32.totalorder %s42, 1
      %p327 = por %p325, %p326
      %p329 = scmp.ne.s32.totalorder %s314, %s328
      %p330 = scmp.eq.s32.totalorder %s42, 0
      %p331 = por %p329, %p330
      %s333 = sadd.s32 %s332, 1
      %p336 = scmp.eq.s32.totalorder %s36, 1
      %p337 = scmp.ne.s32.totalorder %s332, %s334
      %p338 = scmp.eq.s32.totalorder %s36, 0
      %p339 = por %p337, %p338
      %p340 = scmp.ne.s32.totalorder %s332, %s334
      %p341 = scmp.eq.s32.totalorder %s41, 1
      %p342 = por %p340, %p341
      %p343 = scmp.ne.s32.totalorder %s334, %s335
      %p344 = scmp.eq.s32.totalorder %s41, 0
      %p345 = por %p343, %p344
      %p346 = scmp.ne.s32.totalorder %s334, %s335
      %p347 = scmp.eq.s32.totalorder %s42, 1
      %p348 = por %p346, %p347
      %p350 = scmp.ne.s32.totalorder %s335, %s349
      %p351 = scmp.eq.s32.totalorder %s42, 0
      %p352 = por %p350, %p351
      %s354 = sadd.s32 %s353, 1
      %p357 = scmp.eq.s32.totalorder %s36, 1
      %p358 = scmp.ne.s32.totalorder %s353, %s355
      %p359 = scmp.eq.s32.totalorder %s36, 0
      %p360 = por %p358, %p359
      %p361 = scmp.ne.s32.totalorder %s353, %s355
      %p362 = scmp.eq.s32.totalorder %s41, 1
      %p363 = por %p361, %p362
      %p364 = scmp.ne.s32.totalorder %s355, %s356
      %p365 = scmp.eq.s32.totalorder %s41, 0
      %p366 = por %p364, %p365
      %p367 = scmp.ne.s32.totalorder %s355, %s356
      %p368 = scmp.eq.s32.totalorder %s42, 1
      %p369 = por %p367, %p368
      %p371 = scmp.ne.s32.totalorder %s356, %s370
      %p372 = scmp.eq.s32.totalorder %s42, 0
      %p373 = por %p371, %p372
      %s375 = sadd.s32 %s374, 1
      %p378 = scmp.eq.s32.totalorder %s36, 1
      %p379 = scmp.ne.s32.totalorder %s374, %s376
      %p380 = scmp.eq.s32.totalorder %s36, 0
      %p381 = por %p379, %p380
      %p382 = scmp.ne.s32.totalorder %s374, %s376
      %p383 = scmp.eq.s32.totalorder %s41, 1
      %p384 = por %p382, %p383
      %p385 = scmp.ne.s32.totalorder %s376, %s377
      %p386 = scmp.eq.s32.totalorder %s41, 0
      %p387 = por %p385, %p386
      %p388 = scmp.ne.s32.totalorder %s376, %s377
      %p389 = scmp.eq.s32.totalorder %s42, 1
      %p390 = por %p388, %p389
      %p392 = scmp.ne.s32.totalorder %s377, %s391
      %p393 = scmp.eq.s32.totalorder %s42, 0
      %p394 = por %p392, %p393
      %s396 = sadd.s32 %s395, 1
      %p399 = scmp.eq.s32.totalorder %s36, 1
      %p400 = scmp.ne.s32.totalorder %s395, %s397
      %p401 = scmp.eq.s32.totalorder %s36, 0
      %p402 = por %p400, %p401
      %p403 = scmp.ne.s32.totalorder %s395, %s397
      %p404 = scmp.eq.s32.totalorder %s41, 1
      %p405 = por %p403, %p404
      %p406 = scmp.ne.s32.totalorder %s397, %s398
      %p407 = scmp.eq.s32.totalorder %s41, 0
      %p408 = por %p406, %p407
      %p409 = scmp.ne.s32.totalorder %s397, %s398
      %p410 = scmp.eq.s32.totalorder %s42, 1
      %p411 = por %p409, %p410
      %p413 = scmp.ne.s32.totalorder %s398, %s412
      %p414 = scmp.eq.s32.totalorder %s42, 0
      %p415 = por %p413, %p414
      %s417 = sadd.s32 %s416, 1
      %p420 = scmp.eq.s32.totalorder %s36, 1
      %p421 = scmp.ne.s32.totalorder %s416, %s418
      %p422 = scmp.eq.s32.totalorder %s36, 0
      %p423 = por %p421, %p422
      %p424 = scmp.ne.s32.totalorder %s416, %s418
      %p425 = scmp.eq.s32.totalorder %s41, 1
      %p426 = por %p424, %p425
      %p427 = scmp.ne.s32.totalorder %s418, %s419
      %p428 = scmp.eq.s32.totalorder %s41, 0
      %p429 = por %p427, %p428
      %p430 = scmp.ne.s32.totalorder %s418, %s419
      %p431 = scmp.eq.s32.totalorder %s42, 1
      %p432 = por %p430, %p431
      %p434 = scmp.ne.s32.totalorder %s419, %s433
      %p435 = scmp.eq.s32.totalorder %s42, 0
      %p436 = por %p434, %p435
      %s438 = sadd.s32 %s437, 1
      %p441 = scmp.eq.s32.totalorder %s36, 1
      %p442 = scmp.ne.s32.totalorder %s437, %s439
      %p443 = scmp.eq.s32.totalorder %s36, 0
      %p444 = por %p442, %p443
      %p445 = scmp.ne.s32.totalorder %s437, %s439
      %p446 = scmp.eq.s32.totalorder %s41, 1
      %p447 = por %p445, %p446
      %p448 = scmp.ne.s32.totalorder %s439, %s440
      %p449 = scmp.eq.s32.totalorder %s41, 0
      %p450 = por %p448, %p449
      %p451 = scmp.ne.s32.totalorder %s439, %s440
      %p452 = scmp.eq.s32.totalorder %s42, 1
      %p453 = por %p451, %p452
      %p455 = scmp.ne.s32.totalorder %s440, %s454
      %p456 = scmp.eq.s32.totalorder %s42, 0
      %p457 = por %p455, %p456
      %s458 = ssub.s32 %s36, %s43
      %p459 = scmp.eq.s32.totalorder %s458, 0
      %s461 = sadd.s32 %s460, 1
      %s462 = scalar_select %p459, %s460, %s461
      %p465 = pneg %p459
      %p466 = scmp.eq.s32.totalorder %s36, 1
      %p467 = por %p465, %p466
      %p468 = scmp.ne.s32.totalorder %s460, %s463
      %p469 = scmp.eq.s32.totalorder %s36, 0
      %p470 = por %p468, %p469
      %p471 = scmp.ne.s32.totalorder %s460, %s463
      %p472 = scmp.eq.s32.totalorder %s41, 1
      %p473 = por %p471, %p472
      %p474 = scmp.ne.s32.totalorder %s463, %s464
      %p475 = scmp.eq.s32.totalorder %s41, 0
      %p476 = por %p474, %p475
      %p477 = scmp.ne.s32.totalorder %s463, %s464
      %p478 = scmp.eq.s32.totalorder %s42, 1
      %p479 = por %p477, %p478
      %p481 = scmp.ne.s32.totalorder %s464, %s480
      %p482 = scmp.eq.s32.totalorder %s42, 0
      %p483 = por %p481, %p482
      %p484 = scmp.le.s32.totalorder 1, %s36
      %p485 = scmp.lt.s32.totalorder %s36, 3
      %p486 = pnand %p484, %p485
      %p487 = pneg %p486
      // Predicated region
      $region9: #{tpu_custom_call.1} parent=5 // pred_check
        _
      $region10: #{tpu_custom_call.1} parent=5 // pred_check_branch
        %489 = sbr.rel (%p486) target = $region12
      $region11: #{tpu_custom_call.1} parent=5 // pred_region
        %s490 = ssub.s32 %s36, 1
        // Predicated region
        $region13: #{tpu_custom_call.1} parent=11 // pred_check
          %p491 = pneg %p135
        $region14: #{tpu_custom_call.1} parent=11 // pred_check_branch
          %493 = sbr.rel (%p491) target = $region16
        $region15: #{tpu_custom_call.1} parent=11 // pred_region
          _
        $region16: #{tpu_custom_call.1} parent=11 // pred_fallthru
          _
        // Predicated region
        $region17: #{tpu_custom_call.1} parent=11 // pred_check
          %p494 = pneg %p156
        $region18: #{tpu_custom_call.1} parent=11 // pred_check_branch
          %496 = sbr.rel (%p494) target = $region20
        $region19: #{tpu_custom_call.1} parent=11 // pred_region
          %s498 = ssub.s32 16, 16
          %499 = vsyncadd [#allocation6], %s498
          %s501 = sshll.u32 [#allocation5], 4
          %s502 = int_to_ptr.vmem [resolvable:$true] %s501
          %504 = dma.hbm_to_vmem [thread:$0]  %s4, 16, %s502, [#allocation6]
        $region20: #{tpu_custom_call.1} parent=11 // pred_fallthru
          _
        // Predicated region
        $region21: #{tpu_custom_call.1} parent=11 // pred_check
          %p505 = pneg %p177
        $region22: #{tpu_custom_call.1} parent=11 // pred_check_branch
          %507 = sbr.rel (%p505) target = $region24
        $region23: #{tpu_custom_call.1} parent=11 // pred_region
          %s509 = ssub.s32 256, 256
          %510 = vsyncadd [#allocation6], %s509
          %s511 = sshll.u32 [#allocation7], 4
          %s512 = int_to_ptr.vmem [resolvable:$true] %s511
          %517 = dma.hbm_to_vmem [thread:$0]  %s5, 256, %s512, [#allocation6], 64, 64, 4
        $region24: #{tpu_custom_call.1} parent=11 // pred_fallthru
          _
        // Predicated region
        $region25: #{tpu_custom_call.1} parent=11 // pred_check
          %p518 = pneg %p198
        $region26: #{tpu_custom_call.1} parent=11 // pred_check_branch
          %520 = sbr.rel (%p518) target = $region28
        $region27: #{tpu_custom_call.1} parent=11 // pred_region
          %s522 = ssub.s32 16, 16
          %523 = vsyncadd [#allocation9], %s522
          %s525 = sshll.u32 [#allocation8], 4
          %s526 = int_to_ptr.vmem [resolvable:$true] %s525
          %528 = dma.hbm_to_vmem [thread:$0]  %s6, 16, %s526, [#allocation9]
        $region28: #{tpu_custom_call.1} parent=11 // pred_fallthru
          _
        // Predicated region
        $region29: #{tpu_custom_call.1} parent=11 // pred_check
          %p529 = pneg %p219
        $region30: #{tpu_custom_call.1} parent=11 // pred_check_branch
          %531 = sbr.rel (%p529) target = $region32
        $region31: #{tpu_custom_call.1} parent=11 // pred_region
          %s533 = ssub.s32 256, 256
          %534 = vsyncadd [#allocation9], %s533
          %s535 = sshll.u32 [#allocation10], 4
          %s536 = int_to_ptr.vmem [resolvable:$true] %s535
          %541 = dma.hbm_to_vmem [thread:$0]  %s7, 256, %s536, [#allocation9], 64, 64, 4
        $region32: #{tpu_custom_call.1} parent=11 // pred_fallthru
          _
        // Predicated region
        $region33: #{tpu_custom_call.1} parent=11 // pred_check
          %p542 = pneg %p240
        $region34: #{tpu_custom_call.1} parent=11 // pred_check_branch
          %544 = sbr.rel (%p542) target = $region36
        $region35: #{tpu_custom_call.1} parent=11 // pred_region
          %s546 = ssub.s32 16, 16
          %547 = vsyncadd [#allocation12], %s546
          %s549 = sshll.u32 [#allocation11], 4
          %s550 = int_to_ptr.vmem [resolvable:$true] %s549
          %552 = dma.hbm_to_vmem [thread:$0]  %s8, 16, %s550, [#allocation12]
        $region36: #{tpu_custom_call.1} parent=11 // pred_fallthru
          _
        // Predicated region
        $region37: #{tpu_custom_call.1} parent=11 // pred_check
          %p553 = pneg %p261
        $region38: #{tpu_custom_call.1} parent=11 // pred_check_branch
          %555 = sbr.rel (%p553) target = $region40
        $region39: #{tpu_custom_call.1} parent=11 // pred_region
          _
        $region40: #{tpu_custom_call.1} parent=11 // pred_fallthru
          _
        // Predicated region
        $region41: #{tpu_custom_call.1} parent=11 // pred_check
          %p556 = pneg %p282
        $region42: #{tpu_custom_call.1} parent=11 // pred_check_branch
          %558 = sbr.rel (%p556) target = $region44
        $region43: #{tpu_custom_call.1} parent=11 // pred_region
          %s560 = ssub.s32 16, 16
          %561 = vsyncadd [#allocation12], %s560
          %s563 = sshll.u32 [#allocation13], 4
          %s564 = int_to_ptr.vmem [resolvable:$true] %s563
          %566 = dma.hbm_to_vmem [thread:$0]  %s10, 16, %s564, [#allocation12]
        $region44: #{tpu_custom_call.1} parent=11 // pred_fallthru
          _
        // Predicated region
        $region45: #{tpu_custom_call.1} parent=11 // pred_check
          %p567 = pneg %p303
        $region46: #{tpu_custom_call.1} parent=11 // pred_check_branch
          %569 = sbr.rel (%p567) target = $region48
        $region47: #{tpu_custom_call.1} parent=11 // pred_region
          %s571 = ssub.s32 256, 256
          %572 = vsyncadd [#allocation15], %s571
          %s573 = sshll.u32 [#allocation14], 4
          %s574 = int_to_ptr.vmem [resolvable:$true] %s573
          %579 = dma.hbm_to_vmem [thread:$0]  %s11, 256, %s574, [#allocation15], 64, 64, 4
        $region48: #{tpu_custom_call.1} parent=11 // pred_fallthru
          _
        // Predicated region
        $region49: #{tpu_custom_call.1} parent=11 // pred_check
          %p580 = pneg %p324
        $region50: #{tpu_custom_call.1} parent=11 // pred_check_branch
          %582 = sbr.rel (%p580) target = $region52
        $region51: #{tpu_custom_call.1} parent=11 // pred_region
          %s584 = ssub.s32 16, 16
          %585 = vsyncadd [#allocation15], %s584
          %s587 = sshll.u32 [#allocation16], 4
          %s588 = int_to_ptr.vmem [resolvable:$true] %s587
          %590 = dma.hbm_to_vmem [thread:$0]  %s12, 16, %s588, [#allocation15]
        $region52: #{tpu_custom_call.1} parent=11 // pred_fallthru
          _
        // Predicated region
        $region53: #{tpu_custom_call.1} parent=11 // pred_check
          %p591 = pneg %p345
        $region54: #{tpu_custom_call.1} parent=11 // pred_check_branch
          %593 = sbr.rel (%p591) target = $region56
        $region55: #{tpu_custom_call.1} parent=11 // pred_region
          %s595 = ssub.s32 16, 16
          %596 = vsyncadd [#allocation18], %s595
          %s598 = sshll.u32 [#allocation17], 4
          %s599 = int_to_ptr.vmem [resolvable:$true] %s598
          %601 = dma.hbm_to_vmem [thread:$0]  %s13, 16, %s599, [#allocation18]
        $region56: #{tpu_custom_call.1} parent=11 // pred_fallthru
          _
        // Predicated region
        $region57: #{tpu_custom_call.1} parent=11 // pred_check
          %p602 = pneg %p366
        $region58: #{tpu_custom_call.1} parent=11 // pred_check_branch
          %604 = sbr.rel (%p602) target = $region60
        $region59: #{tpu_custom_call.1} parent=11 // pred_region
          _
        $region60: #{tpu_custom_call.1} parent=11 // pred_fallthru
          _
        // Predicated region
        $region61: #{tpu_custom_call.1} parent=11 // pred_check
          %p605 = pneg %p387
        $region62: #{tpu_custom_call.1} parent=11 // pred_check_branch
          %607 = sbr.rel (%p605) target = $region64
        $region63: #{tpu_custom_call.1} parent=11 // pred_region
          _
        $region64: #{tpu_custom_call.1} parent=11 // pred_fallthru
          _
        // Predicated region
        $region65: #{tpu_custom_call.1} parent=11 // pred_check
          %p608 = pneg %p408
        $region66: #{tpu_custom_call.1} parent=11 // pred_check_branch
          %610 = sbr.rel (%p608) target = $region68
        $region67: #{tpu_custom_call.1} parent=11 // pred_region
          _
        $region68: #{tpu_custom_call.1} parent=11 // pred_fallthru
          _
        // Predicated region
        $region69: #{tpu_custom_call.1} parent=11 // pred_check
          %p611 = pneg %p429
        $region70: #{tpu_custom_call.1} parent=11 // pred_check_branch
          %613 = sbr.rel (%p611) target = $region72
        $region71: #{tpu_custom_call.1} parent=11 // pred_region
          _
        $region72: #{tpu_custom_call.1} parent=11 // pred_fallthru
          _
        // Predicated region
        $region73: #{tpu_custom_call.1} parent=11 // pred_check
          %p614 = pneg %p450
        $region74: #{tpu_custom_call.1} parent=11 // pred_check_branch
          %616 = sbr.rel (%p614) target = $region76
        $region75: #{tpu_custom_call.1} parent=11 // pred_region
          _
        $region76: #{tpu_custom_call.1} parent=11 // pred_fallthru
          _
      $region12: #{tpu_custom_call.1} parent=5 // pred_fallthru
        _
      %p617 = scmp.lt.s32.totalorder %s36, 2
      // Predicated region
      $region77: #{tpu_custom_call.1} parent=5 // pred_check
        %p618 = pneg %p617
      $region78: #{tpu_custom_call.1} parent=5 // pred_check_branch
        %620 = sbr.rel (%p618) target = $region80
      $region79: #{tpu_custom_call.1} parent=5 // pred_region
        // Predicated region
        $region81: #{tpu_custom_call.1} parent=79 // pred_check
          %p621 = pneg %p56
        $region82: #{tpu_custom_call.1} parent=79 // pred_check_branch
          %623 = sbr.rel (%p621) target = $region84
        $region83: #{tpu_custom_call.1} parent=79 // pred_region
          %p624 = scmp.lt.s32.totalorder %s36, 1
          %s625 = scalar_select %p624, %s36, 1
          %s626 = smul.addr %s625, 8
          %s627 = scalar_lea.vmem %s0, %s626
        $region84: #{tpu_custom_call.1} parent=79 // pred_fallthru
          _
        // Predicated region
        $region85: #{tpu_custom_call.1} parent=79 // pred_check
          %p628 = pneg %p82
        $region86: #{tpu_custom_call.1} parent=79 // pred_check_branch
          %630 = sbr.rel (%p628) target = $region88
        $region87: #{tpu_custom_call.1} parent=79 // pred_region
          %s631 = sand.u32 %s72, 1
          %s632 = scalar_lea.sflag [#allocation3], %s631
          %s633 = sand.u32 %s72, 1
          %s634 = smul.addr %s633, 8
          %s635 = scalar_lea.vmem [#allocation2], %s634
          %s637 = ssub.s32 128, 128
          %638 = vsyncadd %s632, %s637
          %s639 = smul.addr %s36, 128
          %s640 = scalar_lea.hbm %s1, %s639
          %s642 = sshll.u32 %s635, 4
          %s643 = int_to_ptr.vmem [resolvable:$true] %s642
          %645 = dma.hbm_to_vmem [thread:$0]  %s640, 128, %s643, %s632
        $region88: #{tpu_custom_call.1} parent=79 // pred_fallthru
          _
        // Predicated region
        $region89: #{tpu_custom_call.1} parent=79 // pred_check
          %p646 = pneg %p108
        $region90: #{tpu_custom_call.1} parent=79 // pred_check_branch
          %648 = sbr.rel (%p646) target = $region92
        $region91: #{tpu_custom_call.1} parent=79 // pred_region
          %p649 = scmp.lt.s32.totalorder %s36, 1
          %s650 = scalar_select %p649, %s36, 1
          %s651 = smul.addr %s650, 2
          %s652 = smul.addr %s651, 8
          %s653 = scalar_lea.vmem %s2, %s652
        $region92: #{tpu_custom_call.1} parent=79 // pred_fallthru
          _
      $region80: #{tpu_custom_call.1} parent=5 // pred_fallthru
        _
      %p654 = scmp.le.s32.totalorder 1, %s36
      %p655 = scmp.lt.s32.totalorder %s36, 3
      %p656 = pnand %p654, %p655
      %p657 = pneg %p656
      // Predicated region
      $region93: #{tpu_custom_call.1} parent=5 // pred_check
        _
      $region94: #{tpu_custom_call.1} parent=5 // pred_check_branch
        %659 = sbr.rel (%p656) target = $region96
      $region95: #{tpu_custom_call.1} parent=5 // pred_region
        %s660 = ssub.s32 %s36, 1
        %s661 = sand.u32 %s75, 1
        %s662 = scalar_lea.sflag [#allocation3], %s661
        %s663 = sand.u32 %s75, 1
        %s664 = smul.addr %s663, 8
        %s665 = scalar_lea.vmem [#allocation2], %s664
        // Predicated region
        $region97: #{tpu_custom_call.1} parent=95 // pred_check
          %p666 = pneg %p88
        $region98: #{tpu_custom_call.1} parent=95 // pred_check_branch
          %668 = sbr.rel (%p666) target = $region100
        $region99: #{tpu_custom_call.1} parent=95 // pred_region
          %669 = dma.done %s662, 128
        $region100: #{tpu_custom_call.1} parent=95 // pred_fallthru
          _
        // Predicated region
        $region101: #{tpu_custom_call.1} parent=95 // pred_check
          %p670 = pneg %p156
        $region102: #{tpu_custom_call.1} parent=95 // pred_check_branch
          %672 = sbr.rel (%p670) target = $region104
        $region103: #{tpu_custom_call.1} parent=95 // pred_region
          %673 = dma.done [#allocation6], 16
        $region104: #{tpu_custom_call.1} parent=95 // pred_fallthru
          _
        // Predicated region
        $region105: #{tpu_custom_call.1} parent=95 // pred_check
          %p674 = pneg %p177
        $region106: #{tpu_custom_call.1} parent=95 // pred_check_branch
          %676 = sbr.rel (%p674) target = $region108
        $region107: #{tpu_custom_call.1} parent=95 // pred_region
          %677 = dma.done [#allocation6], 256
        $region108: #{tpu_custom_call.1} parent=95 // pred_fallthru
          _
        // Predicated region
        $region109: #{tpu_custom_call.1} parent=95 // pred_check
          %p678 = pneg %p198
        $region110: #{tpu_custom_call.1} parent=95 // pred_check_branch
          %680 = sbr.rel (%p678) target = $region112
        $region111: #{tpu_custom_call.1} parent=95 // pred_region
          %681 = dma.done [#allocation9], 16
        $region112: #{tpu_custom_call.1} parent=95 // pred_fallthru
          _
        // Predicated region
        $region113: #{tpu_custom_call.1} parent=95 // pred_check
          %p682 = pneg %p219
        $region114: #{tpu_custom_call.1} parent=95 // pred_check_branch
          %684 = sbr.rel (%p682) target = $region116
        $region115: #{tpu_custom_call.1} parent=95 // pred_region
          %685 = dma.done [#allocation9], 256
        $region116: #{tpu_custom_call.1} parent=95 // pred_fallthru
          _
        // Predicated region
        $region117: #{tpu_custom_call.1} parent=95 // pred_check
          %p686 = pneg %p240
        $region118: #{tpu_custom_call.1} parent=95 // pred_check_branch
          %688 = sbr.rel (%p686) target = $region120
        $region119: #{tpu_custom_call.1} parent=95 // pred_region
          %689 = dma.done [#allocation12], 16
        $region120: #{tpu_custom_call.1} parent=95 // pred_fallthru
          _
        // Predicated region
        $region121: #{tpu_custom_call.1} parent=95 // pred_check
          %p690 = pneg %p282
        $region122: #{tpu_custom_call.1} parent=95 // pred_check_branch
          %692 = sbr.rel (%p690) target = $region124
        $region123: #{tpu_custom_call.1} parent=95 // pred_region
          %693 = dma.done [#allocation12], 16
        $region124: #{tpu_custom_call.1} parent=95 // pred_fallthru
          _
        // Predicated region
        $region125: #{tpu_custom_call.1} parent=95 // pred_check
          %p694 = pneg %p303
        $region126: #{tpu_custom_call.1} parent=95 // pred_check_branch
          %696 = sbr.rel (%p694) target = $region128
        $region127: #{tpu_custom_call.1} parent=95 // pred_region
          %697 = dma.done [#allocation15], 256
        $region128: #{tpu_custom_call.1} parent=95 // pred_fallthru
          _
        // Predicated region
        $region129: #{tpu_custom_call.1} parent=95 // pred_check
          %p698 = pneg %p324
        $region130: #{tpu_custom_call.1} parent=95 // pred_check_branch
          %700 = sbr.rel (%p698) target = $region132
        $region131: #{tpu_custom_call.1} parent=95 // pred_region
          %701 = dma.done [#allocation15], 16
        $region132: #{tpu_custom_call.1} parent=95 // pred_fallthru
          _
        // Predicated region
        $region133: #{tpu_custom_call.1} parent=95 // pred_check
          %p702 = pneg %p345
        $region134: #{tpu_custom_call.1} parent=95 // pred_check_branch
          %704 = sbr.rel (%p702) target = $region136
        $region135: #{tpu_custom_call.1} parent=95 // pred_region
          %705 = dma.done [#allocation18], 16
        $region136: #{tpu_custom_call.1} parent=95 // pred_fallthru
          _
        %p706 = scmp.lt.s32.totalorder %s41, 1
        %s707 = scalar_select %p706, %s41, 1
        %s708 = smul.addr %s707, 8
        %s709 = scalar_lea.vmem %s0, %s708
        %p710 = pneg %p62
        %p711 = pneg %p59
        %s712 = sand.u32 %s75, 1
        %s713 = scalar_lea.sflag [#allocation3], %s712
        %s714 = sand.u32 %s75, 1
        %s715 = smul.addr %s714, 8
        %s716 = scalar_lea.vmem [#allocation2], %s715
        %p717 = pneg %p88
        %p718 = pneg %p85
        %p719 = scmp.lt.s32.totalorder %s41, 1
        %s720 = scalar_select %p719, %s41, 1
        %s721 = smul.addr %s720, 2
        %s722 = smul.addr %s721, 8
        %s723 = scalar_lea.vmem %s2, %s722
        %p724 = pneg %p114
        %p725 = pneg %p111
        %p726 = pneg %p135
        %p727 = pneg %p132
        %p728 = pneg %p156
        %p729 = pneg %p153
        %p730 = pneg %p177
        %p731 = pneg %p174
        %p732 = pneg %p198
        %p733 = pneg %p195
        %p734 = pneg %p219
        %p735 = pneg %p216
        %p736 = pneg %p240
        %p737 = pneg %p237
        %p738 = pneg %p261
        %p739 = pneg %p258
        %p740 = pneg %p282
        %p741 = pneg %p279
        %p742 = pneg %p303
        %p743 = pneg %p300
        %p744 = pneg %p324
        %p745 = pneg %p321
        %p746 = pneg %p345
        %p747 = pneg %p342
        %p748 = pneg %p366
        %p749 = pneg %p363
        %p750 = pneg %p387
        %p751 = pneg %p384
        %p752 = pneg %p408
        %p753 = pneg %p405
        %p754 = pneg %p429
        %p755 = pneg %p426
        %p756 = pneg %p450
        %p757 = pneg %p447
        %p758 = pneg %p476
        %p759 = pneg %p473
        %s760 = sand.u32 %s463, 1
        %s761 = scalar_lea.sflag [#allocation4], %s760
        %s762 = sand.u32 %s463, 1
        %s763 = smul.addr %s762, 8
        %s764 = scalar_lea.vmem [#allocation19], %s763
        %p765 = scmp.lt.s32.totalorder %s41, 1
        %s766 = scalar_select %p765, %s41, 1
        %s767 = smul.addr %s766, 8
        %s768 = scalar_lea.vmem %s0, %s767
        %p769 = scmp.lt.s32.totalorder %s41, 1
        %s770 = scalar_select %p769, %s41, 1
        %s771 = smul.addr %s770, 2
        %s772 = smul.addr %s771, 8
        %s773 = scalar_lea.vmem %s2, %s772
        %v775 = vld [vmem:[%s768] sm:$0xff]
        %v776 = vld [vmem:[%s665] sm:$0xff]
        %v777 = vld [vmem:[%s773] sm:$0xff]
        %v778 = vld [vmem:[%s773 + $0x8] sm:$0xff]
        %v779 = vld [vmem:[%s3] sm:$0x1]
        %v780 = vld [vmem:[#allocation5] sm:$0x1]
        %vm781 = vcmask 261120
        %v782 = vsel %vm781, %v775, 0.0
        %783 = vadd.xlane.f32.xlu0 %v782
        %v784 = vpop.xlane.xlu0 %783
        %v785 = vrcp.pop 32.0
        %v786 = vmul.f32 %v784, %v785
        %v787 = vsub.f32 %v775, %v786
        %v788 = vmul.f32 %v787, %v787
        %v789 = vsel %vm781, %v788, 0.0
        %790 = vadd.xlane.f32.xlu0 %v789
        %v791 = vpop.xlane.xlu0 %790
        %v792 = vmul.f32 %v791, %v785
        %v793 = vadd.f32 %v792, 1e-05
        %v794 = vrsqrt.pop %v793
        %v795 = vmul.f32 %v787, %v794
        %v797 = vlaneseq
        %v798 = vshrl.u32 %v797, 7
        %v799 = vsub.s32 0, %v798
        %v800 = vrot.slane %v779, %v799
        %v802 = vmul.f32 %v795, %v800
        %v804 = vlaneseq
        %v805 = vshrl.u32 %v804, 7
        %v806 = vsub.s32 0, %v805
        %v807 = vrot.slane %v780, %v806
        %v809 = vadd.f32 %v802, %v807
        %v810 = vadd.f32 %v809, %v776
        %v811 = vpack.c.bf16 %v810, %v810
        %v812 = vpack.c.bf16 %v778, %v777
        %v813 = vld [vmem:[#allocation7] sm:$0xf]
        %v814 = vld [vmem:[#allocation7 + $0x4] sm:$0xf]
        %v815 = vld [vmem:[#allocation7 + $0x8] sm:$0xf]
        %v816 = vld [vmem:[#allocation7 + $0xc] sm:$0xf]
        %v817 = vld [vmem:[#allocation8] sm:$0x1]
        %v819 = vlaneseq
        %v820 = vshrl.u32 %v819, 7
        %v821 = vsub.s32 0, %v820
        %v822 = vrot.slane %v817, %v821
        %v828 = vunpack.c.l.b16 %v813
        %v829 = vunpack.c.l.b16 %v814
        %v830 = vunpack.c.l.b16 %v815
        %v831 = vunpack.c.l.b16 %v816
        %v832 = vpack.c.b16 %v829, %v828
        %v833 = vpack.c.b16 %v831, %v830
        %v837 = vsel %vm781, %v811, 0
        %839 = vmatprep.subr.bf16.mxu0 0
        %840 = vmatpush1.bf16.msra.mxu0 %v832
        %841 = vmatprep.subr.bf16.mxu0 0
        %842 = vmatpush1.bf16.msra.mxu0 %v833
        %843 = vmatprep.subr.bf16.mxu0 0
        %844 = vmatpush1.bf16.msra.mxu0 0
        %845 = vmatprep.subr.bf16.mxu0 0
        %846 = vmatpush1.bf16.msra.mxu0 0
        %847 = vmatprep.subr.bf16.mxu0 0
        %848 = vmatpush1.bf16.msra.mxu0 0
        %849 = vmatprep.subr.bf16.mxu0 0
        %850 = vmatpush1.bf16.msra.mxu0 0
        %851 = vmatprep.subr.bf16.mxu0 0
        %852 = vmatpush1.bf16.msra.mxu0 0
        %853 = vmatprep.subr.bf16.mxu0 0
        %854 = vmatpush1.bf16.msra.mxu0 0
        %855 = vmatprep.subr.bf16.mxu0 0
        %856 = vmatpush1.bf16.msra.mxu0 0
        %857 = vmatprep.subr.bf16.mxu0 0
        %858 = vmatpush1.bf16.msra.mxu0 0
        %859 = vmatprep.subr.bf16.mxu0 0
        %860 = vmatpush1.bf16.msra.mxu0 0
        %861 = vmatprep.subr.bf16.mxu0 0
        %862 = vmatpush1.bf16.msra.mxu0 0
        %863 = vmatprep.subr.bf16.mxu0 0
        %864 = vmatpush1.bf16.msra.mxu0 0
        %865 = vmatprep.subr.bf16.mxu0 0
        %866 = vmatpush1.bf16.msra.mxu0 0
        %867 = vmatprep.subr.bf16.mxu0 0
        %868 = vmatpush1.bf16.msra.mxu0 0
        %869 = vmatprep.subr.bf16.mxu0 0
        %870 = vmatpush1.bf16.msra.mxu0 0
        %871 = vmatprep.mubr.bf16.mxu0 0
        %872 = vmatmul.mubr.bf16.gmra.mrb[0].mxu0 %v837
        %v873 = vpop.f32.mrb[0].mxu0
        %v874 = vadd.f32 %v822, %v873
        %v875 = vpop.f32.mrb[0].mxu0
        %v876 = vpop.f32.mrb[0].mxu0
        %v877 = vpop.f32.mrb[0].mxu0
        %878 = vdwg.mxu0
        %v879 = vld [vmem:[#allocation10] sm:$0xf]
        %v880 = vld [vmem:[#allocation10 + $0x4] sm:$0xf]
        %v881 = vld [vmem:[#allocation10 + $0x8] sm:$0xf]
        %v882 = vld [vmem:[#allocation10 + $0xc] sm:$0xf]
        %v883 = vld [vmem:[#allocation11] sm:$0x1]
        %v885 = vlaneseq
        %v886 = vshrl.u32 %v885, 7
        %v887 = vsub.s32 0, %v886
        %v888 = vrot.slane %v883, %v887
        %v894 = vunpack.c.l.b16 %v879
        %v895 = vunpack.c.l.b16 %v880
        %v896 = vunpack.c.l.b16 %v881
        %v897 = vunpack.c.l.b16 %v882
        %v898 = vpack.c.b16 %v895, %v894
        %v899 = vpack.c.b16 %v897, %v896
        %v903 = vsel %vm781, %v812, 0
        %905 = vmatprep.subr.bf16.mxu0 0
        %906 = vmatpush1.bf16.msra.mxu0 %v898
        %907 = vmatprep.subr.bf16.mxu0 0
        %908 = vmatpush1.bf16.msra.mxu0 %v899
        %909 = vmatprep.subr.bf16.mxu0 0
        %910 = vmatpush1.bf16.msra.mxu0 0
        %911 = vmatprep.subr.bf16.mxu0 0
        %912 = vmatpush1.bf16.msra.mxu0 0
        %913 = vmatprep.subr.bf16.mxu0 0
        %914 = vmatpush1.bf16.msra.mxu0 0
        %915 = vmatprep.subr.bf16.mxu0 0
        %916 = vmatpush1.bf16.msra.mxu0 0
        %917 = vmatprep.subr.bf16.mxu0 0
        %918 = vmatpush1.bf16.msra.mxu0 0
        %919 = vmatprep.subr.bf16.mxu0 0
        %920 = vmatpush1.bf16.msra.mxu0 0
        %921 = vmatprep.subr.bf16.mxu0 0
        %922 = vmatpush1.bf16.msra.mxu0 0
        %923 = vmatprep.subr.bf16.mxu0 0
        %924 = vmatpush1.bf16.msra.mxu0 0
        %925 = vmatprep.subr.bf16.mxu0 0
        %926 = vmatpush1.bf16.msra.mxu0 0
        %927 = vmatprep.subr.bf16.mxu0 0
        %928 = vmatpush1.bf16.msra.mxu0 0
        %929 = vmatprep.subr.bf16.mxu0 0
        %930 = vmatpush1.bf16.msra.mxu0 0
        %931 = vmatprep.subr.bf16.mxu0 0
        %932 = vmatpush1.bf16.msra.mxu0 0
        %933 = vmatprep.subr.bf16.mxu0 0
        %934 = vmatpush1.bf16.msra.mxu0 0
        %935 = vmatprep.subr.bf16.mxu0 0
        %936 = vmatpush1.bf16.msra.mxu0 0
        %937 = vmatprep.mubr.bf16.mxu0 0
        %938 = vmatmul.mubr.bf16.gmra.mrb[0].mxu0 %v903
        %v939 = vpop.f32.mrb[0].mxu0
        %v940 = vadd.f32 %v888, %v939
        %v941 = vpop.f32.mrb[0].mxu0
        %v942 = vpop.f32.mrb[0].mxu0
        %v943 = vadd.f32 %v888, %v942
        %v944 = vpop.f32.mrb[0].mxu0
        %945 = vdwg.mxu0
        %v946 = vld [vmem:[%s9] sm:$0xf]
        %v947 = vld [vmem:[%s9 + $0x4] sm:$0xf]
        %v948 = vld [vmem:[%s9 + $0x8] sm:$0xf]
        %v949 = vld [vmem:[%s9 + $0xc] sm:$0xf]
        %v950 = vld [vmem:[#allocation13] sm:$0x1]
        %v952 = vlaneseq
        %v953 = vshrl.u32 %v952, 7
        %v954 = vsub.s32 0, %v953
        %v955 = vrot.slane %v950, %v954
        %v961 = vunpack.c.l.b16 %v946
        %v962 = vunpack.c.l.b16 %v947
        %v963 = vunpack.c.l.b16 %v948
        %v964 = vunpack.c.l.b16 %v949
        %v965 = vpack.c.b16 %v962, %v961
        %v966 = vpack.c.b16 %v964, %v963
        %969 = vmatprep.subr.bf16.mxu0 0
        %970 = vmatpush1.bf16.msra.mxu0 %v965
        %971 = vmatprep.subr.bf16.mxu0 0
        %972 = vmatpush1.bf16.msra.mxu0 %v966
        %973 = vmatprep.subr.bf16.mxu0 0
        %974 = vmatpush1.bf16.msra.mxu0 0
        %975 = vmatprep.subr.bf16.mxu0 0
        %976 = vmatpush1.bf16.msra.mxu0 0
        %977 = vmatprep.subr.bf16.mxu0 0
        %978 = vmatpush1.bf16.msra.mxu0 0
        %979 = vmatprep.subr.bf16.mxu0 0
        %980 = vmatpush1.bf16.msra.mxu0 0
        %981 = vmatprep.subr.bf16.mxu0 0
        %982 = vmatpush1.bf16.msra.mxu0 0
        %983 = vmatprep.subr.bf16.mxu0 0
        %984 = vmatpush1.bf16.msra.mxu0 0
        %985 = vmatprep.subr.bf16.mxu0 0
        %986 = vmatpush1.bf16.msra.mxu0 0
        %987 = vmatprep.subr.bf16.mxu0 0
        %988 = vmatpush1.bf16.msra.mxu0 0
        %989 = vmatprep.subr.bf16.mxu0 0
        %990 = vmatpush1.bf16.msra.mxu0 0
        %991 = vmatprep.subr.bf16.mxu0 0
        %992 = vmatpush1.bf16.msra.mxu0 0
        %993 = vmatprep.subr.bf16.mxu0 0
        %994 = vmatpush1.bf16.msra.mxu0 0
        %995 = vmatprep.subr.bf16.mxu0 0
        %996 = vmatpush1.bf16.msra.mxu0 0
        %997 = vmatprep.subr.bf16.mxu0 0
        %998 = vmatpush1.bf16.msra.mxu0 0
        %999 = vmatprep.subr.bf16.mxu0 0
        %1000 = vmatpush1.bf16.msra.mxu0 0
        %1001 = vmatprep.mubr.bf16.mxu0 0
        %1002 = vmatmul.mubr.bf16.gmra.mrb[0].mxu0 %v903
        %v1003 = vpop.f32.mrb[0].mxu0
        %v1004 = vadd.f32 %v955, %v1003
        %v1005 = vpop.f32.mrb[0].mxu0
        %v1006 = vpop.f32.mrb[0].mxu0
        %v1007 = vadd.f32 %v955, %v1006
        %v1008 = vpop.f32.mrb[0].mxu0
        %1009 = vdwg.mxu0
        %v1010 = vpack.c.bf16 %v874, %v874
        %v1011 = vpack.c.bf16 %v943, %v940
        %v1012 = vpack.c.bf16 %v1007, %v1004
        %vm1013 = vcmask 64512
        %v1015 = vsel %vm1013, %v1010, 0
        %v1018 = vsel %vm1013, %v1011, 0
        %1020 = vmatprep.subr.bf16.mxu0 0
        %1021 = vmatpush1.bf16.xpose.msra.mxu0 %v1018
        %1022 = vmatprep.subr.bf16.mxu0 0
        %1023 = vmatpush1.bf16.xpose.msra.mxu0 0
        %1024 = vmatprep.subr.bf16.mxu0 0
        %1025 = vmatpush1.bf16.xpose.msra.mxu0 0
        %1026 = vmatprep.subr.bf16.mxu0 0
        %1027 = vmatpush1.bf16.xpose.msra.mxu0 0
        %1028 = vmatprep.subr.bf16.mxu0 0
        %1029 = vmatpush1.bf16.xpose.msra.mxu0 0
        %1030 = vmatprep.subr.bf16.mxu0 0
        %1031 = vmatpush1.bf16.xpose.msra.mxu0 0
        %1032 = vmatprep.subr.bf16.mxu0 0
        %1033 = vmatpush1.bf16.xpose.msra.mxu0 0
        %1034 = vmatprep.subr.bf16.mxu0 0
        %1035 = vmatpush1.bf16.xpose.msra.mxu0 0
        %1036 = vmatprep.subr.bf16.mxu0 0
        %1037 = vmatpush1.bf16.xpose.msra.mxu0 0
        %1038 = vmatprep.subr.bf16.mxu0 0
        %1039 = vmatpush1.bf16.xpose.msra.mxu0 0
        %1040 = vmatprep.subr.bf16.mxu0 0
        %1041 = vmatpush1.bf16.xpose.msra.mxu0 0
        %1042 = vmatprep.subr.bf16.mxu0 0
        %1043 = vmatpush1.bf16.xpose.msra.mxu0 0
        %1044 = vmatprep.subr.bf16.mxu0 0
        %1045 = vmatpush1.bf16.xpose.msra.mxu0 0
        %1046 = vmatprep.subr.bf16.mxu0 0
        %1047 = vmatpush1.bf16.xpose.msra.mxu0 0
        %1048 = vmatprep.subr.bf16.mxu0 0
        %1049 = vmatpush1.bf16.xpose.msra.mxu0 0
        %1050 = vmatprep.subr.bf16.mxu0 0
        %1051 = vmatpush1.bf16.xpose.msra.mxu0 0
        %1052 = vmatprep.mubr.bf16.mxu0 0
        %1053 = vmatmul.mubr.bf16.gmra.mrb[0].mxu0 %v1015
        %v1054 = vpop.f32.mrb[0].mxu0
        %v1055 = vadd.f32 0.0, %v1054
        %v1056 = vpop.f32.mrb[0].mxu0
        %v1057 = vpop.f32.mrb[0].mxu0
        %v1058 = vpop.f32.mrb[0].mxu0
        %1059 = vdwg.mxu0
        %vm1060 = vcmask 130048
        %v1061 = vsel %vm1060, %v1055, -inf
        %1062 = vmax.xlane.f32.xlu0 %v1061
        %v1063 = vpop.xlane.xlu0 %1062
        %v1064 = vsub.f32 %v1055, %v1063
        %v1065 = vmul.f32 %v1064, 1.442695
        %v1066 = vpow.pop %v1065
        %v1067 = vsel %vm1060, %v1066, 0.0
        %1068 = vadd.xlane.f32.xlu0 %v1067
        %v1069 = vpop.xlane.xlu0 %1068
        %v1070 = vrcp.pop %v1069
        %v1071 = vmul.f32 %v1066, %v1070
        %v1072 = vpack.c.bf16 %v1071, %v1071
        %v1074 = vsel %vm1060, %v1072, 0
        %1076 = vmatprep.subr.bf16.mxu0 0
        %1077 = vmatpush1.bf16.msra.mxu0 %v1012
        %1078 = vmatprep.subr.bf16.mxu0 0
        %1079 = vmatpush1.bf16.msra.mxu0 0
        %1080 = vmatprep.subr.bf16.mxu0 0
        %1081 = vmatpush1.bf16.msra.mxu0 0
        %1082 = vmatprep.subr.bf16.mxu0 0
        %1083 = vmatpush1.bf16.msra.mxu0 0
        %1084 = vmatprep.subr.bf16.mxu0 0
        %1085 = vmatpush1.bf16.msra.mxu0 0
        %1086 = vmatprep.subr.bf16.mxu0 0
        %1087 = vmatpush1.bf16.msra.mxu0 0
        %1088 = vmatprep.subr.bf16.mxu0 0
        %1089 = vmatpush1.bf16.msra.mxu0 0
        %1090 = vmatprep.subr.bf16.mxu0 0
        %1091 = vmatpush1.bf16.msra.mxu0 0
        %1092 = vmatprep.subr.bf16.mxu0 0
        %1093 = vmatpush1.bf16.msra.mxu0 0
        %1094 = vmatprep.subr.bf16.mxu0 0
        %1095 = vmatpush1.bf16.msra.mxu0 0
        %1096 = vmatprep.subr.bf16.mxu0 0
        %1097 = vmatpush1.bf16.msra.mxu0 0
        %1098 = vmatprep.subr.bf16.mxu0 0
        %1099 = vmatpush1.bf16.msra.mxu0 0
        %1100 = vmatprep.subr.bf16.mxu0 0
        %1101 = vmatpush1.bf16.msra.mxu0 0
        %1102 = vmatprep.subr.bf16.mxu0 0
        %1103 = vmatpush1.bf16.msra.mxu0 0
        %1104 = vmatprep.subr.bf16.mxu0 0
        %1105 = vmatpush1.bf16.msra.mxu0 0
        %1106 = vmatprep.subr.bf16.mxu0 0
        %1107 = vmatpush1.bf16.msra.mxu0 0
        %1108 = vmatprep.mubr.bf16.mxu0 0
        %1109 = vmatmul.mubr.bf16.gmra.mrb[0].mxu0 %v1074
        %v1110 = vpop.f32.mrb[0].mxu0
        %v1111 = vadd.f32 0.0, %v1110
        %v1112 = vpop.f32.mrb[0].mxu0
        %v1113 = vpop.f32.mrb[0].mxu0
        %v1114 = vpop.f32.mrb[0].mxu0
        %1115 = vdwg.mxu0
        %1117 = vrot.lane.b32.xlu0 %v1010, 120
        %v1118 = vpop.permute.xlu0 %1117
        %1120 = vrot.lane.b32.xlu0 %v1011, 120
        %v1121 = vpop.permute.xlu0 %1120
        %v1123 = vsel %vm1013, %v1118, 0
        %v1126 = vsel %vm1013, %v1121, 0
        %1128 = vmatprep.subr.bf16.mxu0 0
        %1129 = vmatpush1.bf16.xpose.msra.mxu0 %v1126
        %1130 = vmatprep.subr.bf16.mxu0 0
        %1131 = vmatpush1.bf16.xpose.msra.mxu0 0
        %1132 = vmatprep.subr.bf16.mxu0 0
        %1133 = vmatpush1.bf16.xpose.msra.mxu0 0
        %1134 = vmatprep.subr.bf16.mxu0 0
        %1135 = vmatpush1.bf16.xpose.msra.mxu0 0
        %1136 = vmatprep.subr.bf16.mxu0 0
        %1137 = vmatpush1.bf16.xpose.msra.mxu0 0
        %1138 = vmatprep.subr.bf16.mxu0 0
        %1139 = vmatpush1.bf16.xpose.msra.mxu0 0
        %1140 = vmatprep.subr.bf16.mxu0 0
        %1141 = vmatpush1.bf16.xpose.msra.mxu0 0
        %1142 = vmatprep.subr.bf16.mxu0 0
        %1143 = vmatpush1.bf16.xpose.msra.mxu0 0
        %1144 = vmatprep.subr.bf16.mxu0 0
        %1145 = vmatpush1.bf16.xpose.msra.mxu0 0
        %1146 = vmatprep.subr.bf16.mxu0 0
        %1147 = vmatpush1.bf16.xpose.msra.mxu0 0
        %1148 = vmatprep.subr.bf16.mxu0 0
        %1149 = vmatpush1.bf16.xpose.msra.mxu0 0
        %1150 = vmatprep.subr.bf16.mxu0 0
        %1151 = vmatpush1.bf16.xpose.msra.mxu0 0
        %1152 = vmatprep.subr.bf16.mxu0 0
        %1153 = vmatpush1.bf16.xpose.msra.mxu0 0
        %1154 = vmatprep.subr.bf16.mxu0 0
        %1155 = vmatpush1.bf16.xpose.msra.mxu0 0
        %1156 = vmatprep.subr.bf16.mxu0 0
        %1157 = vmatpush1.bf16.xpose.msra.mxu0 0
        %1158 = vmatprep.subr.bf16.mxu0 0
        %1159 = vmatpush1.bf16.xpose.msra.mxu0 0
        %1160 = vmatprep.mubr.bf16.mxu0 0
        %1161 = vmatmul.mubr.bf16.gmra.mrb[0].mxu0 %v1123
        %v1162 = vpop.f32.mrb[0].mxu0
        %v1163 = vadd.f32 0.0, %v1162
        %v1164 = vpop.f32.mrb[0].mxu0
        %v1165 = vpop.f32.mrb[0].mxu0
        %v1166 = vpop.f32.mrb[0].mxu0
        %1167 = vdwg.mxu0
        %v1168 = vsel %vm1060, %v1163, -inf
        %1169 = vmax.xlane.f32.xlu0 %v1168
        %v1170 = vpop.xlane.xlu0 %1169
        %v1171 = vsub.f32 %v1163, %v1170
        %v1172 = vmul.f32 %v1171, 1.442695
        %v1173 = vpow.pop %v1172
        %v1174 = vsel %vm1060, %v1173, 0.0
        %1175 = vadd.xlane.f32.xlu0 %v1174
        %v1176 = vpop.xlane.xlu0 %1175
        %v1177 = vrcp.pop %v1176
        %v1178 = vmul.f32 %v1173, %v1177
        %v1179 = vpack.c.bf16 %v1178, %v1178
        %1181 = vrot.lane.b32.xlu0 %v1012, 120
        %v1182 = vpop.permute.xlu0 %1181
        %v1185 = vsel %vm1060, %v1179, 0
        %1187 = vmatprep.subr.bf16.mxu0 0
        %1188 = vmatpush1.bf16.msra.mxu0 %v1182
        %1189 = vmatprep.subr.bf16.mxu0 0
        %1190 = vmatpush1.bf16.msra.mxu0 0
        %1191 = vmatprep.subr.bf16.mxu0 0
        %1192 = vmatpush1.bf16.msra.mxu0 0
        %1193 = vmatprep.subr.bf16.mxu0 0
        %1194 = vmatpush1.bf16.msra.mxu0 0
        %1195 = vmatprep.subr.bf16.mxu0 0
        %1196 = vmatpush1.bf16.msra.mxu0 0
        %1197 = vmatprep.subr.bf16.mxu0 0
        %1198 = vmatpush1.bf16.msra.mxu0 0
        %1199 = vmatprep.subr.bf16.mxu0 0
        %1200 = vmatpush1.bf16.msra.mxu0 0
        %1201 = vmatprep.subr.bf16.mxu0 0
        %1202 = vmatpush1.bf16.msra.mxu0 0
        %1203 = vmatprep.subr.bf16.mxu0 0
        %1204 = vmatpush1.bf16.msra.mxu0 0
        %1205 = vmatprep.subr.bf16.mxu0 0
        %1206 = vmatpush1.bf16.msra.mxu0 0
        %1207 = vmatprep.subr.bf16.mxu0 0
        %1208 = vmatpush1.bf16.msra.mxu0 0
        %1209 = vmatprep.subr.bf16.mxu0 0
        %1210 = vmatpush1.bf16.msra.mxu0 0
        %1211 = vmatprep.subr.bf16.mxu0 0
        %1212 = vmatpush1.bf16.msra.mxu0 0
        %1213 = vmatprep.subr.bf16.mxu0 0
        %1214 = vmatpush1.bf16.msra.mxu0 0
        %1215 = vmatprep.subr.bf16.mxu0 0
        %1216 = vmatpush1.bf16.msra.mxu0 0
        %1217 = vmatprep.subr.bf16.mxu0 0
        %1218 = vmatpush1.bf16.msra.mxu0 0
        %1219 = vmatprep.mubr.bf16.mxu0 0
        %1220 = vmatmul.mubr.bf16.gmra.mrb[0].mxu0 %v1185
        %v1221 = vpop.f32.mrb[0].mxu0
        %v1222 = vadd.f32 0.0, %v1221
        %v1223 = vpop.f32.mrb[0].mxu0
        %v1224 = vpop.f32.mrb[0].mxu0
        %v1225 = vpop.f32.mrb[0].mxu0
        %1226 = vdwg.mxu0
        %1227 = vrot.lane.b32.xlu0 %v1010, 112
        %v1228 = vpop.permute.xlu0 %1227
        %1229 = vrot.lane.b32.xlu0 %v1011, 112
        %v1230 = vpop.permute.xlu0 %1229
        %v1232 = vsel %vm1013, %v1228, 0
        %v1235 = vsel %vm1013, %v1230, 0
        %1237 = vmatprep.subr.bf16.mxu0 0
        %1238 = vmatpush1.bf16.xpose.msra.mxu0 %v1235
        %1239 = vmatprep.subr.bf16.mxu0 0
        %1240 = vmatpush1.bf16.xpose.msra.mxu0 0
        %1241 = vmatprep.subr.bf16.mxu0 0
        %1242 = vmatpush1.bf16.xpose.msra.mxu0 0
        %1243 = vmatprep.subr.bf16.mxu0 0
        %1244 = vmatpush1.bf16.xpose.msra.mxu0 0
        %1245 = vmatprep.subr.bf16.mxu0 0
        %1246 = vmatpush1.bf16.xpose.msra.mxu0 0
        %1247 = vmatprep.subr.bf16.mxu0 0
        %1248 = vmatpush1.bf16.xpose.msra.mxu0 0
        %1249 = vmatprep.subr.bf16.mxu0 0
        %1250 = vmatpush1.bf16.xpose.msra.mxu0 0
        %1251 = vmatprep.subr.bf16.mxu0 0
        %1252 = vmatpush1.bf16.xpose.msra.mxu0 0
        %1253 = vmatprep.subr.bf16.mxu0 0
        %1254 = vmatpush1.bf16.xpose.msra.mxu0 0
        %1255 = vmatprep.subr.bf16.mxu0 0
        %1256 = vmatpush1.bf16.xpose.msra.mxu0 0
        %1257 = vmatprep.subr.bf16.mxu0 0
        %1258 = vmatpush1.bf16.xpose.msra.mxu0 0
        %1259 = vmatprep.subr.bf16.mxu0 0
        %1260 = vmatpush1.bf16.xpose.msra.mxu0 0
        %1261 = vmatprep.subr.bf16.mxu0 0
        %1262 = vmatpush1.bf16.xpose.msra.mxu0 0
        %1263 = vmatprep.subr.bf16.mxu0 0
        %1264 = vmatpush1.bf16.xpose.msra.mxu0 0
        %1265 = vmatprep.subr.bf16.mxu0 0
        %1266 = vmatpush1.bf16.xpose.msra.mxu0 0
        %1267 = vmatprep.subr.bf16.mxu0 0
        %1268 = vmatpush1.bf16.xpose.msra.mxu0 0
        %1269 = vmatprep.mubr.bf16.mxu0 0
        %1270 = vmatmul.mubr.bf16.gmra.mrb[0].mxu0 %v1232
        %v1271 = vpop.f32.mrb[0].mxu0
        %v1272 = vadd.f32 0.0, %v1271
        %v1273 = vpop.f32.mrb[0].mxu0
        %v1274 = vpop.f32.mrb[0].mxu0
        %v1275 = vpop.f32.mrb[0].mxu0
        %1276 = vdwg.mxu0
        %v1277 = vsel %vm1060, %v1272, -inf
        %1278 = vmax.xlane.f32.xlu0 %v1277
        %v1279 = vpop.xlane.xlu0 %1278
        %v1280 = vsub.f32 %v1272, %v1279
        %v1281 = vmul.f32 %v1280, 1.442695
        %v1282 = vpow.pop %v1281
        %v1283 = vsel %vm1060, %v1282, 0.0
        %1284 = vadd.xlane.f32.xlu0 %v1283
        %v1285 = vpop.xlane.xlu0 %1284
        %v1286 = vrcp.pop %v1285
        %v1287 = vmul.f32 %v1282, %v1286
        %v1288 = vpack.c.bf16 %v1287, %v1287
        %1289 = vrot.lane.b32.xlu0 %v1012, 112
        %v1290 = vpop.permute.xlu0 %1289
        %v1293 = vsel %vm1060, %v1288, 0
        %1295 = vmatprep.subr.bf16.mxu0 0
        %1296 = vmatpush1.bf16.msra.mxu0 %v1290
        %1297 = vmatprep.subr.bf16.mxu0 0
        %1298 = vmatpush1.bf16.msra.mxu0 0
        %1299 = vmatprep.subr.bf16.mxu0 0
        %1300 = vmatpush1.bf16.msra.mxu0 0
        %1301 = vmatprep.subr.bf16.mxu0 0
        %1302 = vmatpush1.bf16.msra.mxu0 0
        %1303 = vmatprep.subr.bf16.mxu0 0
        %1304 = vmatpush1.bf16.msra.mxu0 0
        %1305 = vmatprep.subr.bf16.mxu0 0
        %1306 = vmatpush1.bf16.msra.mxu0 0
        %1307 = vmatprep.subr.bf16.mxu0 0
        %1308 = vmatpush1.bf16.msra.mxu0 0
        %1309 = vmatprep.subr.bf16.mxu0 0
        %1310 = vmatpush1.bf16.msra.mxu0 0
        %1311 = vmatprep.subr.bf16.mxu0 0
        %1312 = vmatpush1.bf16.msra.mxu0 0
        %1313 = vmatprep.subr.bf16.mxu0 0
        %1314 = vmatpush1.bf16.msra.mxu0 0
        %1315 = vmatprep.subr.bf16.mxu0 0
        %1316 = vmatpush1.bf16.msra.mxu0 0
        %1317 = vmatprep.subr.bf16.mxu0 0
        %1318 = vmatpush1.bf16.msra.mxu0 0
        %1319 = vmatprep.subr.bf16.mxu0 0
        %1320 = vmatpush1.bf16.msra.mxu0 0
        %1321 = vmatprep.subr.bf16.mxu0 0
        %1322 = vmatpush1.bf16.msra.mxu0 0
        %1323 = vmatprep.subr.bf16.mxu0 0
        %1324 = vmatpush1.bf16.msra.mxu0 0
        %1325 = vmatprep.subr.bf16.mxu0 0
        %1326 = vmatpush1.bf16.msra.mxu0 0
        %1327 = vmatprep.mubr.bf16.mxu0 0
        %1328 = vmatmul.mubr.bf16.gmra.mrb[0].mxu0 %v1293
        %v1329 = vpop.f32.mrb[0].mxu0
        %v1330 = vadd.f32 0.0, %v1329
        %v1331 = vpop.f32.mrb[0].mxu0
        %v1332 = vpop.f32.mrb[0].mxu0
        %v1333 = vpop.f32.mrb[0].mxu0
        %1334 = vdwg.mxu0
        %1335 = vrot.lane.b32.xlu0 %v1010, 104
        %v1336 = vpop.permute.xlu0 %1335
        %1337 = vrot.lane.b32.xlu0 %v1011, 104
        %v1338 = vpop.permute.xlu0 %1337
        %v1340 = vsel %vm1013, %v1336, 0
        %v1343 = vsel %vm1013, %v1338, 0
        %1345 = vmatprep.subr.bf16.mxu0 0
        %1346 = vmatpush1.bf16.xpose.msra.mxu0 %v1343
        %1347 = vmatprep.subr.bf16.mxu0 0
        %1348 = vmatpush1.bf16.xpose.msra.mxu0 0
        %1349 = vmatprep.subr.bf16.mxu0 0
        %1350 = vmatpush1.bf16.xpose.msra.mxu0 0
        %1351 = vmatprep.subr.bf16.mxu0 0
        %1352 = vmatpush1.bf16.xpose.msra.mxu0 0
        %1353 = vmatprep.subr.bf16.mxu0 0
        %1354 = vmatpush1.bf16.xpose.msra.mxu0 0
        %1355 = vmatprep.subr.bf16.mxu0 0
        %1356 = vmatpush1.bf16.xpose.msra.mxu0 0
        %1357 = vmatprep.subr.bf16.mxu0 0
        %1358 = vmatpush1.bf16.xpose.msra.mxu0 0
        %1359 = vmatprep.subr.bf16.mxu0 0
        %1360 = vmatpush1.bf16.xpose.msra.mxu0 0
        %1361 = vmatprep.subr.bf16.mxu0 0
        %1362 = vmatpush1.bf16.xpose.msra.mxu0 0
        %1363 = vmatprep.subr.bf16.mxu0 0
        %1364 = vmatpush1.bf16.xpose.msra.mxu0 0
        %1365 = vmatprep.subr.bf16.mxu0 0
        %1366 = vmatpush1.bf16.xpose.msra.mxu0 0
        %1367 = vmatprep.subr.bf16.mxu0 0
        %1368 = vmatpush1.bf16.xpose.msra.mxu0 0
        %1369 = vmatprep.subr.bf16.mxu0 0
        %1370 = vmatpush1.bf16.xpose.msra.mxu0 0
        %1371 = vmatprep.subr.bf16.mxu0 0
        %1372 = vmatpush1.bf16.xpose.msra.mxu0 0
        %1373 = vmatprep.subr.bf16.mxu0 0
        %1374 = vmatpush1.bf16.xpose.msra.mxu0 0
        %1375 = vmatprep.subr.bf16.mxu0 0
        %1376 = vmatpush1.bf16.xpose.msra.mxu0 0
        %1377 = vmatprep.mubr.bf16.mxu0 0
        %1378 = vmatmul.mubr.bf16.gmra.mrb[0].mxu0 %v1340
        %v1379 = vpop.f32.mrb[0].mxu0
        %v1380 = vadd.f32 0.0, %v1379
        %v1381 = vpop.f32.mrb[0].mxu0
        %v1382 = vpop.f32.mrb[0].mxu0
        %v1383 = vpop.f32.mrb[0].mxu0
        %1384 = vdwg.mxu0
        %v1385 = vsel %vm1060, %v1380, -inf
        %1386 = vmax.xlane.f32.xlu0 %v1385
        %v1387 = vpop.xlane.xlu0 %1386
        %v1388 = vsub.f32 %v1380, %v1387
        %v1389 = vmul.f32 %v1388, 1.442695
        %v1390 = vpow.pop %v1389
        %v1391 = vsel %vm1060, %v1390, 0.0
        %1392 = vadd.xlane.f32.xlu0 %v1391
        %v1393 = vpop.xlane.xlu0 %1392
        %v1394 = vrcp.pop %v1393
        %v1395 = vmul.f32 %v1390, %v1394
        %v1396 = vpack.c.bf16 %v1395, %v1395
        %1397 = vrot.lane.b32.xlu0 %v1012, 104
        %v1398 = vpop.permute.xlu0 %1397
        %v1401 = vsel %vm1060, %v1396, 0
        %1403 = vmatprep.subr.bf16.mxu0 0
        %1404 = vmatpush1.bf16.msra.mxu0 %v1398
        %1405 = vmatprep.subr.bf16.mxu0 0
        %1406 = vmatpush1.bf16.msra.mxu0 0
        %1407 = vmatprep.subr.bf16.mxu0 0
        %1408 = vmatpush1.bf16.msra.mxu0 0
        %1409 = vmatprep.subr.bf16.mxu0 0
        %1410 = vmatpush1.bf16.msra.mxu0 0
        %1411 = vmatprep.subr.bf16.mxu0 0
        %1412 = vmatpush1.bf16.msra.mxu0 0
        %1413 = vmatprep.subr.bf16.mxu0 0
        %1414 = vmatpush1.bf16.msra.mxu0 0
        %1415 = vmatprep.subr.bf16.mxu0 0
        %1416 = vmatpush1.bf16.msra.mxu0 0
        %1417 = vmatprep.subr.bf16.mxu0 0
        %1418 = vmatpush1.bf16.msra.mxu0 0
        %1419 = vmatprep.subr.bf16.mxu0 0
        %1420 = vmatpush1.bf16.msra.mxu0 0
        %1421 = vmatprep.subr.bf16.mxu0 0
        %1422 = vmatpush1.bf16.msra.mxu0 0
        %1423 = vmatprep.subr.bf16.mxu0 0
        %1424 = vmatpush1.bf16.msra.mxu0 0
        %1425 = vmatprep.subr.bf16.mxu0 0
        %1426 = vmatpush1.bf16.msra.mxu0 0
        %1427 = vmatprep.subr.bf16.mxu0 0
        %1428 = vmatpush1.bf16.msra.mxu0 0
        %1429 = vmatprep.subr.bf16.mxu0 0
        %1430 = vmatpush1.bf16.msra.mxu0 0
        %1431 = vmatprep.subr.bf16.mxu0 0
        %1432 = vmatpush1.bf16.msra.mxu0 0
        %1433 = vmatprep.subr.bf16.mxu0 0
        %1434 = vmatpush1.bf16.msra.mxu0 0
        %1435 = vmatprep.mubr.bf16.mxu0 0
        %1436 = vmatmul.mubr.bf16.gmra.mrb[0].mxu0 %v1401
        %v1437 = vpop.f32.mrb[0].mxu0
        %v1438 = vadd.f32 0.0, %v1437
        %v1439 = vpop.f32.mrb[0].mxu0
        %v1440 = vpop.f32.mrb[0].mxu0
        %v1441 = vpop.f32.mrb[0].mxu0
        %1442 = vdwg.mxu0
        %1444 = vrot.lane.b32.xlu0 %v1222, 8
        %v1445 = vpop.permute.xlu0 %1444
        %1448 = vrot.lane.b32.xlu0 %v1330, 16
        %v1449 = vpop.permute.xlu0 %1448
        %1452 = vrot.lane.b32.xlu0 %v1438, 24
        %v1453 = vpop.permute.xlu0 %1452
        %v1455 = vsel %vm1013, %v1111, %v1445
        %v1456 = vsel %vm1060, %v1455, %v1449
        %vm1457 = vcmask 195584
        %v1458 = vsel %vm1457, %v1456, %v1453
        %v1459 = vpack.c.bf16 %v1458, %v1458
        %v1460 = vld [vmem:[#allocation14] sm:$0xf]
        %v1461 = vld [vmem:[#allocation14 + $0x4] sm:$0xf]
        %v1462 = vld [vmem:[#allocation14 + $0x8] sm:$0xf]
        %v1463 = vld [vmem:[#allocation14 + $0xc] sm:$0xf]
        %v1464 = vld [vmem:[#allocation16] sm:$0x1]
        %v1466 = vlaneseq
        %v1467 = vshrl.u32 %v1466, 7
        %v1468 = vsub.s32 0, %v1467
        %v1469 = vrot.slane %v1464, %v1468
        %v1475 = vunpack.c.l.b16 %v1460
        %v1476 = vunpack.c.l.b16 %v1461
        %v1477 = vunpack.c.l.b16 %v1462
        %v1478 = vunpack.c.l.b16 %v1463
        %v1479 = vpack.c.b16 %v1476, %v1475
        %v1480 = vpack.c.b16 %v1478, %v1477
        %v1484 = vsel %vm781, %v1459, 0
        %1486 = vmatprep.subr.bf16.mxu0 0
        %1487 = vmatpush1.bf16.msra.mxu0 %v1479
        %1488 = vmatprep.subr.bf16.mxu0 0
        %1489 = vmatpush1.bf16.msra.mxu0 %v1480
        %1490 = vmatprep.subr.bf16.mxu0 0
        %1491 = vmatpush1.bf16.msra.mxu0 0
        %1492 = vmatprep.subr.bf16.mxu0 0
        %1493 = vmatpush1.bf16.msra.mxu0 0
        %1494 = vmatprep.subr.bf16.mxu0 0
        %1495 = vmatpush1.bf16.msra.mxu0 0
        %1496 = vmatprep.subr.bf16.mxu0 0
        %1497 = vmatpush1.bf16.msra.mxu0 0
        %1498 = vmatprep.subr.bf16.mxu0 0
        %1499 = vmatpush1.bf16.msra.mxu0 0
        %1500 = vmatprep.subr.bf16.mxu0 0
        %1501 = vmatpush1.bf16.msra.mxu0 0
        %1502 = vmatprep.subr.bf16.mxu0 0
        %1503 = vmatpush1.bf16.msra.mxu0 0
        %1504 = vmatprep.subr.bf16.mxu0 0
        %1505 = vmatpush1.bf16.msra.mxu0 0
        %1506 = vmatprep.subr.bf16.mxu0 0
        %1507 = vmatpush1.bf16.msra.mxu0 0
        %1508 = vmatprep.subr.bf16.mxu0 0
        %1509 = vmatpush1.bf16.msra.mxu0 0
        %1510 = vmatprep.subr.bf16.mxu0 0
        %1511 = vmatpush1.bf16.msra.mxu0 0
        %1512 = vmatprep.subr.bf16.mxu0 0
        %1513 = vmatpush1.bf16.msra.mxu0 0
        %1514 = vmatprep.subr.bf16.mxu0 0
        %1515 = vmatpush1.bf16.msra.mxu0 0
        %1516 = vmatprep.subr.bf16.mxu0 0
        %1517 = vmatpush1.bf16.msra.mxu0 0
        %1518 = vmatprep.mubr.bf16.mxu0 0
        %1519 = vmatmul.mubr.bf16.gmra.mrb[0].mxu0 %v1484
        %v1520 = vpop.f32.mrb[0].mxu0
        %v1521 = vadd.f32 %v1469, %v1520
        %v1522 = vpop.f32.mrb[0].mxu0
        %v1523 = vpop.f32.mrb[0].mxu0
        %v1524 = vpop.f32.mrb[0].mxu0
        %1525 = vdwg.mxu0
        %v1526 = vadd.f32 %v775, %v1521
        %v1527 = vld [vmem:[#allocation17] sm:$0x1]
        %v1528 = vld [vmem:[%s14] sm:$0x1]
        %v1529 = vsel %vm781, %v1526, 0.0
        %1530 = vadd.xlane.f32.xlu0 %v1529
        %v1531 = vpop.xlane.xlu0 %1530
        %v1532 = vmul.f32 %v1531, %v785
        %v1533 = vsub.f32 %v1526, %v1532
        %v1534 = vmul.f32 %v1533, %v1533
        %v1535 = vsel %vm781, %v1534, 0.0
        %1536 = vadd.xlane.f32.xlu0 %v1535
        %v1537 = vpop.xlane.xlu0 %1536
        %v1538 = vmul.f32 %v1537, %v785
        %v1539 = vadd.f32 %v1538, 1e-05
        %v1540 = vrsqrt.pop %v1539
        %v1541 = vmul.f32 %v1533, %v1540
        %v1543 = vlaneseq
        %v1544 = vshrl.u32 %v1543, 7
        %v1545 = vsub.s32 0, %v1544
        %v1546 = vrot.slane %v1527, %v1545
        %v1548 = vmul.f32 %v1541, %v1546
        %v1550 = vlaneseq
        %v1551 = vshrl.u32 %v1550, 7
        %v1552 = vsub.s32 0, %v1551
        %v1553 = vrot.slane %v1528, %v1552
        %v1555 = vadd.f32 %v1548, %v1553
        %v1556 = vpack.c.bf16 %v1555, %v1555
        %v1557 = vld [vmem:[%s15] sm:$0xf]
        %v1558 = vld [vmem:[%s15 + $0x4] sm:$0xf]
        %v1559 = vld [vmem:[%s15 + $0x8] sm:$0xf]
        %v1560 = vld [vmem:[%s15 + $0xc] sm:$0xf]
        %v1561 = vld [vmem:[%s16] sm:$0x1]
        %v1563 = vlaneseq
        %v1564 = vshrl.u32 %v1563, 7
        %v1565 = vsub.s32 0, %v1564
        %v1566 = vrot.slane %v1561, %v1565
        %v1572 = vunpack.c.l.b16 %v1557
        %v1573 = vunpack.c.l.b16 %v1558
        %v1574 = vunpack.c.l.b16 %v1559
        %v1575 = vunpack.c.l.b16 %v1560
        %v1576 = vpack.c.b16 %v1573, %v1572
        %v1577 = vpack.c.b16 %v1575, %v1574
        %v1581 = vsel %vm781, %v1556, 0
        %1583 = vmatprep.subr.bf16.mxu0 0
        %1584 = vmatpush1.bf16.msra.mxu0 %v1576
        %1585 = vmatprep.subr.bf16.mxu0 0
        %1586 = vmatpush1.bf16.msra.mxu0 %v1577
        %1587 = vmatprep.subr.bf16.mxu0 0
        %1588 = vmatpush1.bf16.msra.mxu0 0
        %1589 = vmatprep.subr.bf16.mxu0 0
        %1590 = vmatpush1.bf16.msra.mxu0 0
        %1591 = vmatprep.subr.bf16.mxu0 0
        %1592 = vmatpush1.bf16.msra.mxu0 0
        %1593 = vmatprep.subr.bf16.mxu0 0
        %1594 = vmatpush1.bf16.msra.mxu0 0
        %1595 = vmatprep.subr.bf16.mxu0 0
        %1596 = vmatpush1.bf16.msra.mxu0 0
        %1597 = vmatprep.subr.bf16.mxu0 0
        %1598 = vmatpush1.bf16.msra.mxu0 0
        %1599 = vmatprep.subr.bf16.mxu0 0
        %1600 = vmatpush1.bf16.msra.mxu0 0
        %1601 = vmatprep.subr.bf16.mxu0 0
        %1602 = vmatpush1.bf16.msra.mxu0 0
        %1603 = vmatprep.subr.bf16.mxu0 0
        %1604 = vmatpush1.bf16.msra.mxu0 0
        %1605 = vmatprep.subr.bf16.mxu0 0
        %1606 = vmatpush1.bf16.msra.mxu0 0
        %1607 = vmatprep.subr.bf16.mxu0 0
        %1608 = vmatpush1.bf16.msra.mxu0 0
        %1609 = vmatprep.subr.bf16.mxu0 0
        %1610 = vmatpush1.bf16.msra.mxu0 0
        %1611 = vmatprep.subr.bf16.mxu0 0
        %1612 = vmatpush1.bf16.msra.mxu0 0
        %1613 = vmatprep.subr.bf16.mxu0 0
        %1614 = vmatpush1.bf16.msra.mxu0 0
        %1615 = vmatprep.mubr.bf16.mxu0 0
        %1616 = vmatmul.mubr.bf16.gmra.mrb[0].mxu0 %v1581
        %v1617 = vpop.f32.mrb[0].mxu0
        %v1618 = vadd.f32 %v1566, %v1617
        %v1619 = vpop.f32.mrb[0].mxu0
        %v1620 = vpop.f32.mrb[0].mxu0
        %v1621 = vpop.f32.mrb[0].mxu0
        %1622 = vdwg.mxu0
        %v1623 = vmax.f32 %v1618, 0.0
        %v1624 = vpack.c.bf16 %v1623, %v1623
        %v1625 = vld [vmem:[%s17] sm:$0xf]
        %v1626 = vld [vmem:[%s17 + $0x4] sm:$0xf]
        %v1627 = vld [vmem:[%s17 + $0x8] sm:$0xf]
        %v1628 = vld [vmem:[%s17 + $0xc] sm:$0xf]
        %v1629 = vld [vmem:[%s17 + $0x10] sm:$0xf]
        %v1630 = vld [vmem:[%s17 + $0x14] sm:$0xf]
        %v1631 = vld [vmem:[%s17 + $0x18] sm:$0xf]
        %v1632 = vld [vmem:[%s17 + $0x1c] sm:$0xf]
        %v1633 = vld [vmem:[%s18] sm:$0x1]
        %v1635 = vlaneseq
        %v1636 = vshrl.u32 %v1635, 7
        %v1637 = vsub.s32 0, %v1636
        %v1638 = vrot.slane %v1633, %v1637
        %v1648 = vunpack.c.l.b16 %v1625
        %v1649 = vunpack.c.l.b16 %v1626
        %v1650 = vunpack.c.l.b16 %v1627
        %v1651 = vunpack.c.l.b16 %v1628
        %v1652 = vunpack.c.l.b16 %v1629
        %v1653 = vunpack.c.l.b16 %v1630
        %v1654 = vunpack.c.l.b16 %v1631
        %v1655 = vunpack.c.l.b16 %v1632
        %v1656 = vpack.c.b16 %v1649, %v1648
        %v1657 = vpack.c.b16 %v1651, %v1650
        %v1658 = vpack.c.b16 %v1653, %v1652
        %v1659 = vpack.c.b16 %v1655, %v1654
        %vm1664 = vcmask 523264
        %v1666 = vsel %vm1664, %v1624, 0
        %1668 = vmatprep.subr.bf16.mxu0 0
        %1669 = vmatpush1.bf16.msra.mxu0 %v1656
        %1670 = vmatprep.subr.bf16.mxu0 0
        %1671 = vmatpush1.bf16.msra.mxu0 %v1657
        %1672 = vmatprep.subr.bf16.mxu0 0
        %1673 = vmatpush1.bf16.msra.mxu0 %v1658
        %1674 = vmatprep.subr.bf16.mxu0 0
        %1675 = vmatpush1.bf16.msra.mxu0 %v1659
        %1676 = vmatprep.subr.bf16.mxu0 0
        %1677 = vmatpush1.bf16.msra.mxu0 0
        %1678 = vmatprep.subr.bf16.mxu0 0
        %1679 = vmatpush1.bf16.msra.mxu0 0
        %1680 = vmatprep.subr.bf16.mxu0 0
        %1681 = vmatpush1.bf16.msra.mxu0 0
        %1682 = vmatprep.subr.bf16.mxu0 0
        %1683 = vmatpush1.bf16.msra.mxu0 0
        %1684 = vmatprep.subr.bf16.mxu0 0
        %1685 = vmatpush1.bf16.msra.mxu0 0
        %1686 = vmatprep.subr.bf16.mxu0 0
        %1687 = vmatpush1.bf16.msra.mxu0 0
        %1688 = vmatprep.subr.bf16.mxu0 0
        %1689 = vmatpush1.bf16.msra.mxu0 0
        %1690 = vmatprep.subr.bf16.mxu0 0
        %1691 = vmatpush1.bf16.msra.mxu0 0
        %1692 = vmatprep.subr.bf16.mxu0 0
        %1693 = vmatpush1.bf16.msra.mxu0 0
        %1694 = vmatprep.subr.bf16.mxu0 0
        %1695 = vmatpush1.bf16.msra.mxu0 0
        %1696 = vmatprep.subr.bf16.mxu0 0
        %1697 = vmatpush1.bf16.msra.mxu0 0
        %1698 = vmatprep.subr.bf16.mxu0 0
        %1699 = vmatpush1.bf16.msra.mxu0 0
        %1700 = vmatprep.mubr.bf16.mxu0 0
        %1701 = vmatmul.mubr.bf16.gmra.mrb[0].mxu0 %v1666
        %v1702 = vpop.f32.mrb[0].mxu0
        %v1703 = vadd.f32 %v1638, %v1702
        %v1704 = vpop.f32.mrb[0].mxu0
        %v1705 = vpop.f32.mrb[0].mxu0
        %v1706 = vpop.f32.mrb[0].mxu0
        %1707 = vdwg.mxu0
        %v1708 = vadd.f32 %v1526, %v1703
        %1709 = vst.msk [vmem:[%s764] sm:$0xff] %vm781, %v1708
        %s1710 = sand.u32 %s463, 1
        %s1711 = scalar_lea.sflag [#allocation4], %s1710
        %s1712 = sand.u32 %s463, 1
        %s1713 = smul.addr %s1712, 8
        %s1714 = scalar_lea.vmem [#allocation19], %s1713
        // Predicated region
        $region137: #{tpu_custom_call.1} parent=95 // pred_check
          %p1715 = pneg %p473
        $region138: #{tpu_custom_call.1} parent=95 // pred_check_branch
          %1717 = sbr.rel (%p1715) target = $region140
        $region139: #{tpu_custom_call.1} parent=95 // pred_region
          %s1719 = ssub.s32 128, 128
          %1720 = vsyncadd %s1711, %s1719
          %s1721 = smul.addr %s41, 128
          %s1722 = scalar_lea.hbm %s19, %s1721
          %s1724 = sshll.u32 %s1714, 4
          %s1725 = int_to_ptr.vmem [resolvable:$true] %s1724
          %1727 = dma.vmem_to_hbm [thread:$0]  %s1725, 128, %s1722, %s1711
        $region140: #{tpu_custom_call.1} parent=95 // pred_fallthru
          _
      $region96: #{tpu_custom_call.1} parent=5 // pred_fallthru
        _
      %p1728 = scmp.le.s32.totalorder 2, %s36
      // Predicated region
      $region141: #{tpu_custom_call.1} parent=5 // pred_check
        %p1729 = pneg %p1728
      $region142: #{tpu_custom_call.1} parent=5 // pred_check_branch
        %1731 = sbr.rel (%p1729) target = $region144
      $region143: #{tpu_custom_call.1} parent=5 // pred_region
        %s1732 = ssub.s32 %s36, 2
        // Predicated region
        $region145: #{tpu_custom_call.1} parent=143 // pred_check
          %p1733 = pneg %p479
        $region146: #{tpu_custom_call.1} parent=143 // pred_check_branch
          %1735 = sbr.rel (%p1733) target = $region148
        $region147: #{tpu_custom_call.1} parent=143 // pred_region
          %s1736 = sand.u32 %s464, 1
          %s1737 = scalar_lea.sflag [#allocation4], %s1736
          %s1738 = sand.u32 %s464, 1
          %s1739 = smul.addr %s1738, 8
          %s1740 = scalar_lea.vmem [#allocation19], %s1739
          %1741 = dma.done %s1737, 128
        $region148: #{tpu_custom_call.1} parent=143 // pred_fallthru
          _
      $region144: #{tpu_custom_call.1} parent=5 // pred_fallthru
        _
    $region6: #{tpu_custom_call.1} parent=1 // loop_footer
      %s40 = sadd.s32 1, %s36
    $region7: #{tpu_custom_call.1} parent=1 // loop_footer_branch
      %35 = sbr.rel target = $region3
    $region8: #{tpu_custom_call.1} parent=1 // loop_exit
      _
    %1742 = vsyncpa [#allocation3], 1
    %s1743 = scalar_lea.sflag [#allocation3], 1
    %1744 = vsyncpa %s1743, 1
    %1745 = vsyncpa [#allocation6], 1
    %1746 = vsyncpa [#allocation9], 1
    %1747 = vsyncpa [#allocation12], 1
    %1748 = vsyncpa [#allocation15], 1
    %1749 = vsyncpa [#allocation18], 1
    %1750 = vsyncpa [#allocation4], 1
    %s1751 = scalar_lea.sflag [#allocation4], 1
    %1752 = vsyncpa %s1751, 1

</llo_original>
